<compile_context>
chip_gen: v6e
topology: v6e:2x2x1
jax: 0.10.0
libtpu: 0.0.40
codegen_flags: <defaults>
</compile_context>

<pallas_src>
import functools

import numpy as np

import jax
import jax.numpy as jnp
from jax.experimental import pallas as pl
from jax.experimental.pallas import tpu as pltpu

_VMEM = pl.BlockSpec(memory_space=pltpu.MemorySpace.VMEM)
_MM_DTYPE = jnp.bfloat16          # MXU operand dtype; accumulation is f32.


# ---------------- operand-matrix builders (XLA wrapper side) -----------------

def _banded_conv3x3(w_hwio, width):
    """(3*W*Cin, W*Cout) stacked banded matrix for a 3x3 'same' conv.

    Consumed as  out = concat([a(y-1), a(y), a(y+1)], lanes) @ B  on activations
    laid out as rows = H, cols = W*Cin.  Row block d (= ky) holds
    B_d[x_in*Cin+ci, x_out*Cout+co] = w[d, x_in-x_out+1, ci, co] for
    |x_in - x_out| <= 1, else 0 (zero 'same' padding along W).
    """
    _, _, cin, cout = w_hwio.shape
    onehot = np.zeros((width, 3, width), np.float32)
    for x_out in range(width):
        for kx in range(3):
            x_in = x_out + kx - 1
            if 0 <= x_in < width:
                onehot[x_in, kx, x_out] = 1.0
    b = jnp.einsum('xkz,dkio->dxizo', jnp.asarray(onehot), w_hwio)
    return b.reshape(3 * width * cin, width * cout).astype(_MM_DTYPE)


def _blockdiag_conv1x1(w_1x1, width):
    """(W*Cin, W*Cout) block-diagonal matrix implementing a 1x1 conv."""
    cin, cout = w_1x1.shape[-2], w_1x1.shape[-1]
    eye = jnp.asarray(np.eye(width, dtype=np.float32))
    b = jnp.einsum('xz,io->xizo', eye, w_1x1.reshape(cin, cout))
    return b.reshape(width * cin, width * cout).astype(_MM_DTYPE)


def _pool_rows(h):
    """(H/2, H): averages adjacent row pairs of one image (no batch scaling)."""
    p = np.zeros((h // 2, h), np.float32)
    for y in range(h // 2):
        p[y, 2 * y] = 0.5
        p[y, 2 * y + 1] = 0.5
    return jnp.asarray(p).astype(_MM_DTYPE)


def _pool_cols(w, c):
    """(W*C, (W/2)*C): averages adjacent pixel pairs along W, per channel."""
    p = np.zeros((w, w // 2), np.float32)
    for x in range(w // 2):
        p[2 * x, x] = 0.5
        p[2 * x + 1, x] = 0.5
    return jnp.asarray(np.kron(p, np.eye(c, dtype=np.float32))).astype(_MM_DTYPE)


def _block_operands(p, h, w, cout, down):
    d = {"B1": _banded_conv3x3(p["w1"], w),
         "B2": _banded_conv3x3(p["w2"], w),
         "Bsc": _blockdiag_conv1x1(p["wsc"], w)}
    if down:
        d["Ph"] = _pool_rows(h)
        d["Pw"] = _pool_cols(w, cout)
    return d


# ------------------------------- fused kernel --------------------------------

def _make_kernel(w_treedef, n_w, neg_slope, bias_meta):
    def lrelu(v):
        return jnp.where(v >= 0, v, neg_slope * v)

    def mm(a, b):     # MXU matmul: bf16 operands, f32 accumulation
        return jnp.dot(a.astype(_MM_DTYPE), b.astype(_MM_DTYPE),
                       preferred_element_type=jnp.float32)

    def shift_up(a):  # s[r] = a[r-1]; zero row at r=0 ('same' padding in H)
        z = jnp.zeros((1, a.shape[1]), a.dtype)
        return jnp.concatenate([z, a[:-1, :]], axis=0)

    def shift_dn(a):  # s[r] = a[r+1]; zero row at r=H-1
        z = jnp.zeros((1, a.shape[1]), a.dtype)
        return jnp.concatenate([a[1:, :], z], axis=0)

    def kernel(*refs):
        x_ref = refs[0]
        w_refs = refs[1:1 + n_w]
        label_ref, thermal_ref = refs[1 + n_w], refs[2 + n_w]
        p = jax.tree_util.tree_unflatten(w_treedef, w_refs)
        biases = p["bias"][...]                       # (R, 128) f32 packed rows

        def brow(name):
            r, width = bias_meta[name]
            return biases[r:r + 1, :width]

        def conv3x3(a, b_ref, bname):
            a_bf = a.astype(_MM_DTYPE)                # cast once per consumer
            cat = jnp.concatenate(
                [shift_up(a_bf), a_bf, shift_dn(a_bf)], axis=1)
            out = jnp.dot(cat, b_ref[...], preferred_element_type=jnp.float32)
            return out + brow(bname)

        def res_block(a, h_in, bp, pfx, down):
            h = lrelu(conv3x3(h_in, bp["B1"], pfx + "_b1"))
            h = conv3x3(h, bp["B2"], pfx + "_b2")
            sc = mm(a, bp["Bsc"][...]) + brow(pfx + "_bsc")
            y = h + sc
            if down:                                  # fused 2x2 average pool
                y = mm(mm(bp["Ph"][...], y), bp["Pw"][...])
            return y

        x = x_ref[...]                                # (H, W*3), bf16
        c1 = res_block(x, x, p["c1"], "c1", down=True)
        c2 = res_block(c1, lrelu(c1), p["c2"], "c2", down=True)
        c3 = res_block(c2, lrelu(c2), p["c3"], "c3", down=True)

        feat = lrelu(c3)                              # reused by both heads

        # ----- label head: GSP / flatten + dense(1) as a VPU/XLU reduction
        s = jnp.sum(feat * p["head_w"][...], axis=1, keepdims=True)    # (h3, 1)
        lab = jnp.sum(s, axis=0, keepdims=True)                        # (1, 1)
        r, _ = bias_meta["label"]
        lab = lab + biases[r:r + 1, 0:1]
        label_ref[...] = jnp.broadcast_to(
            lab, label_ref.shape).astype(label_ref.dtype)              # lane-dense

        # ----- thermal head: ResBlockDown(down_size=1) -> lrelu -> conv3x3 -> tanh
        t = res_block(c3, feat, p["th"], "th", down=False)
        t = conv3x3(lrelu(t), p["thc_B"], "thc")
        thermal_ref[...] = jnp.tanh(t).astype(thermal_ref.dtype)

    return kernel


# ------------------------------- forward pass --------------------------------

def discriminator_forward(params, x_nchw, cfg):
    neg = float(cfg["RELU_NEG_SLOPE"])
    use_gsp = bool(cfg["D_USE_GSP"])
    n, cin, h, w = x_nchw.shape
    ch = int(cfg["D_CONV_CH"])
    cth = int(cfg["D_CONV_THERMAL_CH"])
    h3, w3 = h // 8, w // 8
    c3ch = ch * 4

    # NCHW -> NHWC -> (N, H, W*Cin); one image per grid step, shipped in bf16.
    x3d = jnp.transpose(x_nchw, (0, 2, 3, 1)).reshape(n, h, w * cin)
    x3d = x3d.astype(_MM_DTYPE)

    # ---- all bias rows packed into a single small f32 operand ---------------
    bias_rows, bias_meta = [], {}

    def add_bias(name, vec, width):
        row = jnp.tile(vec.reshape(-1), width).astype(jnp.float32)
        bias_meta[name] = (len(bias_rows), int(row.shape[0]))
        bias_rows.append(row)

    for name, bp, bw in (("c1", params["c1"], w),
                         ("c2", params["c2"], w // 2),
                         ("c3", params["c3"], w // 4),
                         ("th", params["th_rbd"], w3)):
        add_bias(name + "_b1", bp["b1"], bw)
        add_bias(name + "_b2", bp["b2"], bw)
        add_bias(name + "_bsc", bp["bsc"], bw)
    add_bias("thc", params["th_conv_b"], w3)
    bias_meta["label"] = (len(bias_rows), 1)
    bias_rows.append(params["label_b"].reshape(-1).astype(jnp.float32))

    max_w = max(int(r.shape[0]) for r in bias_rows)
    wpad = max(128, ((max_w + 127) // 128) * 128)
    rpad = ((len(bias_rows) + 7) // 8) * 8
    bias_mat = jnp.zeros((rpad, wpad), jnp.float32)
    for i, r in enumerate(bias_rows):
        bias_mat = bias_mat.at[i, :r.shape[0]].set(r)

    # ---- label-head weight operand (no batch scaling) ------------------------
    if use_gsp:
        head_w = jnp.tile(params["label_w"][:, 0], w3)[None, :]        # (1, w3*C)
    else:
        # torch.flatten over NCHW ordering: index = c*h3*w3 + y*w3 + x
        wm = params["label_w"][:, 0].reshape(c3ch, h3, w3)
        head_w = jnp.transpose(wm, (1, 2, 0)).reshape(h3, w3 * c3ch)
    head_w = head_w.astype(jnp.float32)

    weights = {
        "bias": bias_mat,
        "c1": _block_operands(params["c1"], h, w, ch, down=True),
        "c2": _block_operands(params["c2"], h // 2, w // 2, ch * 2, down=True),
        "c3": _block_operands(params["c3"], h // 4, w // 4, c3ch, down=True),
        "th": _block_operands(params["th_rbd"], h3, w3, cth, down=False),
        "thc_B": _banded_conv3x3(params["th_conv_w"], w3),
        "head_w": head_w,
    }
    w_leaves, w_treedef = jax.tree_util.tree_flatten(weights)
    kernel = _make_kernel(w_treedef, len(w_leaves), neg, bias_meta)

    # VMEM budget from actual operand sizes (weights resident + double-buffered
    # per-image block and outputs), with generous headroom, capped at v7x's 64MiB.
    def _nbytes(a):
        return int(np.prod(a.shape)) * jnp.dtype(a.dtype).itemsize
    op_bytes = sum(_nbytes(l) for l in w_leaves) + _nbytes(x3d) // n
    vmem_limit = int(min(64 * 2**20, max(4 * 2**20, 6 * op_bytes + 2 * 2**20)))

    in_specs = ([pl.BlockSpec((None, h, w * cin), lambda i: (i, 0, 0))]
                + [_VMEM] * len(w_leaves))
    out_specs = (pl.BlockSpec((None, 1, 128), lambda i: (i, 0, 0)),
                 pl.BlockSpec((None, h3, w3), lambda i: (i, 0, 0)))

    label_pad, thermal_mat = pl.pallas_call(
        kernel,
        grid=(n,),
        out_shape=(jax.ShapeDtypeStruct((n, 1, 128), jnp.float32),
                   jax.ShapeDtypeStruct((n, h3, w3), jnp.float32)),
        in_specs=in_specs,
        out_specs=out_specs,
        compiler_params=pltpu.CompilerParams(
            dimension_semantics=("parallel",),
            vmem_limit_bytes=vmem_limit),
    )(x3d, *w_leaves)

    label = label_pad[:, 0, :1]                        # (N, 1)
    thermal = thermal_mat[:, None, :, :]               # (N, 1, H/8, W/8)
    return label, thermal


# ----------------------------------- init ------------------------------------

def _init_conv(key, kh, kw, cin, cout):
    kw_, kb = jax.random.split(key)
    w = jax.random.normal(kw_, (kh, kw, cin, cout), jnp.float32) * 0.05
    b = jax.random.normal(kb, (cout,), jnp.float32) * 0.01
    return w, b


def _init_resblock(key, cin, cout):
    k1, k2, k3 = jax.random.split(key, 3)
    w1, b1 = _init_conv(k1, 3, 3, cin, cout)
    w2, b2 = _init_conv(k2, 3, 3, cout, cout)
    wsc, bsc = _init_conv(k3, 1, 1, cin, cout)
    return {"w1": w1, "b1": b1, "w2": w2, "b2": b2, "wsc": wsc, "bsc": bsc}


def init_discriminator(key, cfg):
    ks = jax.random.split(key, 6)
    ch = cfg["D_CONV_CH"]
    feat_dim = ch * 4 * (1 if cfg["D_USE_GSP"]
                         else (cfg["IMG_SHAPE_Y"] // 8) * (cfg["IMG_SHAPE_X"] // 8))
    params = {
        "c1": _init_resblock(ks[0], 3, ch),
        "c2": _init_resblock(ks[1], ch, ch * 2),
        "c3": _init_resblock(ks[2], ch * 2, ch * 4),
        "label_w": jax.random.normal(ks[3], (feat_dim, 1), jnp.float32) * 0.05,
        "label_b": jnp.zeros((1,), jnp.float32),
        "th_rbd": _init_resblock(ks[4], ch * 4, cfg["D_CONV_THERMAL_CH"]),
    }
    wtc, btc = _init_conv(ks[5], 3, 3, cfg["D_CONV_THERMAL_CH"], 1)
    params["th_conv_w"], params["th_conv_b"] = wtc, btc
    return params


# ----------------------------------- main -------------------------------------

if __name__ == "__main__":
    cfg = dict(
        D_CONV_CH=8,
        D_CONV_THERMAL_CH=4,
        RELU_NEG_SLOPE=0.2,
        D_USE_GSP=True,
        IMG_SHAPE_Y=16,
        IMG_SHAPE_X=16,
    )
    key = jax.random.PRNGKey(0)
    kx, kp = jax.random.split(key)
    x = jax.random.normal(kx, (2, 3, 16, 16), jnp.float32)   # NCHW like PyTorch
    params = init_discriminator(kp, cfg)

    fwd = jax.jit(functools.partial(discriminator_forward, cfg=cfg))
    label, thermal = fwd(params, x)
    jax.block_until_ready((label, thermal))

    assert label.shape == (2, 1), label.shape
    assert thermal.shape == (2, 1, 2, 2), thermal.shape
    assert bool(jnp.all(jnp.isfinite(label))) and bool(jnp.all(jnp.isfinite(thermal)))
    print("KERNEL_OK")
</pallas_src>

<mosaic_0001>
module attributes {stable_mosaic.version = 11 : i64} {
  func.func @kernel(%arg0: i32, %arg1: memref<1x16x48xbf16, #tpu.memory_space<vmem>>, %arg2: memref<16x128xf32, #tpu.memory_space<vmem>>, %arg3: memref<144x128xbf16, #tpu.memory_space<vmem>>, %arg4: memref<384x128xbf16, #tpu.memory_space<vmem>>, %arg5: memref<48x128xbf16, #tpu.memory_space<vmem>>, %arg6: memref<8x16xbf16, #tpu.memory_space<vmem>>, %arg7: memref<128x64xbf16, #tpu.memory_space<vmem>>, %arg8: memref<192x128xbf16, #tpu.memory_space<vmem>>, %arg9: memref<384x128xbf16, #tpu.memory_space<vmem>>, %arg10: memref<64x128xbf16, #tpu.memory_space<vmem>>, %arg11: memref<4x8xbf16, #tpu.memory_space<vmem>>, %arg12: memref<128x64xbf16, #tpu.memory_space<vmem>>, %arg13: memref<192x128xbf16, #tpu.memory_space<vmem>>, %arg14: memref<384x128xbf16, #tpu.memory_space<vmem>>, %arg15: memref<64x128xbf16, #tpu.memory_space<vmem>>, %arg16: memref<2x4xbf16, #tpu.memory_space<vmem>>, %arg17: memref<128x64xbf16, #tpu.memory_space<vmem>>, %arg18: memref<1x64xf32, #tpu.memory_space<vmem>>, %arg19: memref<192x8xbf16, #tpu.memory_space<vmem>>, %arg20: memref<24x8xbf16, #tpu.memory_space<vmem>>, %arg21: memref<64x8xbf16, #tpu.memory_space<vmem>>, %arg22: memref<24x2xbf16, #tpu.memory_space<vmem>>, %arg23: memref<1x1x128xf32, #tpu.memory_space<vmem>>, %arg24: memref<1x2x2xf32, #tpu.memory_space<vmem>>) attributes {dimension_semantics = [#tpu.dimension_semantics<parallel>], iteration_bounds = array<i64: 2>, scalar_prefetch = 0 : i64, scratch_operands = 0 : i64, tpu.core_type = #tpu.core_type<tc>, window_params = [{transform_indices = @transform_0, window_bounds = array<i64: 1, 16, 48>}, {pipeline_mode = #tpu.pipeline_mode<synchronous>, transform_indices = @transform_1, window_bounds = array<i64: 16, 128>}, {pipeline_mode = #tpu.pipeline_mode<synchronous>, transform_indices = @transform_2, window_bounds = array<i64: 144, 128>}, {pipeline_mode = #tpu.pipeline_mode<synchronous>, transform_indices = @transform_3, window_bounds = array<i64: 384, 128>}, {pipeline_mode = #tpu.pipeline_mode<synchronous>, transform_indices = @transform_4, window_bounds = array<i64: 48, 128>}, {pipeline_mode = #tpu.pipeline_mode<synchronous>, transform_indices = @transform_5, window_bounds = array<i64: 8, 16>}, {pipeline_mode = #tpu.pipeline_mode<synchronous>, transform_indices = @transform_6, window_bounds = array<i64: 128, 64>}, {pipeline_mode = #tpu.pipeline_mode<synchronous>, transform_indices = @transform_7, window_bounds = array<i64: 192, 128>}, {pipeline_mode = #tpu.pipeline_mode<synchronous>, transform_indices = @transform_8, window_bounds = array<i64: 384, 128>}, {pipeline_mode = #tpu.pipeline_mode<synchronous>, transform_indices = @transform_9, window_bounds = array<i64: 64, 128>}, {pipeline_mode = #tpu.pipeline_mode<synchronous>, transform_indices = @transform_10, window_bounds = array<i64: 4, 8>}, {pipeline_mode = #tpu.pipeline_mode<synchronous>, transform_indices = @transform_11, window_bounds = array<i64: 128, 64>}, {pipeline_mode = #tpu.pipeline_mode<synchronous>, transform_indices = @transform_12, window_bounds = array<i64: 192, 128>}, {pipeline_mode = #tpu.pipeline_mode<synchronous>, transform_indices = @transform_13, window_bounds = array<i64: 384, 128>}, {pipeline_mode = #tpu.pipeline_mode<synchronous>, transform_indices = @transform_14, window_bounds = array<i64: 64, 128>}, {pipeline_mode = #tpu.pipeline_mode<synchronous>, transform_indices = @transform_15, window_bounds = array<i64: 2, 4>}, {pipeline_mode = #tpu.pipeline_mode<synchronous>, transform_indices = @transform_16, window_bounds = array<i64: 128, 64>}, {pipeline_mode = #tpu.pipeline_mode<synchronous>, transform_indices = @transform_17, window_bounds = array<i64: 1, 64>}, {pipeline_mode = #tpu.pipeline_mode<synchronous>, transform_indices = @transform_18, window_bounds = array<i64: 192, 8>}, {pipeline_mode = #tpu.pipeline_mode<synchronous>, transform_indices = @transform_19, window_bounds = array<i64: 24, 8>}, {pipeline_mode = #tpu.pipeline_mode<synchronous>, transform_indices = @transform_20, window_bounds = array<i64: 64, 8>}, {pipeline_mode = #tpu.pipeline_mode<synchronous>, transform_indices = @transform_21, window_bounds = array<i64: 24, 2>}, {transform_indices = @transform_22, window_bounds = array<i64: 1, 1, 128>}, {transform_indices = @transform_23, window_bounds = array<i64: 1, 2, 2>}]} {
    %c0 = arith.constant 0 : index
    %c0_0 = arith.constant 0 : index
    %0 = vector.load %arg2[%c0, %c0_0] : memref<16x128xf32, #tpu.memory_space<vmem>>, vector<16x128xf32>
    %c0_1 = arith.constant 0 : index
    %c0_2 = arith.constant 0 : index
    %c0_3 = arith.constant 0 : index
    %1 = vector.load %arg1[%c0_1, %c0_2, %c0_3] : memref<1x16x48xbf16, #tpu.memory_space<vmem>>, vector<1x16x48xbf16>
    %2 = vector.shape_cast %1 : vector<1x16x48xbf16> to vector<16x48xbf16>
    %cst = arith.constant 0.000000e+00 : bf16
    %3 = vector.broadcast %cst : bf16 to vector<1x48xbf16>
    %4 = vector.extract_strided_slice %2 {offsets = [0, 0], sizes = [15, 48], strides = [1, 1]} : vector<16x48xbf16> to vector<15x48xbf16>
    %5 = tpu.concatenate %3, %4 in 0 : vector<1x48xbf16>, vector<15x48xbf16> -> vector<16x48xbf16>
    %cst_4 = arith.constant 0.000000e+00 : bf16
    %6 = vector.broadcast %cst_4 : bf16 to vector<1x48xbf16>
    %7 = vector.extract_strided_slice %2 {offsets = [1, 0], sizes = [15, 48], strides = [1, 1]} : vector<16x48xbf16> to vector<15x48xbf16>
    %8 = tpu.concatenate %7, %6 in 0 : vector<15x48xbf16>, vector<1x48xbf16> -> vector<16x48xbf16>
    %9 = tpu.concatenate %5, %2, %8 in 1 : vector<16x48xbf16>, vector<16x48xbf16>, vector<16x48xbf16> -> vector<16x144xbf16>
    %c0_5 = arith.constant 0 : index
    %c0_6 = arith.constant 0 : index
    %10 = vector.load %arg3[%c0_5, %c0_6] : memref<144x128xbf16, #tpu.memory_space<vmem>>, vector<144x128xbf16>
    %cst_7 = arith.constant dense<0.000000e+00> : vector<16x128xf32>
    %11 = tpu.matmul %9, %10, %cst_7 {dimension_numbers = #tpu.dot_dimension_numbers<[1], [0], [0], [1], [0, 0, 1, 1], [], []>} : vector<16x144xbf16>, vector<144x128xbf16>, vector<16x128xf32> -> vector<16x128xf32>
    %12 = vector.extract_strided_slice %0 {offsets = [0, 0], sizes = [1, 128], strides = [1, 1]} : vector<16x128xf32> to vector<1x128xf32>
    %13 = vector.broadcast %12 : vector<1x128xf32> to vector<16x128xf32>
    %14 = arith.addf %11, %13 : vector<16x128xf32>
    %cst_8 = arith.constant 0.000000e+00 : f32
    %15 = vector.broadcast %cst_8 : f32 to vector<16x128xf32>
    %16 = arith.cmpf oge, %14, %15 : vector<16x128xf32>
    %cst_9 = arith.constant 2.000000e-01 : f32
    %17 = vector.broadcast %cst_9 : f32 to vector<16x128xf32>
    %18 = arith.mulf %17, %14 : vector<16x128xf32>
    %19 = arith.select %16, %14, %18 : vector<16x128xi1>, vector<16x128xf32>
    %20 = arith.truncf %19 : vector<16x128xf32> to vector<16x128xbf16>
    %cst_10 = arith.constant 0.000000e+00 : bf16
    %21 = vector.broadcast %cst_10 : bf16 to vector<1x128xbf16>
    %22 = vector.extract_strided_slice %20 {offsets = [0, 0], sizes = [15, 128], strides = [1, 1]} : vector<16x128xbf16> to vector<15x128xbf16>
    %23 = tpu.concatenate %21, %22 in 0 : vector<1x128xbf16>, vector<15x128xbf16> -> vector<16x128xbf16>
    %cst_11 = arith.constant 0.000000e+00 : bf16
    %24 = vector.broadcast %cst_11 : bf16 to vector<1x128xbf16>
    %25 = vector.extract_strided_slice %20 {offsets = [1, 0], sizes = [15, 128], strides = [1, 1]} : vector<16x128xbf16> to vector<15x128xbf16>
    %26 = tpu.concatenate %25, %24 in 0 : vector<15x128xbf16>, vector<1x128xbf16> -> vector<16x128xbf16>
    %27 = tpu.concatenate %23, %20, %26 in 1 : vector<16x128xbf16>, vector<16x128xbf16>, vector<16x128xbf16> -> vector<16x384xbf16>
    %c0_12 = arith.constant 0 : index
    %c0_13 = arith.constant 0 : index
    %28 = vector.load %arg4[%c0_12, %c0_13] : memref<384x128xbf16, #tpu.memory_space<vmem>>, vector<384x128xbf16>
    %cst_14 = arith.constant dense<0.000000e+00> : vector<16x128xf32>
    %29 = tpu.matmul %27, %28, %cst_14 {dimension_numbers = #tpu.dot_dimension_numbers<[1], [0], [0], [1], [0, 0, 1, 1], [], []>} : vector<16x384xbf16>, vector<384x128xbf16>, vector<16x128xf32> -> vector<16x128xf32>
    %30 = vector.extract_strided_slice %0 {offsets = [1, 0], sizes = [1, 128], strides = [1, 1]} : vector<16x128xf32> to vector<1x128xf32>
    %31 = vector.broadcast %30 : vector<1x128xf32> to vector<16x128xf32>
    %32 = arith.addf %29, %31 : vector<16x128xf32>
    %c0_15 = arith.constant 0 : index
    %c0_16 = arith.constant 0 : index
    %33 = vector.load %arg5[%c0_15, %c0_16] : memref<48x128xbf16, #tpu.memory_space<vmem>>, vector<48x128xbf16>
    %cst_17 = arith.constant dense<0.000000e+00> : vector<16x128xf32>
    %34 = tpu.matmul %2, %33, %cst_17 {dimension_numbers = #tpu.dot_dimension_numbers<[1], [0], [0], [1], [0, 0, 1, 1], [], []>} : vector<16x48xbf16>, vector<48x128xbf16>, vector<16x128xf32> -> vector<16x128xf32>
    %35 = vector.extract_strided_slice %0 {offsets = [2, 0], sizes = [1, 128], strides = [1, 1]} : vector<16x128xf32> to vector<1x128xf32>
    %36 = vector.broadcast %35 : vector<1x128xf32> to vector<16x128xf32>
    %37 = arith.addf %34, %36 : vector<16x128xf32>
    %38 = arith.addf %32, %37 : vector<16x128xf32>
    %c0_18 = arith.constant 0 : index
    %c0_19 = arith.constant 0 : index
    %39 = vector.load %arg6[%c0_18, %c0_19] : memref<8x16xbf16, #tpu.memory_space<vmem>>, vector<8x16xbf16>
    %40 = arith.truncf %38 : vector<16x128xf32> to vector<16x128xbf16>
    %cst_20 = arith.constant dense<0.000000e+00> : vector<8x128xf32>
    %41 = tpu.matmul %39, %40, %cst_20 {dimension_numbers = #tpu.dot_dimension_numbers<[1], [0], [0], [1], [0, 0, 1, 1], [], []>} : vector<8x16xbf16>, vector<16x128xbf16>, vector<8x128xf32> -> vector<8x128xf32>
    %c0_21 = arith.constant 0 : index
    %c0_22 = arith.constant 0 : index
    %42 = vector.load %arg7[%c0_21, %c0_22] : memref<128x64xbf16, #tpu.memory_space<vmem>>, vector<128x64xbf16>
    %43 = arith.truncf %41 : vector<8x128xf32> to vector<8x128xbf16>
    %cst_23 = arith.constant dense<0.000000e+00> : vector<8x64xf32>
    %44 = tpu.matmul %43, %42, %cst_23 {dimension_numbers = #tpu.dot_dimension_numbers<[1], [0], [0], [1], [0, 0, 1, 1], [], []>} : vector<8x128xbf16>, vector<128x64xbf16>, vector<8x64xf32> -> vector<8x64xf32>
    %cst_24 = arith.constant 0.000000e+00 : f32
    %45 = vector.broadcast %cst_24 : f32 to vector<8x64xf32>
    %46 = arith.cmpf oge, %44, %45 : vector<8x64xf32>
    %cst_25 = arith.constant 2.000000e-01 : f32
    %47 = vector.broadcast %cst_25 : f32 to vector<8x64xf32>
    %48 = arith.mulf %47, %44 : vector<8x64xf32>
    %49 = arith.select %46, %44, %48 : vector<8x64xi1>, vector<8x64xf32>
    %50 = arith.truncf %49 : vector<8x64xf32> to vector<8x64xbf16>
    %cst_26 = arith.constant 0.000000e+00 : bf16
    %51 = vector.broadcast %cst_26 : bf16 to vector<1x64xbf16>
    %52 = vector.extract_strided_slice %50 {offsets = [0, 0], sizes = [7, 64], strides = [1, 1]} : vector<8x64xbf16> to vector<7x64xbf16>
    %53 = tpu.concatenate %51, %52 in 0 : vector<1x64xbf16>, vector<7x64xbf16> -> vector<8x64xbf16>
    %cst_27 = arith.constant 0.000000e+00 : bf16
    %54 = vector.broadcast %cst_27 : bf16 to vector<1x64xbf16>
    %55 = vector.extract_strided_slice %50 {offsets = [1, 0], sizes = [7, 64], strides = [1, 1]} : vector<8x64xbf16> to vector<7x64xbf16>
    %56 = tpu.concatenate %55, %54 in 0 : vector<7x64xbf16>, vector<1x64xbf16> -> vector<8x64xbf16>
    %57 = tpu.concatenate %53, %50, %56 in 1 : vector<8x64xbf16>, vector<8x64xbf16>, vector<8x64xbf16> -> vector<8x192xbf16>
    %c0_28 = arith.constant 0 : index
    %c0_29 = arith.constant 0 : index
    %58 = vector.load %arg8[%c0_28, %c0_29] : memref<192x128xbf16, #tpu.memory_space<vmem>>, vector<192x128xbf16>
    %cst_30 = arith.constant dense<0.000000e+00> : vector<8x128xf32>
    %59 = tpu.matmul %57, %58, %cst_30 {dimension_numbers = #tpu.dot_dimension_numbers<[1], [0], [0], [1], [0, 0, 1, 1], [], []>} : vector<8x192xbf16>, vector<192x128xbf16>, vector<8x128xf32> -> vector<8x128xf32>
    %60 = vector.extract_strided_slice %0 {offsets = [3, 0], sizes = [1, 128], strides = [1, 1]} : vector<16x128xf32> to vector<1x128xf32>
    %61 = vector.broadcast %60 : vector<1x128xf32> to vector<8x128xf32>
    %62 = arith.addf %59, %61 : vector<8x128xf32>
    %cst_31 = arith.constant 0.000000e+00 : f32
    %63 = vector.broadcast %cst_31 : f32 to vector<8x128xf32>
    %64 = arith.cmpf oge, %62, %63 : vector<8x128xf32>
    %cst_32 = arith.constant 2.000000e-01 : f32
    %65 = vector.broadcast %cst_32 : f32 to vector<8x128xf32>
    %66 = arith.mulf %65, %62 : vector<8x128xf32>
    %67 = arith.select %64, %62, %66 : vector<8x128xi1>, vector<8x128xf32>
    %68 = arith.truncf %67 : vector<8x128xf32> to vector<8x128xbf16>
    %cst_33 = arith.constant 0.000000e+00 : bf16
    %69 = vector.broadcast %cst_33 : bf16 to vector<1x128xbf16>
    %70 = vector.extract_strided_slice %68 {offsets = [0, 0], sizes = [7, 128], strides = [1, 1]} : vector<8x128xbf16> to vector<7x128xbf16>
    %71 = tpu.concatenate %69, %70 in 0 : vector<1x128xbf16>, vector<7x128xbf16> -> vector<8x128xbf16>
    %cst_34 = arith.constant 0.000000e+00 : bf16
    %72 = vector.broadcast %cst_34 : bf16 to vector<1x128xbf16>
    %73 = vector.extract_strided_slice %68 {offsets = [1, 0], sizes = [7, 128], strides = [1, 1]} : vector<8x128xbf16> to vector<7x128xbf16>
    %74 = tpu.concatenate %73, %72 in 0 : vector<7x128xbf16>, vector<1x128xbf16> -> vector<8x128xbf16>
    %75 = tpu.concatenate %71, %68, %74 in 1 : vector<8x128xbf16>, vector<8x128xbf16>, vector<8x128xbf16> -> vector<8x384xbf16>
    %c0_35 = arith.constant 0 : index
    %c0_36 = arith.constant 0 : index
    %76 = vector.load %arg9[%c0_35, %c0_36] : memref<384x128xbf16, #tpu.memory_space<vmem>>, vector<384x128xbf16>
    %cst_37 = arith.constant dense<0.000000e+00> : vector<8x128xf32>
    %77 = tpu.matmul %75, %76, %cst_37 {dimension_numbers = #tpu.dot_dimension_numbers<[1], [0], [0], [1], [0, 0, 1, 1], [], []>} : vector<8x384xbf16>, vector<384x128xbf16>, vector<8x128xf32> -> vector<8x128xf32>
    %78 = vector.extract_strided_slice %0 {offsets = [4, 0], sizes = [1, 128], strides = [1, 1]} : vector<16x128xf32> to vector<1x128xf32>
    %79 = vector.broadcast %78 : vector<1x128xf32> to vector<8x128xf32>
    %80 = arith.addf %77, %79 : vector<8x128xf32>
    %c0_38 = arith.constant 0 : index
    %c0_39 = arith.constant 0 : index
    %81 = vector.load %arg10[%c0_38, %c0_39] : memref<64x128xbf16, #tpu.memory_space<vmem>>, vector<64x128xbf16>
    %82 = arith.truncf %44 : vector<8x64xf32> to vector<8x64xbf16>
    %cst_40 = arith.constant dense<0.000000e+00> : vector<8x128xf32>
    %83 = tpu.matmul %82, %81, %cst_40 {dimension_numbers = #tpu.dot_dimension_numbers<[1], [0], [0], [1], [0, 0, 1, 1], [], []>} : vector<8x64xbf16>, vector<64x128xbf16>, vector<8x128xf32> -> vector<8x128xf32>
    %84 = vector.extract_strided_slice %0 {offsets = [5, 0], sizes = [1, 128], strides = [1, 1]} : vector<16x128xf32> to vector<1x128xf32>
    %85 = vector.broadcast %84 : vector<1x128xf32> to vector<8x128xf32>
    %86 = arith.addf %83, %85 : vector<8x128xf32>
    %87 = arith.addf %80, %86 : vector<8x128xf32>
    %c0_41 = arith.constant 0 : index
    %c0_42 = arith.constant 0 : index
    %88 = vector.load %arg11[%c0_41, %c0_42] : memref<4x8xbf16, #tpu.memory_space<vmem>>, vector<4x8xbf16>
    %89 = arith.truncf %87 : vector<8x128xf32> to vector<8x128xbf16>
    %cst_43 = arith.constant dense<0.000000e+00> : vector<4x128xf32>
    %90 = tpu.matmul %88, %89, %cst_43 {dimension_numbers = #tpu.dot_dimension_numbers<[1], [0], [0], [1], [0, 0, 1, 1], [], []>} : vector<4x8xbf16>, vector<8x128xbf16>, vector<4x128xf32> -> vector<4x128xf32>
    %c0_44 = arith.constant 0 : index
    %c0_45 = arith.constant 0 : index
    %91 = vector.load %arg12[%c0_44, %c0_45] : memref<128x64xbf16, #tpu.memory_space<vmem>>, vector<128x64xbf16>
    %92 = arith.truncf %90 : vector<4x128xf32> to vector<4x128xbf16>
    %cst_46 = arith.constant dense<0.000000e+00> : vector<4x64xf32>
    %93 = tpu.matmul %92, %91, %cst_46 {dimension_numbers = #tpu.dot_dimension_numbers<[1], [0], [0], [1], [0, 0, 1, 1], [], []>} : vector<4x128xbf16>, vector<128x64xbf16>, vector<4x64xf32> -> vector<4x64xf32>
    %cst_47 = arith.constant 0.000000e+00 : f32
    %94 = vector.broadcast %cst_47 : f32 to vector<4x64xf32>
    %95 = arith.cmpf oge, %93, %94 : vector<4x64xf32>
    %cst_48 = arith.constant 2.000000e-01 : f32
    %96 = vector.broadcast %cst_48 : f32 to vector<4x64xf32>
    %97 = arith.mulf %96, %93 : vector<4x64xf32>
    %98 = arith.select %95, %93, %97 : vector<4x64xi1>, vector<4x64xf32>
    %99 = arith.truncf %98 : vector<4x64xf32> to vector<4x64xbf16>
    %cst_49 = arith.constant 0.000000e+00 : bf16
    %100 = vector.broadcast %cst_49 : bf16 to vector<1x64xbf16>
    %101 = vector.extract_strided_slice %99 {offsets = [0, 0], sizes = [3, 64], strides = [1, 1]} : vector<4x64xbf16> to vector<3x64xbf16>
    %102 = tpu.concatenate %100, %101 in 0 : vector<1x64xbf16>, vector<3x64xbf16> -> vector<4x64xbf16>
    %cst_50 = arith.constant 0.000000e+00 : bf16
    %103 = vector.broadcast %cst_50 : bf16 to vector<1x64xbf16>
    %104 = vector.extract_strided_slice %99 {offsets = [1, 0], sizes = [3, 64], strides = [1, 1]} : vector<4x64xbf16> to vector<3x64xbf16>
    %105 = tpu.concatenate %104, %103 in 0 : vector<3x64xbf16>, vector<1x64xbf16> -> vector<4x64xbf16>
    %106 = tpu.concatenate %102, %99, %105 in 1 : vector<4x64xbf16>, vector<4x64xbf16>, vector<4x64xbf16> -> vector<4x192xbf16>
    %c0_51 = arith.constant 0 : index
    %c0_52 = arith.constant 0 : index
    %107 = vector.load %arg13[%c0_51, %c0_52] : memref<192x128xbf16, #tpu.memory_space<vmem>>, vector<192x128xbf16>
    %cst_53 = arith.constant dense<0.000000e+00> : vector<4x128xf32>
    %108 = tpu.matmul %106, %107, %cst_53 {dimension_numbers = #tpu.dot_dimension_numbers<[1], [0], [0], [1], [0, 0, 1, 1], [], []>} : vector<4x192xbf16>, vector<192x128xbf16>, vector<4x128xf32> -> vector<4x128xf32>
    %109 = vector.extract_strided_slice %0 {offsets = [6, 0], sizes = [1, 128], strides = [1, 1]} : vector<16x128xf32> to vector<1x128xf32>
    %110 = vector.broadcast %109 : vector<1x128xf32> to vector<4x128xf32>
    %111 = arith.addf %108, %110 : vector<4x128xf32>
    %cst_54 = arith.constant 0.000000e+00 : f32
    %112 = vector.broadcast %cst_54 : f32 to vector<4x128xf32>
    %113 = arith.cmpf oge, %111, %112 : vector<4x128xf32>
    %cst_55 = arith.constant 2.000000e-01 : f32
    %114 = vector.broadcast %cst_55 : f32 to vector<4x128xf32>
    %115 = arith.mulf %114, %111 : vector<4x128xf32>
    %116 = arith.select %113, %111, %115 : vector<4x128xi1>, vector<4x128xf32>
    %117 = arith.truncf %116 : vector<4x128xf32> to vector<4x128xbf16>
    %cst_56 = arith.constant 0.000000e+00 : bf16
    %118 = vector.broadcast %cst_56 : bf16 to vector<1x128xbf16>
    %119 = vector.extract_strided_slice %117 {offsets = [0, 0], sizes = [3, 128], strides = [1, 1]} : vector<4x128xbf16> to vector<3x128xbf16>
    %120 = tpu.concatenate %118, %119 in 0 : vector<1x128xbf16>, vector<3x128xbf16> -> vector<4x128xbf16>
    %cst_57 = arith.constant 0.000000e+00 : bf16
    %121 = vector.broadcast %cst_57 : bf16 to vector<1x128xbf16>
    %122 = vector.extract_strided_slice %117 {offsets = [1, 0], sizes = [3, 128], strides = [1, 1]} : vector<4x128xbf16> to vector<3x128xbf16>
    %123 = tpu.concatenate %122, %121 in 0 : vector<3x128xbf16>, vector<1x128xbf16> -> vector<4x128xbf16>
    %124 = tpu.concatenate %120, %117, %123 in 1 : vector<4x128xbf16>, vector<4x128xbf16>, vector<4x128xbf16> -> vector<4x384xbf16>
    %c0_58 = arith.constant 0 : index
    %c0_59 = arith.constant 0 : index
    %125 = vector.load %arg14[%c0_58, %c0_59] : memref<384x128xbf16, #tpu.memory_space<vmem>>, vector<384x128xbf16>
    %cst_60 = arith.constant dense<0.000000e+00> : vector<4x128xf32>
    %126 = tpu.matmul %124, %125, %cst_60 {dimension_numbers = #tpu.dot_dimension_numbers<[1], [0], [0], [1], [0, 0, 1, 1], [], []>} : vector<4x384xbf16>, vector<384x128xbf16>, vector<4x128xf32> -> vector<4x128xf32>
    %127 = vector.extract_strided_slice %0 {offsets = [7, 0], sizes = [1, 128], strides = [1, 1]} : vector<16x128xf32> to vector<1x128xf32>
    %128 = vector.broadcast %127 : vector<1x128xf32> to vector<4x128xf32>
    %129 = arith.addf %126, %128 : vector<4x128xf32>
    %c0_61 = arith.constant 0 : index
    %c0_62 = arith.constant 0 : index
    %130 = vector.load %arg15[%c0_61, %c0_62] : memref<64x128xbf16, #tpu.memory_space<vmem>>, vector<64x128xbf16>
    %131 = arith.truncf %93 : vector<4x64xf32> to vector<4x64xbf16>
    %cst_63 = arith.constant dense<0.000000e+00> : vector<4x128xf32>
    %132 = tpu.matmul %131, %130, %cst_63 {dimension_numbers = #tpu.dot_dimension_numbers<[1], [0], [0], [1], [0, 0, 1, 1], [], []>} : vector<4x64xbf16>, vector<64x128xbf16>, vector<4x128xf32> -> vector<4x128xf32>
    %133 = vector.extract_strided_slice %0 {offsets = [8, 0], sizes = [1, 128], strides = [1, 1]} : vector<16x128xf32> to vector<1x128xf32>
    %134 = vector.broadcast %133 : vector<1x128xf32> to vector<4x128xf32>
    %135 = arith.addf %132, %134 : vector<4x128xf32>
    %136 = arith.addf %129, %135 : vector<4x128xf32>
    %c0_64 = arith.constant 0 : index
    %c0_65 = arith.constant 0 : index
    %137 = vector.load %arg16[%c0_64, %c0_65] : memref<2x4xbf16, #tpu.memory_space<vmem>>, vector<2x4xbf16>
    %138 = arith.truncf %136 : vector<4x128xf32> to vector<4x128xbf16>
    %cst_66 = arith.constant dense<0.000000e+00> : vector<2x128xf32>
    %139 = tpu.matmul %137, %138, %cst_66 {dimension_numbers = #tpu.dot_dimension_numbers<[1], [0], [0], [1], [0, 0, 1, 1], [], []>} : vector<2x4xbf16>, vector<4x128xbf16>, vector<2x128xf32> -> vector<2x128xf32>
    %c0_67 = arith.constant 0 : index
    %c0_68 = arith.constant 0 : index
    %140 = vector.load %arg17[%c0_67, %c0_68] : memref<128x64xbf16, #tpu.memory_space<vmem>>, vector<128x64xbf16>
    %141 = arith.truncf %139 : vector<2x128xf32> to vector<2x128xbf16>
    %cst_69 = arith.constant dense<0.000000e+00> : vector<2x64xf32>
    %142 = tpu.matmul %141, %140, %cst_69 {dimension_numbers = #tpu.dot_dimension_numbers<[1], [0], [0], [1], [0, 0, 1, 1], [], []>} : vector<2x128xbf16>, vector<128x64xbf16>, vector<2x64xf32> -> vector<2x64xf32>
    %cst_70 = arith.constant 0.000000e+00 : f32
    %143 = vector.broadcast %cst_70 : f32 to vector<2x64xf32>
    %144 = arith.cmpf oge, %142, %143 : vector<2x64xf32>
    %cst_71 = arith.constant 2.000000e-01 : f32
    %145 = vector.broadcast %cst_71 : f32 to vector<2x64xf32>
    %146 = arith.mulf %145, %142 : vector<2x64xf32>
    %147 = arith.select %144, %142, %146 : vector<2x64xi1>, vector<2x64xf32>
    %c0_72 = arith.constant 0 : index
    %c0_73 = arith.constant 0 : index
    %148 = vector.load %arg18[%c0_72, %c0_73] : memref<1x64xf32, #tpu.memory_space<vmem>>, vector<1x64xf32>
    %149 = vector.broadcast %148 : vector<1x64xf32> to vector<2x64xf32>
    %150 = arith.mulf %147, %149 : vector<2x64xf32>
    %cst_74 = arith.constant dense<0.000000e+00> : vector<2xf32>
    %151 = vector.multi_reduction <add>, %150, %cst_74 [1] : vector<2x64xf32> to vector<2xf32>
    %152 = vector.shape_cast %151 : vector<2xf32> to vector<2x1xf32>
    %cst_75 = arith.constant dense<0.000000e+00> : vector<1xf32>
    %153 = vector.multi_reduction <add>, %152, %cst_75 [0] : vector<2x1xf32> to vector<1xf32>
    %154 = vector.shape_cast %153 : vector<1xf32> to vector<1x1xf32>
    %155 = vector.extract_strided_slice %0 {offsets = [13, 0], sizes = [1, 1], strides = [1, 1]} : vector<16x128xf32> to vector<1x1xf32>
    %156 = arith.addf %154, %155 : vector<1x1xf32>
    %157 = vector.shape_cast %156 : vector<1x1xf32> to vector<1x1xf32>
    %158 = vector.broadcast %157 : vector<1x1xf32> to vector<1x128xf32>
    %c0_76 = arith.constant 0 : index
    %c0_77 = arith.constant 0 : index
    %c0_78 = arith.constant 0 : index
    %159 = vector.load %arg23[%c0_76, %c0_77, %c0_78] : memref<1x1x128xf32, #tpu.memory_space<vmem>>, vector<1x1x128xf32>
    %160 = vector.shape_cast %159 : vector<1x1x128xf32> to vector<1x128xf32>
    %161 = vector.shape_cast %158 : vector<1x128xf32> to vector<1x1x128xf32>
    tpu.vector_store %arg23[%c0_76, %c0_77, %c0_78], %161 {strides = array<i32>} : memref<1x1x128xf32, #tpu.memory_space<vmem>>, vector<1x1x128xf32>,
    %162 = arith.truncf %147 : vector<2x64xf32> to vector<2x64xbf16>
    %cst_79 = arith.constant 0.000000e+00 : bf16
    %163 = vector.broadcast %cst_79 : bf16 to vector<1x64xbf16>
    %164 = vector.extract_strided_slice %162 {offsets = [0, 0], sizes = [1, 64], strides = [1, 1]} : vector<2x64xbf16> to vector<1x64xbf16>
    %165 = tpu.concatenate %163, %164 in 0 : vector<1x64xbf16>, vector<1x64xbf16> -> vector<2x64xbf16>
    %cst_80 = arith.constant 0.000000e+00 : bf16
    %166 = vector.broadcast %cst_80 : bf16 to vector<1x64xbf16>
    %167 = vector.extract_strided_slice %162 {offsets = [1, 0], sizes = [1, 64], strides = [1, 1]} : vector<2x64xbf16> to vector<1x64xbf16>
    %168 = tpu.concatenate %167, %166 in 0 : vector<1x64xbf16>, vector<1x64xbf16> -> vector<2x64xbf16>
    %169 = tpu.concatenate %165, %162, %168 in 1 : vector<2x64xbf16>, vector<2x64xbf16>, vector<2x64xbf16> -> vector<2x192xbf16>
    %c0_81 = arith.constant 0 : index
    %c0_82 = arith.constant 0 : index
    %170 = vector.load %arg19[%c0_81, %c0_82] : memref<192x8xbf16, #tpu.memory_space<vmem>>, vector<192x8xbf16>
    %cst_83 = arith.constant dense<0.000000e+00> : vector<2x8xf32>
    %171 = tpu.matmul %169, %170, %cst_83 {dimension_numbers = #tpu.dot_dimension_numbers<[1], [0], [0], [1], [0, 0, 1, 1], [], []>} : vector<2x192xbf16>, vector<192x8xbf16>, vector<2x8xf32> -> vector<2x8xf32>
    %172 = vector.extract_strided_slice %0 {offsets = [9, 0], sizes = [1, 8], strides = [1, 1]} : vector<16x128xf32> to vector<1x8xf32>
    %173 = vector.broadcast %172 : vector<1x8xf32> to vector<2x8xf32>
    %174 = arith.addf %171, %173 : vector<2x8xf32>
    %cst_84 = arith.constant 0.000000e+00 : f32
    %175 = vector.broadcast %cst_84 : f32 to vector<2x8xf32>
    %176 = arith.cmpf oge, %174, %175 : vector<2x8xf32>
    %cst_85 = arith.constant 2.000000e-01 : f32
    %177 = vector.broadcast %cst_85 : f32 to vector<2x8xf32>
    %178 = arith.mulf %177, %174 : vector<2x8xf32>
    %179 = arith.select %176, %174, %178 : vector<2x8xi1>, vector<2x8xf32>
    %180 = arith.truncf %179 : vector<2x8xf32> to vector<2x8xbf16>
    %cst_86 = arith.constant 0.000000e+00 : bf16
    %181 = vector.broadcast %cst_86 : bf16 to vector<1x8xbf16>
    %182 = vector.extract_strided_slice %180 {offsets = [0, 0], sizes = [1, 8], strides = [1, 1]} : vector<2x8xbf16> to vector<1x8xbf16>
    %183 = tpu.concatenate %181, %182 in 0 : vector<1x8xbf16>, vector<1x8xbf16> -> vector<2x8xbf16>
    %cst_87 = arith.constant 0.000000e+00 : bf16
    %184 = vector.broadcast %cst_87 : bf16 to vector<1x8xbf16>
    %185 = vector.extract_strided_slice %180 {offsets = [1, 0], sizes = [1, 8], strides = [1, 1]} : vector<2x8xbf16> to vector<1x8xbf16>
    %186 = tpu.concatenate %185, %184 in 0 : vector<1x8xbf16>, vector<1x8xbf16> -> vector<2x8xbf16>
    %187 = tpu.concatenate %183, %180, %186 in 1 : vector<2x8xbf16>, vector<2x8xbf16>, vector<2x8xbf16> -> vector<2x24xbf16>
    %c0_88 = arith.constant 0 : index
    %c0_89 = arith.constant 0 : index
    %188 = vector.load %arg20[%c0_88, %c0_89] : memref<24x8xbf16, #tpu.memory_space<vmem>>, vector<24x8xbf16>
    %cst_90 = arith.constant dense<0.000000e+00> : vector<2x8xf32>
    %189 = tpu.matmul %187, %188, %cst_90 {dimension_numbers = #tpu.dot_dimension_numbers<[1], [0], [0], [1], [0, 0, 1, 1], [], []>} : vector<2x24xbf16>, vector<24x8xbf16>, vector<2x8xf32> -> vector<2x8xf32>
    %190 = vector.extract_strided_slice %0 {offsets = [10, 0], sizes = [1, 8], strides = [1, 1]} : vector<16x128xf32> to vector<1x8xf32>
    %191 = vector.broadcast %190 : vector<1x8xf32> to vector<2x8xf32>
    %192 = arith.addf %189, %191 : vector<2x8xf32>
    %c0_91 = arith.constant 0 : index
    %c0_92 = arith.constant 0 : index
    %193 = vector.load %arg21[%c0_91, %c0_92] : memref<64x8xbf16, #tpu.memory_space<vmem>>, vector<64x8xbf16>
    %194 = arith.truncf %142 : vector<2x64xf32> to vector<2x64xbf16>
    %cst_93 = arith.constant dense<0.000000e+00> : vector<2x8xf32>
    %195 = tpu.matmul %194, %193, %cst_93 {dimension_numbers = #tpu.dot_dimension_numbers<[1], [0], [0], [1], [0, 0, 1, 1], [], []>} : vector<2x64xbf16>, vector<64x8xbf16>, vector<2x8xf32> -> vector<2x8xf32>
    %196 = vector.extract_strided_slice %0 {offsets = [11, 0], sizes = [1, 8], strides = [1, 1]} : vector<16x128xf32> to vector<1x8xf32>
    %197 = vector.broadcast %196 : vector<1x8xf32> to vector<2x8xf32>
    %198 = arith.addf %195, %197 : vector<2x8xf32>
    %199 = arith.addf %192, %198 : vector<2x8xf32>
    %cst_94 = arith.constant 0.000000e+00 : f32
    %200 = vector.broadcast %cst_94 : f32 to vector<2x8xf32>
    %201 = arith.cmpf oge, %199, %200 : vector<2x8xf32>
    %cst_95 = arith.constant 2.000000e-01 : f32
    %202 = vector.broadcast %cst_95 : f32 to vector<2x8xf32>
    %203 = arith.mulf %202, %199 : vector<2x8xf32>
    %204 = arith.select %201, %199, %203 : vector<2x8xi1>, vector<2x8xf32>
    %205 = arith.truncf %204 : vector<2x8xf32> to vector<2x8xbf16>
    %cst_96 = arith.constant 0.000000e+00 : bf16
    %206 = vector.broadcast %cst_96 : bf16 to vector<1x8xbf16>
    %207 = vector.extract_strided_slice %205 {offsets = [0, 0], sizes = [1, 8], strides = [1, 1]} : vector<2x8xbf16> to vector<1x8xbf16>
    %208 = tpu.concatenate %206, %207 in 0 : vector<1x8xbf16>, vector<1x8xbf16> -> vector<2x8xbf16>
    %cst_97 = arith.constant 0.000000e+00 : bf16
    %209 = vector.broadcast %cst_97 : bf16 to vector<1x8xbf16>
    %210 = vector.extract_strided_slice %205 {offsets = [1, 0], sizes = [1, 8], strides = [1, 1]} : vector<2x8xbf16> to vector<1x8xbf16>
    %211 = tpu.concatenate %210, %209 in 0 : vector<1x8xbf16>, vector<1x8xbf16> -> vector<2x8xbf16>
    %212 = tpu.concatenate %208, %205, %211 in 1 : vector<2x8xbf16>, vector<2x8xbf16>, vector<2x8xbf16> -> vector<2x24xbf16>
    %c0_98 = arith.constant 0 : index
    %c0_99 = arith.constant 0 : index
    %213 = vector.load %arg22[%c0_98, %c0_99] : memref<24x2xbf16, #tpu.memory_space<vmem>>, vector<24x2xbf16>
    %cst_100 = arith.constant dense<0.000000e+00> : vector<2x2xf32>
    %214 = tpu.matmul %212, %213, %cst_100 {dimension_numbers = #tpu.dot_dimension_numbers<[1], [0], [0], [1], [0, 0, 1, 1], [], []>} : vector<2x24xbf16>, vector<24x2xbf16>, vector<2x2xf32> -> vector<2x2xf32>
    %215 = vector.extract_strided_slice %0 {offsets = [12, 0], sizes = [1, 2], strides = [1, 1]} : vector<16x128xf32> to vector<1x2xf32>
    %216 = vector.broadcast %215 : vector<1x2xf32> to vector<2x2xf32>
    %217 = arith.addf %214, %216 : vector<2x2xf32>
    %218 = math.tanh %217 : vector<2x2xf32>
    %c0_101 = arith.constant 0 : index
    %c0_102 = arith.constant 0 : index
    %c0_103 = arith.constant 0 : index
    %219 = vector.load %arg24[%c0_101, %c0_102, %c0_103] : memref<1x2x2xf32, #tpu.memory_space<vmem>>, vector<1x2x2xf32>
    %220 = vector.shape_cast %219 : vector<1x2x2xf32> to vector<2x2xf32>
    %221 = vector.shape_cast %218 : vector<2x2xf32> to vector<1x2x2xf32>
    tpu.vector_store %arg24[%c0_101, %c0_102, %c0_103], %221 {strides = array<i32>} : memref<1x2x2xf32, #tpu.memory_space<vmem>>, vector<1x2x2xf32>,
    return
  }
  func.func @transform_0(%arg0: i32) -> (i32, i32, i32) {
    %c0_i32 = arith.constant 0 : i32
    %c0_i32_0 = arith.constant 0 : i32
    %c0_i32_1 = arith.constant 0 : i32
    return %arg0, %c0_i32, %c0_i32_0 : i32, i32, i32
  }
  func.func @transform_1(%arg0: i32) -> (i32, i32) {
    %c0_i32 = arith.constant 0 : i32
    %c0_i32_0 = arith.constant 0 : i32
    %c0_i32_1 = arith.constant 0 : i32
    return %c0_i32, %c0_i32_0 : i32, i32
  }
  func.func @transform_2(%arg0: i32) -> (i32, i32) {
    %c0_i32 = arith.constant 0 : i32
    %c0_i32_0 = arith.constant 0 : i32
    %c0_i32_1 = arith.constant 0 : i32
    return %c0_i32, %c0_i32_0 : i32, i32
  }
  func.func @transform_3(%arg0: i32) -> (i32, i32) {
    %c0_i32 = arith.constant 0 : i32
    %c0_i32_0 = arith.constant 0 : i32
    %c0_i32_1 = arith.constant 0 : i32
    return %c0_i32, %c0_i32_0 : i32, i32
  }
  func.func @transform_4(%arg0: i32) -> (i32, i32) {
    %c0_i32 = arith.constant 0 : i32
    %c0_i32_0 = arith.constant 0 : i32
    %c0_i32_1 = arith.constant 0 : i32
    return %c0_i32, %c0_i32_0 : i32, i32
  }
  func.func @transform_5(%arg0: i32) -> (i32, i32) {
    %c0_i32 = arith.constant 0 : i32
    %c0_i32_0 = arith.constant 0 : i32
    %c0_i32_1 = arith.constant 0 : i32
    return %c0_i32, %c0_i32_0 : i32, i32
  }
  func.func @transform_6(%arg0: i32) -> (i32, i32) {
    %c0_i32 = arith.constant 0 : i32
    %c0_i32_0 = arith.constant 0 : i32
    %c0_i32_1 = arith.constant 0 : i32
    return %c0_i32, %c0_i32_0 : i32, i32
  }
  func.func @transform_7(%arg0: i32) -> (i32, i32) {
    %c0_i32 = arith.constant 0 : i32
    %c0_i32_0 = arith.constant 0 : i32
    %c0_i32_1 = arith.constant 0 : i32
    return %c0_i32, %c0_i32_0 : i32, i32
  }
  func.func @transform_8(%arg0: i32) -> (i32, i32) {
    %c0_i32 = arith.constant 0 : i32
    %c0_i32_0 = arith.constant 0 : i32
    %c0_i32_1 = arith.constant 0 : i32
    return %c0_i32, %c0_i32_0 : i32, i32
  }
  func.func @transform_9(%arg0: i32) -> (i32, i32) {
    %c0_i32 = arith.constant 0 : i32
    %c0_i32_0 = arith.constant 0 : i32
    %c0_i32_1 = arith.constant 0 : i32
    return %c0_i32, %c0_i32_0 : i32, i32
  }
  func.func @transform_10(%arg0: i32) -> (i32, i32) {
    %c0_i32 = arith.constant 0 : i32
    %c0_i32_0 = arith.constant 0 : i32
    %c0_i32_1 = arith.constant 0 : i32
    return %c0_i32, %c0_i32_0 : i32, i32
  }
  func.func @transform_11(%arg0: i32) -> (i32, i32) {
    %c0_i32 = arith.constant 0 : i32
    %c0_i32_0 = arith.constant 0 : i32
    %c0_i32_1 = arith.constant 0 : i32
    return %c0_i32, %c0_i32_0 : i32, i32
  }
  func.func @transform_12(%arg0: i32) -> (i32, i32) {
    %c0_i32 = arith.constant 0 : i32
    %c0_i32_0 = arith.constant 0 : i32
    %c0_i32_1 = arith.constant 0 : i32
    return %c0_i32, %c0_i32_0 : i32, i32
  }
  func.func @transform_13(%arg0: i32) -> (i32, i32) {
    %c0_i32 = arith.constant 0 : i32
    %c0_i32_0 = arith.constant 0 : i32
    %c0_i32_1 = arith.constant 0 : i32
    return %c0_i32, %c0_i32_0 : i32, i32
  }
  func.func @transform_14(%arg0: i32) -> (i32, i32) {
    %c0_i32 = arith.constant 0 : i32
    %c0_i32_0 = arith.constant 0 : i32
    %c0_i32_1 = arith.constant 0 : i32
    return %c0_i32, %c0_i32_0 : i32, i32
  }
  func.func @transform_15(%arg0: i32) -> (i32, i32) {
    %c0_i32 = arith.constant 0 : i32
    %c0_i32_0 = arith.constant 0 : i32
    %c0_i32_1 = arith.constant 0 : i32
    return %c0_i32, %c0_i32_0 : i32, i32
  }
  func.func @transform_16(%arg0: i32) -> (i32, i32) {
    %c0_i32 = arith.constant 0 : i32
    %c0_i32_0 = arith.constant 0 : i32
    %c0_i32_1 = arith.constant 0 : i32
    return %c0_i32, %c0_i32_0 : i32, i32
  }
  func.func @transform_17(%arg0: i32) -> (i32, i32) {
    %c0_i32 = arith.constant 0 : i32
    %c0_i32_0 = arith.constant 0 : i32
    %c0_i32_1 = arith.constant 0 : i32
    return %c0_i32, %c0_i32_0 : i32, i32
  }
  func.func @transform_18(%arg0: i32) -> (i32, i32) {
    %c0_i32 = arith.constant 0 : i32
    %c0_i32_0 = arith.constant 0 : i32
    %c0_i32_1 = arith.constant 0 : i32
    return %c0_i32, %c0_i32_0 : i32, i32
  }
  func.func @transform_19(%arg0: i32) -> (i32, i32) {
    %c0_i32 = arith.constant 0 : i32
    %c0_i32_0 = arith.constant 0 : i32
    %c0_i32_1 = arith.constant 0 : i32
    return %c0_i32, %c0_i32_0 : i32, i32
  }
  func.func @transform_20(%arg0: i32) -> (i32, i32) {
    %c0_i32 = arith.constant 0 : i32
    %c0_i32_0 = arith.constant 0 : i32
    %c0_i32_1 = arith.constant 0 : i32
    return %c0_i32, %c0_i32_0 : i32, i32
  }
  func.func @transform_21(%arg0: i32) -> (i32, i32) {
    %c0_i32 = arith.constant 0 : i32
    %c0_i32_0 = arith.constant 0 : i32
    %c0_i32_1 = arith.constant 0 : i32
    return %c0_i32, %c0_i32_0 : i32, i32
  }
  func.func @transform_22(%arg0: i32) -> (i32, i32, i32) {
    %c0_i32 = arith.constant 0 : i32
    %c0_i32_0 = arith.constant 0 : i32
    %c0_i32_1 = arith.constant 0 : i32
    return %arg0, %c0_i32, %c0_i32_0 : i32, i32, i32
  }
  func.func @transform_23(%arg0: i32) -> (i32, i32, i32) {
    %c0_i32 = arith.constant 0 : i32
    %c0_i32_0 = arith.constant 0 : i32
    %c0_i32_1 = arith.constant 0 : i32
    return %arg0, %c0_i32, %c0_i32_0 : i32, i32, i32
  }
}

</mosaic_0001>

<llo_original>
// kernel: tile.72
$region0: #{tile.72}
  #allocation0 [shape = 's32[1]{0}', space=sflag, size = 0x4, scoped, tag = 'scoped memory for tile.72']
  %s0 = inlined_call_operand.vmem [shape: f32[8], index: 0, kind: input, shape index: {}]
  %s1 = inlined_call_operand.vmem [shape: f32[16,8], index: 1, kind: output, shape index: {}]
  // Predicated region
  $region2: #{tile.72} parent=0 // pred_check
    _
  $region3: #{tile.72} parent=0 // pred_check_branch
    %3 = sbr.rel (0) target = $region5
  $region4: #{tile.72} parent=0 // pred_region
    _
  $region5: #{tile.72} parent=0 // pred_fallthru
    _
  %v4 = vld [vmem:[%s0] ss:$0 sm:$0xff]
  %5 = vst [vmem:[%s1] sm:$0xff] %v4
  %s6 = scalar_lea.vmem %s1, 8
  %7 = vst [vmem:[%s6] sm:$0xff] %v4

// kernel: tile.87
$region0: #{tile.87}
  #allocation0 [shape = 's32[1]{0}', space=sflag, size = 0x4, scoped, tag = 'scoped memory for tile.87']
  %s0 = inlined_call_operand.vmem [shape: f32[16], index: 0, kind: input, shape index: {}]
  %s1 = inlined_call_operand.vmem [shape: f32[8,16], index: 1, kind: output, shape index: {}]
  // Predicated region
  $region2: #{tile.87} parent=0 // pred_check
    _
  $region3: #{tile.87} parent=0 // pred_check_branch
    %3 = sbr.rel (0) target = $region5
  $region4: #{tile.87} parent=0 // pred_region
    _
  $region5: #{tile.87} parent=0 // pred_fallthru
    _
  %v4 = vld [vmem:[%s0] ss:$0 sm:$0xff]
  %5 = vst [vmem:[%s1] sm:$0xff] %v4

// kernel: tile.102
$region0: #{tile.102}
  #allocation0 [shape = 's32[1]{0}', space=sflag, size = 0x4, scoped, tag = 'scoped memory for tile.102']
  %s0 = inlined_call_operand.vmem [shape: f32[32], index: 0, kind: input, shape index: {}]
  %s1 = inlined_call_operand.vmem [shape: f32[4,32], index: 1, kind: output, shape index: {}]
  // Predicated region
  $region2: #{tile.102} parent=0 // pred_check
    _
  $region3: #{tile.102} parent=0 // pred_check_branch
    %3 = sbr.rel (0) target = $region5
  $region4: #{tile.102} parent=0 // pred_region
    _
  $region5: #{tile.102} parent=0 // pred_fallthru
    _
  %v4 = vld [vmem:[%s0] ss:$0 sm:$0xff]
  %5 = vst [vmem:[%s1] sm:$0xf] %v4

// kernel: tile.117
$region0: #{tile.117}
  #allocation0 [shape = 's32[1]{0}', space=sflag, size = 0x4, scoped, tag = 'scoped memory for tile.117']
  %s0 = inlined_call_operand.vmem [shape: f32[4], index: 0, kind: input, shape index: {}]
  %s1 = inlined_call_operand.vmem [shape: f32[2,4], index: 1, kind: output, shape index: {}]
  // Predicated region
  $region2: #{tile.117} parent=0 // pred_check
    _
  $region3: #{tile.117} parent=0 // pred_check_branch
    %3 = sbr.rel (0) target = $region5
  $region4: #{tile.117} parent=0 // pred_region
    _
  $region5: #{tile.117} parent=0 // pred_fallthru
    _
  %v4 = vld [vmem:[%s0] ss:$0 sm:$0xff]
  %5 = vst [vmem:[%s1] sm:$0x3] %v4

// kernel: tile.136
$region0: #{tile.136}
  #allocation0 [shape = 's32[1]{0}', space=sflag, size = 0x4, scoped, tag = 'scoped memory for tile.136']
  %s0 = inlined_call_operand.vmem [shape: f32[32], index: 0, kind: input, shape index: {}]
  %s1 = inlined_call_operand.vmem [shape: f32[2,32], index: 1, kind: output, shape index: {}]
  // Predicated region
  $region2: #{tile.136} parent=0 // pred_check
    _
  $region3: #{tile.136} parent=0 // pred_check_branch
    %3 = sbr.rel (0) target = $region5
  $region4: #{tile.136} parent=0 // pred_region
    _
  $region5: #{tile.136} parent=0 // pred_fallthru
    _
  %v4 = vld [vmem:[%s0] ss:$0 sm:$0xff]
  %5 = vst [vmem:[%s1] sm:$0x3] %v4

// kernel: tile.137
$region0: #{tile.137}
  %s0 = inlined_call_operand.vmem [shape: f32[2,32], index: 0, kind: input, shape index: {}]
  %s1 = inlined_call_operand.vmem [shape: f32[1,64], index: 1, kind: output, shape index: {}]
  $region1: #{tile.137} parent=0
    #allocation0 [shape = 'u8[4096]{0}', space=vmem, size = 0x1000, scoped, tag = 'scoped mem for output reshape']
    #allocation1 [shape = 'u8[4096]{0}', space=vmem, size = 0x1000, scoped, tag = 'scoped mem for input reshape']
    %s3 = sshll.u32 1, 2
    %s4 = ssub.s32 %s3, 1
    %v5 = vld [vmem:[%s0] sm:%s4]
    %6 = vst [vmem:[#allocation1] sm:%s4] %v5
    %v7 = vld [vmem:[#allocation1] sm:$0x1]
    %vm8 = vcmask 261120
    %9 = vst.msk [vmem:[#allocation0] sm:$0x1] %vm8, %v7
    %s10 = scalar_lea.vmem [#allocation1], 1
    %v11 = vld [vmem:[%s10] sm:$0x1]
    %12 = vrot.lane.b32.xlu0 %v11, 32
    %v13 = vpop.permute.xlu0 %12
    %vm14 = vcmask 523520
    %15 = vst.msk [vmem:[#allocation0] sm:$0x1] %vm14, %v13
    %s17 = sshll.u32 1, 1
    %s18 = ssub.s32 %s17, 1
    %v20 = vld [vmem:[#allocation0] sm:%s18]
    %s21 = sshll.u32 1, 1
    %s22 = ssub.s32 %s21, 1
    %23 = vst [vmem:[%s1] sm:%s22] %v20

// kernel: discriminator_forward.1
$region0: #{discriminator_forward.1}
  #allocation0 [shape = 'u32[]', space=smem, size = 0x4, offset = 0x4, fixed_abs, tag = 'smem constant byte address 0x4 - core index']
  #allocation1 [shape = 'u32[144,128]{1,0:T(1,128)}', space=vmem, size = 0x12000, scoped, tag = 'internal scratch']
  %s0 = inlined_call_operand.vmem [shape: bf16[2,16,48], index: 0, kind: input, shape index: {}]
  %s1 = inlined_call_operand.vmem [shape: f32[16,128], index: 1, kind: input, shape index: {}]
  %s2 = inlined_call_operand.vmem [shape: bf16[144,128], index: 2, kind: input, shape index: {}]
  %s3 = inlined_call_operand.vmem [shape: bf16[384,128], index: 3, kind: input, shape index: {}]
  %s4 = inlined_call_operand.vmem [shape: bf16[48,128], index: 4, kind: input, shape index: {}]
  %s5 = inlined_call_operand.vmem [shape: bf16[8,16], index: 5, kind: input, shape index: {}]
  %s6 = inlined_call_operand.vmem [shape: bf16[128,64], index: 6, kind: input, shape index: {}]
  %s7 = inlined_call_operand.vmem [shape: bf16[192,128], index: 7, kind: input, shape index: {}]
  %s8 = inlined_call_operand.vmem [shape: bf16[384,128], index: 8, kind: input, shape index: {}]
  %s9 = inlined_call_operand.vmem [shape: bf16[64,128], index: 9, kind: input, shape index: {}]
  %s10 = inlined_call_operand.vmem [shape: bf16[4,8], index: 10, kind: input, shape index: {}]
  %s11 = inlined_call_operand.vmem [shape: bf16[128,64], index: 11, kind: input, shape index: {}]
  %s12 = inlined_call_operand.vmem [shape: bf16[192,128], index: 12, kind: input, shape index: {}]
  %s13 = inlined_call_operand.vmem [shape: bf16[384,128], index: 13, kind: input, shape index: {}]
  %s14 = inlined_call_operand.vmem [shape: bf16[64,128], index: 14, kind: input, shape index: {}]
  %s15 = inlined_call_operand.vmem [shape: bf16[2,4], index: 15, kind: input, shape index: {}]
  %s16 = inlined_call_operand.vmem [shape: bf16[128,64], index: 16, kind: input, shape index: {}]
  %s17 = inlined_call_operand.vmem [shape: f32[1,64], index: 17, kind: input, shape index: {}]
  %s18 = inlined_call_operand.vmem [shape: bf16[192,8], index: 18, kind: input, shape index: {}]
  %s19 = inlined_call_operand.vmem [shape: bf16[24,8], index: 19, kind: input, shape index: {}]
  %s20 = inlined_call_operand.vmem [shape: bf16[64,8], index: 20, kind: input, shape index: {}]
  %s21 = inlined_call_operand.vmem [shape: bf16[24,2], index: 21, kind: input, shape index: {}]
  %s22 = inlined_call_operand.vmem [shape: f32[2,1,128], index: 22, kind: output, shape index: {0}]
  %s23 = inlined_call_operand.hbm [shape: f32[2,2,2], index: 23, kind: output, shape index: {1}]
  %24 = xla_tuple %s22, %s23
  %s25 = sld [smem:[#allocation0]]
  $region129: #{discriminator_forward.1} parent=0
    _
  %s27 = ssub.s32 1, %s25
  %s28 = scalar_select 0, %s27, %s25
  $region1: #{discriminator_forward.1} parent=0
    #allocation2 [shape = 'u8[2048]{0}', space=vmem, size = 0x800, scoped, tag = 'output window, operand 1']
    #allocation3 [shape = 's32[2]{0}', space=sflag, size = 0x8, scoped, tag = 'scoped memory for discriminator_forward.1']
    %29 = vsyncpa [#allocation3], 0
    %s30 = scalar_lea.sflag [#allocation3], 1
    %31 = vsyncpa %s30, 0
    loop: start=0, step=1, limit=4
    $region2: #{discriminator_forward.1} parent=1 // loop_pre_header
      _
    $region3: #{discriminator_forward.1} parent=1 // loop_header
      %s33 = sphi 0, %s37
      %p34 = scmp.ge.s32.totalorder %s33, 4
      %s43 = sphi 0, %s45
      %s46 = sphi 0, %s43
      %s47 = sphi 0, %s46
      %s63 = sphi 0, %s47
      %s67 = sphi 0, %s67
      %s69 = sphi 0, %s67
      %s70 = sphi 0, %s69
      %s84 = sphi 0, %s70
      %s88 = sphi 0, %s88
      %s90 = sphi 0, %s88
      %s91 = sphi 0, %s90
      %s105 = sphi 0, %s91
      %s109 = sphi 0, %s109
      %s111 = sphi 0, %s109
      %s112 = sphi 0, %s111
      %s126 = sphi 0, %s112
      %s130 = sphi 0, %s130
      %s132 = sphi 0, %s130
      %s133 = sphi 0, %s132
      %s147 = sphi 0, %s133
      %s151 = sphi 0, %s151
      %s153 = sphi 0, %s151
      %s154 = sphi 0, %s153
      %s168 = sphi 0, %s154
      %s172 = sphi 0, %s172
      %s174 = sphi 0, %s172
      %s175 = sphi 0, %s174
      %s189 = sphi 0, %s175
      %s193 = sphi 0, %s193
      %s195 = sphi 0, %s193
      %s196 = sphi 0, %s195
      %s210 = sphi 0, %s196
      %s214 = sphi 0, %s214
      %s216 = sphi 0, %s214
      %s217 = sphi 0, %s216
      %s231 = sphi 0, %s217
      %s235 = sphi 0, %s235
      %s237 = sphi 0, %s235
      %s238 = sphi 0, %s237
      %s252 = sphi 0, %s238
      %s256 = sphi 0, %s256
      %s258 = sphi 0, %s256
      %s259 = sphi 0, %s258
      %s273 = sphi 0, %s259
      %s277 = sphi 0, %s277
      %s279 = sphi 0, %s277
      %s280 = sphi 0, %s279
      %s294 = sphi 0, %s280
      %s298 = sphi 0, %s298
      %s300 = sphi 0, %s298
      %s301 = sphi 0, %s300
      %s315 = sphi 0, %s301
      %s319 = sphi 0, %s319
      %s321 = sphi 0, %s319
      %s322 = sphi 0, %s321
      %s336 = sphi 0, %s322
      %s340 = sphi 0, %s340
      %s342 = sphi 0, %s340
      %s343 = sphi 0, %s342
      %s357 = sphi 0, %s343
      %s361 = sphi 0, %s361
      %s363 = sphi 0, %s361
      %s364 = sphi 0, %s363
      %s378 = sphi 0, %s364
      %s382 = sphi 0, %s382
      %s384 = sphi 0, %s382
      %s385 = sphi 0, %s384
      %s399 = sphi 0, %s385
      %s403 = sphi 0, %s403
      %s405 = sphi 0, %s403
      %s406 = sphi 0, %s405
      %s420 = sphi 0, %s406
      %s424 = sphi 0, %s424
      %s426 = sphi 0, %s424
      %s427 = sphi 0, %s426
      %s441 = sphi 0, %s427
      %s445 = sphi 0, %s445
      %s447 = sphi 0, %s445
      %s448 = sphi 0, %s447
      %s462 = sphi 0, %s448
      %s466 = sphi 0, %s466
      %s468 = sphi 0, %s466
      %s469 = sphi 0, %s468
      %s483 = sphi 0, %s469
      %s487 = sphi 0, %s487
      %s489 = sphi 0, %s487
      %s490 = sphi 0, %s489
      %s504 = sphi 0, %s490
      %s510 = sphi 0, %s512
      %s513 = sphi 0, %s510
      %s514 = sphi 0, %s513
      %s530 = sphi 0, %s514
      %s536 = sphi 0, %s538
      %s539 = sphi 0, %s536
      %s540 = sphi 0, %s539
      %s556 = sphi 0, %s540
    $region4: #{discriminator_forward.1} parent=1 // loop_header_branch
      %36 = sbr.rel (%p34) target = $region8
    $region5: #{discriminator_forward.1} parent=1 // loop_body
      %s38 = ssub.s32 %s33, 1
      %s39 = ssub.s32 %s33, 2
      %s40 = sadd.s32 %s33, 1
      %s41 = ssub.s32 %s33, %s40
      %p42 = scmp.eq.s32.totalorder %s41, 0
      %s44 = sadd.s32 %s43, 1
      %s45 = scalar_select %p42, %s43, %s44
      %p48 = pneg %p42
      %p49 = scmp.eq.s32.totalorder %s33, 1
      %p50 = por %p48, %p49
      %p51 = scmp.ne.s32.totalorder %s43, %s46
      %p52 = scmp.eq.s32.totalorder %s33, 0
      %p53 = por %p51, %p52
      %p54 = scmp.ne.s32.totalorder %s43, %s46
      %p55 = scmp.eq.s32.totalorder %s38, 1
      %p56 = por %p54, %p55
      %p57 = scmp.ne.s32.totalorder %s46, %s47
      %p58 = scmp.eq.s32.totalorder %s38, 0
      %p59 = por %p57, %p58
      %p60 = scmp.ne.s32.totalorder %s46, %s47
      %p61 = scmp.eq.s32.totalorder %s39, 1
      %p62 = por %p60, %p61
      %p64 = scmp.ne.s32.totalorder %s47, %s63
      %p65 = scmp.eq.s32.totalorder %s39, 0
      %p66 = por %p64, %p65
      %s68 = sadd.s32 %s67, 1
      %p71 = scmp.eq.s32.totalorder %s33, 1
      %p72 = scmp.ne.s32.totalorder %s67, %s69
      %p73 = scmp.eq.s32.totalorder %s33, 0
      %p74 = por %p72, %p73
      %p75 = scmp.ne.s32.totalorder %s67, %s69
      %p76 = scmp.eq.s32.totalorder %s38, 1
      %p77 = por %p75, %p76
      %p78 = scmp.ne.s32.totalorder %s69, %s70
      %p79 = scmp.eq.s32.totalorder %s38, 0
      %p80 = por %p78, %p79
      %p81 = scmp.ne.s32.totalorder %s69, %s70
      %p82 = scmp.eq.s32.totalorder %s39, 1
      %p83 = por %p81, %p82
      %p85 = scmp.ne.s32.totalorder %s70, %s84
      %p86 = scmp.eq.s32.totalorder %s39, 0
      %p87 = por %p85, %p86
      %s89 = sadd.s32 %s88, 1
      %p92 = scmp.eq.s32.totalorder %s33, 1
      %p93 = scmp.ne.s32.totalorder %s88, %s90
      %p94 = scmp.eq.s32.totalorder %s33, 0
      %p95 = por %p93, %p94
      %p96 = scmp.ne.s32.totalorder %s88, %s90
      %p97 = scmp.eq.s32.totalorder %s38, 1
      %p98 = por %p96, %p97
      %p99 = scmp.ne.s32.totalorder %s90, %s91
      %p100 = scmp.eq.s32.totalorder %s38, 0
      %p101 = por %p99, %p100
      %p102 = scmp.ne.s32.totalorder %s90, %s91
      %p103 = scmp.eq.s32.totalorder %s39, 1
      %p104 = por %p102, %p103
      %p106 = scmp.ne.s32.totalorder %s91, %s105
      %p107 = scmp.eq.s32.totalorder %s39, 0
      %p108 = por %p106, %p107
      %s110 = sadd.s32 %s109, 1
      %p113 = scmp.eq.s32.totalorder %s33, 1
      %p114 = scmp.ne.s32.totalorder %s109, %s111
      %p115 = scmp.eq.s32.totalorder %s33, 0
      %p116 = por %p114, %p115
      %p117 = scmp.ne.s32.totalorder %s109, %s111
      %p118 = scmp.eq.s32.totalorder %s38, 1
      %p119 = por %p117, %p118
      %p120 = scmp.ne.s32.totalorder %s111, %s112
      %p121 = scmp.eq.s32.totalorder %s38, 0
      %p122 = por %p120, %p121
      %p123 = scmp.ne.s32.totalorder %s111, %s112
      %p124 = scmp.eq.s32.totalorder %s39, 1
      %p125 = por %p123, %p124
      %p127 = scmp.ne.s32.totalorder %s112, %s126
      %p128 = scmp.eq.s32.totalorder %s39, 0
      %p129 = por %p127, %p128
      %s131 = sadd.s32 %s130, 1
      %p134 = scmp.eq.s32.totalorder %s33, 1
      %p135 = scmp.ne.s32.totalorder %s130, %s132
      %p136 = scmp.eq.s32.totalorder %s33, 0
      %p137 = por %p135, %p136
      %p138 = scmp.ne.s32.totalorder %s130, %s132
      %p139 = scmp.eq.s32.totalorder %s38, 1
      %p140 = por %p138, %p139
      %p141 = scmp.ne.s32.totalorder %s132, %s133
      %p142 = scmp.eq.s32.totalorder %s38, 0
      %p143 = por %p141, %p142
      %p144 = scmp.ne.s32.totalorder %s132, %s133
      %p145 = scmp.eq.s32.totalorder %s39, 1
      %p146 = por %p144, %p145
      %p148 = scmp.ne.s32.totalorder %s133, %s147
      %p149 = scmp.eq.s32.totalorder %s39, 0
      %p150 = por %p148, %p149
      %s152 = sadd.s32 %s151, 1
      %p155 = scmp.eq.s32.totalorder %s33, 1
      %p156 = scmp.ne.s32.totalorder %s151, %s153
      %p157 = scmp.eq.s32.totalorder %s33, 0
      %p158 = por %p156, %p157
      %p159 = scmp.ne.s32.totalorder %s151, %s153
      %p160 = scmp.eq.s32.totalorder %s38, 1
      %p161 = por %p159, %p160
      %p162 = scmp.ne.s32.totalorder %s153, %s154
      %p163 = scmp.eq.s32.totalorder %s38, 0
      %p164 = por %p162, %p163
      %p165 = scmp.ne.s32.totalorder %s153, %s154
      %p166 = scmp.eq.s32.totalorder %s39, 1
      %p167 = por %p165, %p166
      %p169 = scmp.ne.s32.totalorder %s154, %s168
      %p170 = scmp.eq.s32.totalorder %s39, 0
      %p171 = por %p169, %p170
      %s173 = sadd.s32 %s172, 1
      %p176 = scmp.eq.s32.totalorder %s33, 1
      %p177 = scmp.ne.s32.totalorder %s172, %s174
      %p178 = scmp.eq.s32.totalorder %s33, 0
      %p179 = por %p177, %p178
      %p180 = scmp.ne.s32.totalorder %s172, %s174
      %p181 = scmp.eq.s32.totalorder %s38, 1
      %p182 = por %p180, %p181
      %p183 = scmp.ne.s32.totalorder %s174, %s175
      %p184 = scmp.eq.s32.totalorder %s38, 0
      %p185 = por %p183, %p184
      %p186 = scmp.ne.s32.totalorder %s174, %s175
      %p187 = scmp.eq.s32.totalorder %s39, 1
      %p188 = por %p186, %p187
      %p190 = scmp.ne.s32.totalorder %s175, %s189
      %p191 = scmp.eq.s32.totalorder %s39, 0
      %p192 = por %p190, %p191
      %s194 = sadd.s32 %s193, 1
      %p197 = scmp.eq.s32.totalorder %s33, 1
      %p198 = scmp.ne.s32.totalorder %s193, %s195
      %p199 = scmp.eq.s32.totalorder %s33, 0
      %p200 = por %p198, %p199
      %p201 = scmp.ne.s32.totalorder %s193, %s195
      %p202 = scmp.eq.s32.totalorder %s38, 1
      %p203 = por %p201, %p202
      %p204 = scmp.ne.s32.totalorder %s195, %s196
      %p205 = scmp.eq.s32.totalorder %s38, 0
      %p206 = por %p204, %p205
      %p207 = scmp.ne.s32.totalorder %s195, %s196
      %p208 = scmp.eq.s32.totalorder %s39, 1
      %p209 = por %p207, %p208
      %p211 = scmp.ne.s32.totalorder %s196, %s210
      %p212 = scmp.eq.s32.totalorder %s39, 0
      %p213 = por %p211, %p212
      %s215 = sadd.s32 %s214, 1
      %p218 = scmp.eq.s32.totalorder %s33, 1
      %p219 = scmp.ne.s32.totalorder %s214, %s216
      %p220 = scmp.eq.s32.totalorder %s33, 0
      %p221 = por %p219, %p220
      %p222 = scmp.ne.s32.totalorder %s214, %s216
      %p223 = scmp.eq.s32.totalorder %s38, 1
      %p224 = por %p222, %p223
      %p225 = scmp.ne.s32.totalorder %s216, %s217
      %p226 = scmp.eq.s32.totalorder %s38, 0
      %p227 = por %p225, %p226
      %p228 = scmp.ne.s32.totalorder %s216, %s217
      %p229 = scmp.eq.s32.totalorder %s39, 1
      %p230 = por %p228, %p229
      %p232 = scmp.ne.s32.totalorder %s217, %s231
      %p233 = scmp.eq.s32.totalorder %s39, 0
      %p234 = por %p232, %p233
      %s236 = sadd.s32 %s235, 1
      %p239 = scmp.eq.s32.totalorder %s33, 1
      %p240 = scmp.ne.s32.totalorder %s235, %s237
      %p241 = scmp.eq.s32.totalorder %s33, 0
      %p242 = por %p240, %p241
      %p243 = scmp.ne.s32.totalorder %s235, %s237
      %p244 = scmp.eq.s32.totalorder %s38, 1
      %p245 = por %p243, %p244
      %p246 = scmp.ne.s32.totalorder %s237, %s238
      %p247 = scmp.eq.s32.totalorder %s38, 0
      %p248 = por %p246, %p247
      %p249 = scmp.ne.s32.totalorder %s237, %s238
      %p250 = scmp.eq.s32.totalorder %s39, 1
      %p251 = por %p249, %p250
      %p253 = scmp.ne.s32.totalorder %s238, %s252
      %p254 = scmp.eq.s32.totalorder %s39, 0
      %p255 = por %p253, %p254
      %s257 = sadd.s32 %s256, 1
      %p260 = scmp.eq.s32.totalorder %s33, 1
      %p261 = scmp.ne.s32.totalorder %s256, %s258
      %p262 = scmp.eq.s32.totalorder %s33, 0
      %p263 = por %p261, %p262
      %p264 = scmp.ne.s32.totalorder %s256, %s258
      %p265 = scmp.eq.s32.totalorder %s38, 1
      %p266 = por %p264, %p265
      %p267 = scmp.ne.s32.totalorder %s258, %s259
      %p268 = scmp.eq.s32.totalorder %s38, 0
      %p269 = por %p267, %p268
      %p270 = scmp.ne.s32.totalorder %s258, %s259
      %p271 = scmp.eq.s32.totalorder %s39, 1
      %p272 = por %p270, %p271
      %p274 = scmp.ne.s32.totalorder %s259, %s273
      %p275 = scmp.eq.s32.totalorder %s39, 0
      %p276 = por %p274, %p275
      %s278 = sadd.s32 %s277, 1
      %p281 = scmp.eq.s32.totalorder %s33, 1
      %p282 = scmp.ne.s32.totalorder %s277, %s279
      %p283 = scmp.eq.s32.totalorder %s33, 0
      %p284 = por %p282, %p283
      %p285 = scmp.ne.s32.totalorder %s277, %s279
      %p286 = scmp.eq.s32.totalorder %s38, 1
      %p287 = por %p285, %p286
      %p288 = scmp.ne.s32.totalorder %s279, %s280
      %p289 = scmp.eq.s32.totalorder %s38, 0
      %p290 = por %p288, %p289
      %p291 = scmp.ne.s32.totalorder %s279, %s280
      %p292 = scmp.eq.s32.totalorder %s39, 1
      %p293 = por %p291, %p292
      %p295 = scmp.ne.s32.totalorder %s280, %s294
      %p296 = scmp.eq.s32.totalorder %s39, 0
      %p297 = por %p295, %p296
      %s299 = sadd.s32 %s298, 1
      %p302 = scmp.eq.s32.totalorder %s33, 1
      %p303 = scmp.ne.s32.totalorder %s298, %s300
      %p304 = scmp.eq.s32.totalorder %s33, 0
      %p305 = por %p303, %p304
      %p306 = scmp.ne.s32.totalorder %s298, %s300
      %p307 = scmp.eq.s32.totalorder %s38, 1
      %p308 = por %p306, %p307
      %p309 = scmp.ne.s32.totalorder %s300, %s301
      %p310 = scmp.eq.s32.totalorder %s38, 0
      %p311 = por %p309, %p310
      %p312 = scmp.ne.s32.totalorder %s300, %s301
      %p313 = scmp.eq.s32.totalorder %s39, 1
      %p314 = por %p312, %p313
      %p316 = scmp.ne.s32.totalorder %s301, %s315
      %p317 = scmp.eq.s32.totalorder %s39, 0
      %p318 = por %p316, %p317
      %s320 = sadd.s32 %s319, 1
      %p323 = scmp.eq.s32.totalorder %s33, 1
      %p324 = scmp.ne.s32.totalorder %s319, %s321
      %p325 = scmp.eq.s32.totalorder %s33, 0
      %p326 = por %p324, %p325
      %p327 = scmp.ne.s32.totalorder %s319, %s321
      %p328 = scmp.eq.s32.totalorder %s38, 1
      %p329 = por %p327, %p328
      %p330 = scmp.ne.s32.totalorder %s321, %s322
      %p331 = scmp.eq.s32.totalorder %s38, 0
      %p332 = por %p330, %p331
      %p333 = scmp.ne.s32.totalorder %s321, %s322
      %p334 = scmp.eq.s32.totalorder %s39, 1
      %p335 = por %p333, %p334
      %p337 = scmp.ne.s32.totalorder %s322, %s336
      %p338 = scmp.eq.s32.totalorder %s39, 0
      %p339 = por %p337, %p338
      %s341 = sadd.s32 %s340, 1
      %p344 = scmp.eq.s32.totalorder %s33, 1
      %p345 = scmp.ne.s32.totalorder %s340, %s342
      %p346 = scmp.eq.s32.totalorder %s33, 0
      %p347 = por %p345, %p346
      %p348 = scmp.ne.s32.totalorder %s340, %s342
      %p349 = scmp.eq.s32.totalorder %s38, 1
      %p350 = por %p348, %p349
      %p351 = scmp.ne.s32.totalorder %s342, %s343
      %p352 = scmp.eq.s32.totalorder %s38, 0
      %p353 = por %p351, %p352
      %p354 = scmp.ne.s32.totalorder %s342, %s343
      %p355 = scmp.eq.s32.totalorder %s39, 1
      %p356 = por %p354, %p355
      %p358 = scmp.ne.s32.totalorder %s343, %s357
      %p359 = scmp.eq.s32.totalorder %s39, 0
      %p360 = por %p358, %p359
      %s362 = sadd.s32 %s361, 1
      %p365 = scmp.eq.s32.totalorder %s33, 1
      %p366 = scmp.ne.s32.totalorder %s361, %s363
      %p367 = scmp.eq.s32.totalorder %s33, 0
      %p368 = por %p366, %p367
      %p369 = scmp.ne.s32.totalorder %s361, %s363
      %p370 = scmp.eq.s32.totalorder %s38, 1
      %p371 = por %p369, %p370
      %p372 = scmp.ne.s32.totalorder %s363, %s364
      %p373 = scmp.eq.s32.totalorder %s38, 0
      %p374 = por %p372, %p373
      %p375 = scmp.ne.s32.totalorder %s363, %s364
      %p376 = scmp.eq.s32.totalorder %s39, 1
      %p377 = por %p375, %p376
      %p379 = scmp.ne.s32.totalorder %s364, %s378
      %p380 = scmp.eq.s32.totalorder %s39, 0
      %p381 = por %p379, %p380
      %s383 = sadd.s32 %s382, 1
      %p386 = scmp.eq.s32.totalorder %s33, 1
      %p387 = scmp.ne.s32.totalorder %s382, %s384
      %p388 = scmp.eq.s32.totalorder %s33, 0
      %p389 = por %p387, %p388
      %p390 = scmp.ne.s32.totalorder %s382, %s384
      %p391 = scmp.eq.s32.totalorder %s38, 1
      %p392 = por %p390, %p391
      %p393 = scmp.ne.s32.totalorder %s384, %s385
      %p394 = scmp.eq.s32.totalorder %s38, 0
      %p395 = por %p393, %p394
      %p396 = scmp.ne.s32.totalorder %s384, %s385
      %p397 = scmp.eq.s32.totalorder %s39, 1
      %p398 = por %p396, %p397
      %p400 = scmp.ne.s32.totalorder %s385, %s399
      %p401 = scmp.eq.s32.totalorder %s39, 0
      %p402 = por %p400, %p401
      %s404 = sadd.s32 %s403, 1
      %p407 = scmp.eq.s32.totalorder %s33, 1
      %p408 = scmp.ne.s32.totalorder %s403, %s405
      %p409 = scmp.eq.s32.totalorder %s33, 0
      %p410 = por %p408, %p409
      %p411 = scmp.ne.s32.totalorder %s403, %s405
      %p412 = scmp.eq.s32.totalorder %s38, 1
      %p413 = por %p411, %p412
      %p414 = scmp.ne.s32.totalorder %s405, %s406
      %p415 = scmp.eq.s32.totalorder %s38, 0
      %p416 = por %p414, %p415
      %p417 = scmp.ne.s32.totalorder %s405, %s406
      %p418 = scmp.eq.s32.totalorder %s39, 1
      %p419 = por %p417, %p418
      %p421 = scmp.ne.s32.totalorder %s406, %s420
      %p422 = scmp.eq.s32.totalorder %s39, 0
      %p423 = por %p421, %p422
      %s425 = sadd.s32 %s424, 1
      %p428 = scmp.eq.s32.totalorder %s33, 1
      %p429 = scmp.ne.s32.totalorder %s424, %s426
      %p430 = scmp.eq.s32.totalorder %s33, 0
      %p431 = por %p429, %p430
      %p432 = scmp.ne.s32.totalorder %s424, %s426
      %p433 = scmp.eq.s32.totalorder %s38, 1
      %p434 = por %p432, %p433
      %p435 = scmp.ne.s32.totalorder %s426, %s427
      %p436 = scmp.eq.s32.totalorder %s38, 0
      %p437 = por %p435, %p436
      %p438 = scmp.ne.s32.totalorder %s426, %s427
      %p439 = scmp.eq.s32.totalorder %s39, 1
      %p440 = por %p438, %p439
      %p442 = scmp.ne.s32.totalorder %s427, %s441
      %p443 = scmp.eq.s32.totalorder %s39, 0
      %p444 = por %p442, %p443
      %s446 = sadd.s32 %s445, 1
      %p449 = scmp.eq.s32.totalorder %s33, 1
      %p450 = scmp.ne.s32.totalorder %s445, %s447
      %p451 = scmp.eq.s32.totalorder %s33, 0
      %p452 = por %p450, %p451
      %p453 = scmp.ne.s32.totalorder %s445, %s447
      %p454 = scmp.eq.s32.totalorder %s38, 1
      %p455 = por %p453, %p454
      %p456 = scmp.ne.s32.totalorder %s447, %s448
      %p457 = scmp.eq.s32.totalorder %s38, 0
      %p458 = por %p456, %p457
      %p459 = scmp.ne.s32.totalorder %s447, %s448
      %p460 = scmp.eq.s32.totalorder %s39, 1
      %p461 = por %p459, %p460
      %p463 = scmp.ne.s32.totalorder %s448, %s462
      %p464 = scmp.eq.s32.totalorder %s39, 0
      %p465 = por %p463, %p464
      %s467 = sadd.s32 %s466, 1
      %p470 = scmp.eq.s32.totalorder %s33, 1
      %p471 = scmp.ne.s32.totalorder %s466, %s468
      %p472 = scmp.eq.s32.totalorder %s33, 0
      %p473 = por %p471, %p472
      %p474 = scmp.ne.s32.totalorder %s466, %s468
      %p475 = scmp.eq.s32.totalorder %s38, 1
      %p476 = por %p474, %p475
      %p477 = scmp.ne.s32.totalorder %s468, %s469
      %p478 = scmp.eq.s32.totalorder %s38, 0
      %p479 = por %p477, %p478
      %p480 = scmp.ne.s32.totalorder %s468, %s469
      %p481 = scmp.eq.s32.totalorder %s39, 1
      %p482 = por %p480, %p481
      %p484 = scmp.ne.s32.totalorder %s469, %s483
      %p485 = scmp.eq.s32.totalorder %s39, 0
      %p486 = por %p484, %p485
      %s488 = sadd.s32 %s487, 1
      %p491 = scmp.eq.s32.totalorder %s33, 1
      %p492 = scmp.ne.s32.totalorder %s487, %s489
      %p493 = scmp.eq.s32.totalorder %s33, 0
      %p494 = por %p492, %p493
      %p495 = scmp.ne.s32.totalorder %s487, %s489
      %p496 = scmp.eq.s32.totalorder %s38, 1
      %p497 = por %p495, %p496
      %p498 = scmp.ne.s32.totalorder %s489, %s490
      %p499 = scmp.eq.s32.totalorder %s38, 0
      %p500 = por %p498, %p499
      %p501 = scmp.ne.s32.totalorder %s489, %s490
      %p502 = scmp.eq.s32.totalorder %s39, 1
      %p503 = por %p501, %p502
      %p505 = scmp.ne.s32.totalorder %s490, %s504
      %p506 = scmp.eq.s32.totalorder %s39, 0
      %p507 = por %p505, %p506
      %s508 = ssub.s32 %s33, %s40
      %p509 = scmp.eq.s32.totalorder %s508, 0
      %s511 = sadd.s32 %s510, 1
      %s512 = scalar_select %p509, %s510, %s511
      %p515 = pneg %p509
      %p516 = scmp.eq.s32.totalorder %s33, 1
      %p517 = por %p515, %p516
      %p518 = scmp.ne.s32.totalorder %s510, %s513
      %p519 = scmp.eq.s32.totalorder %s33, 0
      %p520 = por %p518, %p519
      %p521 = scmp.ne.s32.totalorder %s510, %s513
      %p522 = scmp.eq.s32.totalorder %s38, 1
      %p523 = por %p521, %p522
      %p524 = scmp.ne.s32.totalorder %s513, %s514
      %p525 = scmp.eq.s32.totalorder %s38, 0
      %p526 = por %p524, %p525
      %p527 = scmp.ne.s32.totalorder %s513, %s514
      %p528 = scmp.eq.s32.totalorder %s39, 1
      %p529 = por %p527, %p528
      %p531 = scmp.ne.s32.totalorder %s514, %s530
      %p532 = scmp.eq.s32.totalorder %s39, 0
      %p533 = por %p531, %p532
      %s534 = ssub.s32 %s33, %s40
      %p535 = scmp.eq.s32.totalorder %s534, 0
      %s537 = sadd.s32 %s536, 1
      %s538 = scalar_select %p535, %s536, %s537
      %p541 = pneg %p535
      %p542 = scmp.eq.s32.totalorder %s33, 1
      %p543 = por %p541, %p542
      %p544 = scmp.ne.s32.totalorder %s536, %s539
      %p545 = scmp.eq.s32.totalorder %s33, 0
      %p546 = por %p544, %p545
      %p547 = scmp.ne.s32.totalorder %s536, %s539
      %p548 = scmp.eq.s32.totalorder %s38, 1
      %p549 = por %p547, %p548
      %p550 = scmp.ne.s32.totalorder %s539, %s540
      %p551 = scmp.eq.s32.totalorder %s38, 0
      %p552 = por %p550, %p551
      %p553 = scmp.ne.s32.totalorder %s539, %s540
      %p554 = scmp.eq.s32.totalorder %s39, 1
      %p555 = por %p553, %p554
      %p557 = scmp.ne.s32.totalorder %s540, %s556
      %p558 = scmp.eq.s32.totalorder %s39, 0
      %p559 = por %p557, %p558
      %p560 = scmp.le.s32.totalorder 1, %s33
      %p561 = scmp.lt.s32.totalorder %s33, 3
      %p562 = pnand %p560, %p561
      %p563 = pneg %p562
      // Predicated region
      $region9: #{discriminator_forward.1} parent=5 // pred_check
        _
      $region10: #{discriminator_forward.1} parent=5 // pred_check_branch
        %565 = sbr.rel (%p562) target = $region12
      $region11: #{discriminator_forward.1} parent=5 // pred_region
        %s566 = ssub.s32 %s33, 1
        // Predicated region
        $region13: #{discriminator_forward.1} parent=11 // pred_check
          %p567 = pneg %p80
        $region14: #{discriminator_forward.1} parent=11 // pred_check_branch
          %569 = sbr.rel (%p567) target = $region16
        $region15: #{discriminator_forward.1} parent=11 // pred_region
          _
        $region16: #{discriminator_forward.1} parent=11 // pred_fallthru
          _
        // Predicated region
        $region17: #{discriminator_forward.1} parent=11 // pred_check
          %p570 = pneg %p101
        $region18: #{discriminator_forward.1} parent=11 // pred_check_branch
          %572 = sbr.rel (%p570) target = $region20
        $region19: #{discriminator_forward.1} parent=11 // pred_region
          _
        $region20: #{discriminator_forward.1} parent=11 // pred_fallthru
          _
        // Predicated region
        $region21: #{discriminator_forward.1} parent=11 // pred_check
          %p573 = pneg %p122
        $region22: #{discriminator_forward.1} parent=11 // pred_check_branch
          %575 = sbr.rel (%p573) target = $region24
        $region23: #{discriminator_forward.1} parent=11 // pred_region
          _
        $region24: #{discriminator_forward.1} parent=11 // pred_fallthru
          _
        // Predicated region
        $region25: #{discriminator_forward.1} parent=11 // pred_check
          %p576 = pneg %p143
        $region26: #{discriminator_forward.1} parent=11 // pred_check_branch
          %578 = sbr.rel (%p576) target = $region28
        $region27: #{discriminator_forward.1} parent=11 // pred_region
          _
        $region28: #{discriminator_forward.1} parent=11 // pred_fallthru
          _
        // Predicated region
        $region29: #{discriminator_forward.1} parent=11 // pred_check
          %p579 = pneg %p164
        $region30: #{discriminator_forward.1} parent=11 // pred_check_branch
          %581 = sbr.rel (%p579) target = $region32
        $region31: #{discriminator_forward.1} parent=11 // pred_region
          _
        $region32: #{discriminator_forward.1} parent=11 // pred_fallthru
          _
        // Predicated region
        $region33: #{discriminator_forward.1} parent=11 // pred_check
          %p582 = pneg %p185
        $region34: #{discriminator_forward.1} parent=11 // pred_check_branch
          %584 = sbr.rel (%p582) target = $region36
        $region35: #{discriminator_forward.1} parent=11 // pred_region
          _
        $region36: #{discriminator_forward.1} parent=11 // pred_fallthru
          _
        // Predicated region
        $region37: #{discriminator_forward.1} parent=11 // pred_check
          %p585 = pneg %p206
        $region38: #{discriminator_forward.1} parent=11 // pred_check_branch
          %587 = sbr.rel (%p585) target = $region40
        $region39: #{discriminator_forward.1} parent=11 // pred_region
          _
        $region40: #{discriminator_forward.1} parent=11 // pred_fallthru
          _
        // Predicated region
        $region41: #{discriminator_forward.1} parent=11 // pred_check
          %p588 = pneg %p227
        $region42: #{discriminator_forward.1} parent=11 // pred_check_branch
          %590 = sbr.rel (%p588) target = $region44
        $region43: #{discriminator_forward.1} parent=11 // pred_region
          _
        $region44: #{discriminator_forward.1} parent=11 // pred_fallthru
          _
        // Predicated region
        $region45: #{discriminator_forward.1} parent=11 // pred_check
          %p591 = pneg %p248
        $region46: #{discriminator_forward.1} parent=11 // pred_check_branch
          %593 = sbr.rel (%p591) target = $region48
        $region47: #{discriminator_forward.1} parent=11 // pred_region
          _
        $region48: #{discriminator_forward.1} parent=11 // pred_fallthru
          _
        // Predicated region
        $region49: #{discriminator_forward.1} parent=11 // pred_check
          %p594 = pneg %p269
        $region50: #{discriminator_forward.1} parent=11 // pred_check_branch
          %596 = sbr.rel (%p594) target = $region52
        $region51: #{discriminator_forward.1} parent=11 // pred_region
          _
        $region52: #{discriminator_forward.1} parent=11 // pred_fallthru
          _
        // Predicated region
        $region53: #{discriminator_forward.1} parent=11 // pred_check
          %p597 = pneg %p290
        $region54: #{discriminator_forward.1} parent=11 // pred_check_branch
          %599 = sbr.rel (%p597) target = $region56
        $region55: #{discriminator_forward.1} parent=11 // pred_region
          _
        $region56: #{discriminator_forward.1} parent=11 // pred_fallthru
          _
        // Predicated region
        $region57: #{discriminator_forward.1} parent=11 // pred_check
          %p600 = pneg %p311
        $region58: #{discriminator_forward.1} parent=11 // pred_check_branch
          %602 = sbr.rel (%p600) target = $region60
        $region59: #{discriminator_forward.1} parent=11 // pred_region
          _
        $region60: #{discriminator_forward.1} parent=11 // pred_fallthru
          _
        // Predicated region
        $region61: #{discriminator_forward.1} parent=11 // pred_check
          %p603 = pneg %p332
        $region62: #{discriminator_forward.1} parent=11 // pred_check_branch
          %605 = sbr.rel (%p603) target = $region64
        $region63: #{discriminator_forward.1} parent=11 // pred_region
          _
        $region64: #{discriminator_forward.1} parent=11 // pred_fallthru
          _
        // Predicated region
        $region65: #{discriminator_forward.1} parent=11 // pred_check
          %p606 = pneg %p353
        $region66: #{discriminator_forward.1} parent=11 // pred_check_branch
          %608 = sbr.rel (%p606) target = $region68
        $region67: #{discriminator_forward.1} parent=11 // pred_region
          _
        $region68: #{discriminator_forward.1} parent=11 // pred_fallthru
          _
        // Predicated region
        $region69: #{discriminator_forward.1} parent=11 // pred_check
          %p609 = pneg %p374
        $region70: #{discriminator_forward.1} parent=11 // pred_check_branch
          %611 = sbr.rel (%p609) target = $region72
        $region71: #{discriminator_forward.1} parent=11 // pred_region
          _
        $region72: #{discriminator_forward.1} parent=11 // pred_fallthru
          _
        // Predicated region
        $region73: #{discriminator_forward.1} parent=11 // pred_check
          %p612 = pneg %p395
        $region74: #{discriminator_forward.1} parent=11 // pred_check_branch
          %614 = sbr.rel (%p612) target = $region76
        $region75: #{discriminator_forward.1} parent=11 // pred_region
          _
        $region76: #{discriminator_forward.1} parent=11 // pred_fallthru
          _
        // Predicated region
        $region77: #{discriminator_forward.1} parent=11 // pred_check
          %p615 = pneg %p416
        $region78: #{discriminator_forward.1} parent=11 // pred_check_branch
          %617 = sbr.rel (%p615) target = $region80
        $region79: #{discriminator_forward.1} parent=11 // pred_region
          _
        $region80: #{discriminator_forward.1} parent=11 // pred_fallthru
          _
        // Predicated region
        $region81: #{discriminator_forward.1} parent=11 // pred_check
          %p618 = pneg %p437
        $region82: #{discriminator_forward.1} parent=11 // pred_check_branch
          %620 = sbr.rel (%p618) target = $region84
        $region83: #{discriminator_forward.1} parent=11 // pred_region
          _
        $region84: #{discriminator_forward.1} parent=11 // pred_fallthru
          _
        // Predicated region
        $region85: #{discriminator_forward.1} parent=11 // pred_check
          %p621 = pneg %p458
        $region86: #{discriminator_forward.1} parent=11 // pred_check_branch
          %623 = sbr.rel (%p621) target = $region88
        $region87: #{discriminator_forward.1} parent=11 // pred_region
          _
        $region88: #{discriminator_forward.1} parent=11 // pred_fallthru
          _
        // Predicated region
        $region89: #{discriminator_forward.1} parent=11 // pred_check
          %p624 = pneg %p479
        $region90: #{discriminator_forward.1} parent=11 // pred_check_branch
          %626 = sbr.rel (%p624) target = $region92
        $region91: #{discriminator_forward.1} parent=11 // pred_region
          _
        $region92: #{discriminator_forward.1} parent=11 // pred_fallthru
          _
        // Predicated region
        $region93: #{discriminator_forward.1} parent=11 // pred_check
          %p627 = pneg %p500
        $region94: #{discriminator_forward.1} parent=11 // pred_check_branch
          %629 = sbr.rel (%p627) target = $region96
        $region95: #{discriminator_forward.1} parent=11 // pred_region
          _
        $region96: #{discriminator_forward.1} parent=11 // pred_fallthru
          _
      $region12: #{discriminator_forward.1} parent=5 // pred_fallthru
        _
      %p630 = scmp.lt.s32.totalorder %s33, 2
      // Predicated region
      $region97: #{discriminator_forward.1} parent=5 // pred_check
        %p631 = pneg %p630
      $region98: #{discriminator_forward.1} parent=5 // pred_check_branch
        %633 = sbr.rel (%p631) target = $region100
      $region99: #{discriminator_forward.1} parent=5 // pred_region
        // Predicated region
        $region101: #{discriminator_forward.1} parent=99 // pred_check
          %p634 = pneg %p53
        $region102: #{discriminator_forward.1} parent=99 // pred_check_branch
          %636 = sbr.rel (%p634) target = $region104
        $region103: #{discriminator_forward.1} parent=99 // pred_region
          %p637 = scmp.lt.s32.totalorder %s33, 1
          %s638 = scalar_select %p637, %s33, 1
          %s639 = smul.addr %s638, 2
          %s640 = smul.addr %s639, 4
          %s641 = scalar_lea.vmem %s0, %s640
        $region104: #{discriminator_forward.1} parent=99 // pred_fallthru
          _
      $region100: #{discriminator_forward.1} parent=5 // pred_fallthru
        _
      %p642 = scmp.le.s32.totalorder 1, %s33
      %p643 = scmp.lt.s32.totalorder %s33, 3
      %p644 = pnand %p642, %p643
      %p645 = pneg %p644
      // Predicated region
      $region105: #{discriminator_forward.1} parent=5 // pred_check
        _
      $region106: #{discriminator_forward.1} parent=5 // pred_check_branch
        %647 = sbr.rel (%p644) target = $region108
      $region107: #{discriminator_forward.1} parent=5 // pred_region
        %s648 = ssub.s32 %s33, 1
        %p649 = scmp.lt.s32.totalorder %s38, 1
        %s650 = scalar_select %p649, %s38, 1
        %s651 = smul.addr %s650, 2
        %s652 = smul.addr %s651, 4
        %s653 = scalar_lea.vmem %s0, %s652
        %p654 = pneg %p59
        %p655 = pneg %p56
        %p656 = pneg %p80
        %p657 = pneg %p77
        %p658 = pneg %p101
        %p659 = pneg %p98
        %p660 = pneg %p122
        %p661 = pneg %p119
        %p662 = pneg %p143
        %p663 = pneg %p140
        %p664 = pneg %p164
        %p665 = pneg %p161
        %p666 = pneg %p185
        %p667 = pneg %p182
        %p668 = pneg %p206
        %p669 = pneg %p203
        %p670 = pneg %p227
        %p671 = pneg %p224
        %p672 = pneg %p248
        %p673 = pneg %p245
        %p674 = pneg %p269
        %p675 = pneg %p266
        %p676 = pneg %p290
        %p677 = pneg %p287
        %p678 = pneg %p311
        %p679 = pneg %p308
        %p680 = pneg %p332
        %p681 = pneg %p329
        %p682 = pneg %p353
        %p683 = pneg %p350
        %p684 = pneg %p374
        %p685 = pneg %p371
        %p686 = pneg %p395
        %p687 = pneg %p392
        %p688 = pneg %p416
        %p689 = pneg %p413
        %p690 = pneg %p437
        %p691 = pneg %p434
        %p692 = pneg %p458
        %p693 = pneg %p455
        %p694 = pneg %p479
        %p695 = pneg %p476
        %p696 = pneg %p500
        %p697 = pneg %p497
        %p698 = pneg %p526
        %p699 = pneg %p523
        %p700 = scmp.lt.s32.totalorder %s38, 1
        %s701 = scalar_select %p700, %s38, 1
        %s702 = scalar_lea.vmem %s22, %s701
        %p703 = pneg %p552
        %p704 = pneg %p549
        %s705 = sand.u32 %s539, 1
        %s706 = scalar_lea.sflag [#allocation3], %s705
        %s707 = sand.u32 %s539, 1
        %s708 = smul.addr %s707, 2
        %s709 = scalar_lea.vmem [#allocation2], %s708
        %p710 = scmp.lt.s32.totalorder %s38, 1
        %s711 = scalar_select %p710, %s38, 1
        %s712 = smul.addr %s711, 2
        %s713 = smul.addr %s712, 4
        %s714 = scalar_lea.vmem %s0, %s713
        %p715 = scmp.lt.s32.totalorder %s38, 1
        %s716 = scalar_select %p715, %s38, 1
        %s717 = scalar_lea.vmem %s22, %s716
        %v719 = vld [vmem:[%s1] sm:$0xff]
        %v720 = vld [vmem:[%s1 + $0x8] sm:$0xff]
        %v721 = vld [vmem:[%s714] sm:$0xf]
        %v722 = vld [vmem:[%s714 + $0x4] sm:$0xf]
        %v725 = vunpack.c.l.b16 %v721
        %v726 = vunpack.c.l.b16 %v722
        %v727 = vpack.c.b16 %v726, %v725
        %v729 = vshrl.u32 %v727, 16
        %v731 = vrot.slane %v729, 7
        %v732 = vshll.u32 %v727, 16
        %v734 = vor.u32 %v731, %v732
        %vm736 = vcmask 1040384
        %vm737 = vsmask.f32 256
        %vm738 = vmand %vm736, %vm737
        %v739 = vsel %vm738, 0, %v734
        %v740 = vrot.slane %v732, 1
        %v741 = vor.u32 %v729, %v740
        %vm743 = vcmask 1047552
        %vm744 = vsmask.f32 7424
        %vm745 = vmand %vm743, %vm744
        %v746 = vsel %vm745, %v741, 0
        %747 = vrot.lane.b32.xlu0 %v727, 48
        %v748 = vpop.permute.xlu0 %747
        %750 = vrot.lane.b32.xlu0 %v746, 96
        %v751 = vpop.permute.xlu0 %750
        %vm752 = vcmask 392192
        %v755 = vsel %vm752, %v739, %v748
        %vm756 = vcmask 785408
        %v758 = vsel %vm756, %v755, %v751
        %v760 = vld [vmem:[%s2] sm:$0xf]
        %v761 = vld [vmem:[%s2 + $0x4] sm:$0xf]
        %v762 = vld [vmem:[%s2 + $0x8] sm:$0xf]
        %v763 = vld [vmem:[%s2 + $0xc] sm:$0xf]
        %v764 = vld [vmem:[%s2 + $0x10] sm:$0xf]
        %v765 = vld [vmem:[%s2 + $0x14] sm:$0xf]
        %v766 = vld [vmem:[%s2 + $0x18] sm:$0xf]
        %v767 = vld [vmem:[%s2 + $0x1c] sm:$0xf]
        %v768 = vld [vmem:[%s2 + $0x20] sm:$0xf]
        %v769 = vld [vmem:[%s2 + $0x24] sm:$0xf]
        %v770 = vld [vmem:[%s2 + $0x28] sm:$0xf]
        %v771 = vld [vmem:[%s2 + $0x2c] sm:$0xf]
        %v772 = vld [vmem:[%s2 + $0x30] sm:$0xf]
        %v773 = vld [vmem:[%s2 + $0x34] sm:$0xf]
        %v774 = vld [vmem:[%s2 + $0x38] sm:$0xf]
        %v775 = vld [vmem:[%s2 + $0x3c] sm:$0xf]
        %v776 = vld [vmem:[%s2 + $0x40] sm:$0xf]
        %v777 = vld [vmem:[%s2 + $0x44] sm:$0xf]
        %v778 = vlaneseq
        %v779 = vshrl.u32 %v778, 7
        %v780 = vsub.s32 0, %v779
        %v781 = vrot.slane %v719, %v780
        %v800 = vunpack.c.l.b16 %v760
        %v801 = vunpack.c.l.b16 %v761
        %v802 = vunpack.c.l.b16 %v762
        %v803 = vunpack.c.l.b16 %v763
        %v804 = vunpack.c.l.b16 %v764
        %v805 = vunpack.c.l.b16 %v765
        %v806 = vunpack.c.l.b16 %v766
        %v807 = vunpack.c.l.b16 %v767
        %v808 = vunpack.c.l.b16 %v768
        %v809 = vunpack.c.l.b16 %v769
        %v810 = vunpack.c.l.b16 %v770
        %v811 = vunpack.c.l.b16 %v771
        %v812 = vunpack.c.l.b16 %v772
        %v813 = vunpack.c.l.b16 %v773
        %v814 = vunpack.c.l.b16 %v774
        %v815 = vunpack.c.l.b16 %v775
        %v816 = vunpack.c.l.b16 %v776
        %v817 = vunpack.c.l.b16 %v777
        %v818 = vpack.c.b16 %v801, %v800
        %v819 = vpack.c.b16 %v803, %v802
        %v820 = vpack.c.b16 %v805, %v804
        %v821 = vpack.c.b16 %v807, %v806
        %v822 = vpack.c.b16 %v809, %v808
        %v823 = vpack.c.b16 %v811, %v810
        %v824 = vpack.c.b16 %v813, %v812
        %v825 = vpack.c.b16 %v815, %v814
        %v826 = vpack.c.b16 %v817, %v816
        %vm836 = vcmask 130048
        %v837 = vsel %vm836, %v751, 0
        %839 = vmatprep.subr.bf16.mxu0 0
        %840 = vmatpush1.bf16.msra.mxu0 %v825
        %841 = vmatprep.subr.bf16.mxu0 0
        %842 = vmatpush1.bf16.msra.mxu0 %v824
        %843 = vmatprep.subr.bf16.mxu0 0
        %844 = vmatpush1.bf16.msra.mxu0 %v823
        %845 = vmatprep.subr.bf16.mxu0 0
        %846 = vmatpush1.bf16.msra.mxu0 %v822
        %847 = vmatprep.subr.bf16.mxu0 0
        %848 = vmatpush1.bf16.msra.mxu0 %v821
        %849 = vmatprep.subr.bf16.mxu0 0
        %850 = vmatpush1.bf16.msra.mxu0 %v820
        %851 = vmatprep.subr.bf16.mxu0 0
        %852 = vmatpush1.bf16.msra.mxu0 %v819
        %853 = vmatprep.subr.bf16.mxu0 0
        %854 = vmatpush1.bf16.msra.mxu0 %v818
        %855 = vmatprep.subr.bf16.mxu0 0
        %856 = vmatpush2.bf16.msra.mxu0 0
        %857 = vmatprep.subr.bf16.mxu0 0
        %858 = vmatpush2.bf16.msra.mxu0 0
        %859 = vmatprep.subr.bf16.mxu0 0
        %860 = vmatpush2.bf16.msra.mxu0 0
        %861 = vmatprep.subr.bf16.mxu0 0
        %862 = vmatpush2.bf16.msra.mxu0 0
        %863 = vmatprep.subr.bf16.mxu0 0
        %864 = vmatpush2.bf16.msra.mxu0 0
        %865 = vmatprep.subr.bf16.mxu0 0
        %866 = vmatpush2.bf16.msra.mxu0 0
        %867 = vmatprep.subr.bf16.mxu0 0
        %868 = vmatpush2.bf16.msra.mxu0 0
        %869 = vmatprep.subr.bf16.mxu0 0
        %870 = vmatpush2.bf16.msra.mxu0 %v826
        %871 = vmatprep.mubr.bf16.mxu0 %v837
        %872 = vmatmul.mubr.bf16.gmra.mxu0 %v758
        %v873 = vpop.f32.mrf.mxu0
        %v874 = vadd.f32 %v781, %v873
        %v875 = vpop.f32.mrf.mxu0
        %v876 = vpop.f32.mrf.mxu0
        %v877 = vadd.f32 %v781, %v876
        %v878 = vpop.f32.mrf.mxu0
        %879 = vdwg.mxu0
        %vm880 = vcmp.ge.f32.partialorder %v874, 0.0
        %vm881 = vcmp.ge.f32.partialorder %v877, 0.0
        %v882 = vmul.f32 %v874, 0.2
        %v883 = vmul.f32 %v877, 0.2
        %v884 = vsel %vm880, %v874, %v882
        %v885 = vsel %vm881, %v877, %v883
        %v886 = vpack.c.bf16 %v885, %v884
        %v888 = vshrl.u32 %v886, 16
        %v890 = vrot.slane %v888, 7
        %v891 = vshll.u32 %v886, 16
        %v893 = vor.u32 %v890, %v891
        %v895 = vsel %vm738, 0, %v893
        %v896 = vrot.slane %v891, 1
        %v897 = vor.u32 %v888, %v896
        %v899 = vsel %vm745, %v897, 0
        %v900 = vld [vmem:[%s3] sm:$0xf]
        %v901 = vld [vmem:[%s3 + $0x4] sm:$0xf]
        %v902 = vld [vmem:[%s3 + $0x8] sm:$0xf]
        %v903 = vld [vmem:[%s3 + $0xc] sm:$0xf]
        %v904 = vld [vmem:[%s3 + $0x10] sm:$0xf]
        %v905 = vld [vmem:[%s3 + $0x14] sm:$0xf]
        %v906 = vld [vmem:[%s3 + $0x18] sm:$0xf]
        %v907 = vld [vmem:[%s3 + $0x1c] sm:$0xf]
        %v908 = vld [vmem:[%s3 + $0x20] sm:$0xf]
        %v909 = vld [vmem:[%s3 + $0x24] sm:$0xf]
        %v910 = vld [vmem:[%s3 + $0x28] sm:$0xf]
        %v911 = vld [vmem:[%s3 + $0x2c] sm:$0xf]
        %v912 = vld [vmem:[%s3 + $0x30] sm:$0xf]
        %v913 = vld [vmem:[%s3 + $0x34] sm:$0xf]
        %v914 = vld [vmem:[%s3 + $0x38] sm:$0xf]
        %v915 = vld [vmem:[%s3 + $0x3c] sm:$0xf]
        %v916 = vld [vmem:[%s3 + $0x40] sm:$0xf]
        %v917 = vld [vmem:[%s3 + $0x44] sm:$0xf]
        %v918 = vld [vmem:[%s3 + $0x48] sm:$0xf]
        %v919 = vld [vmem:[%s3 + $0x4c] sm:$0xf]
        %v920 = vld [vmem:[%s3 + $0x50] sm:$0xf]
        %v921 = vld [vmem:[%s3 + $0x54] sm:$0xf]
        %v922 = vld [vmem:[%s3 + $0x58] sm:$0xf]
        %v923 = vld [vmem:[%s3 + $0x5c] sm:$0xf]
        %v924 = vld [vmem:[%s3 + $0x60] sm:$0xf]
        %v925 = vld [vmem:[%s3 + $0x64] sm:$0xf]
        %v926 = vld [vmem:[%s3 + $0x68] sm:$0xf]
        %v927 = vld [vmem:[%s3 + $0x6c] sm:$0xf]
        %v928 = vld [vmem:[%s3 + $0x70] sm:$0xf]
        %v929 = vld [vmem:[%s3 + $0x74] sm:$0xf]
        %v930 = vld [vmem:[%s3 + $0x78] sm:$0xf]
        %v931 = vld [vmem:[%s3 + $0x7c] sm:$0xf]
        %v932 = vld [vmem:[%s3 + $0x80] sm:$0xf]
        %v933 = vld [vmem:[%s3 + $0x84] sm:$0xf]
        %v934 = vld [vmem:[%s3 + $0x88] sm:$0xf]
        %v935 = vld [vmem:[%s3 + $0x8c] sm:$0xf]
        %v936 = vld [vmem:[%s3 + $0x90] sm:$0xf]
        %v937 = vld [vmem:[%s3 + $0x94] sm:$0xf]
        %v938 = vld [vmem:[%s3 + $0x98] sm:$0xf]
        %v939 = vld [vmem:[%s3 + $0x9c] sm:$0xf]
        %v940 = vld [vmem:[%s3 + $0xa0] sm:$0xf]
        %v941 = vld [vmem:[%s3 + $0xa4] sm:$0xf]
        %v942 = vld [vmem:[%s3 + $0xa8] sm:$0xf]
        %v943 = vld [vmem:[%s3 + $0xac] sm:$0xf]
        %v944 = vld [vmem:[%s3 + $0xb0] sm:$0xf]
        %v945 = vld [vmem:[%s3 + $0xb4] sm:$0xf]
        %v946 = vld [vmem:[%s3 + $0xb8] sm:$0xf]
        %v947 = vld [vmem:[%s3 + $0xbc] sm:$0xf]
        %v948 = vlaneseq
        %v949 = vshrl.u32 %v948, 7
        %v950 = vsub.s32 1, %v949
        %v951 = vrot.slane %v719, %v950
        %v1000 = vunpack.c.l.b16 %v900
        %v1001 = vunpack.c.l.b16 %v901
        %v1002 = vunpack.c.l.b16 %v902
        %v1003 = vunpack.c.l.b16 %v903
        %v1004 = vunpack.c.l.b16 %v904
        %v1005 = vunpack.c.l.b16 %v905
        %v1006 = vunpack.c.l.b16 %v906
        %v1007 = vunpack.c.l.b16 %v907
        %v1008 = vunpack.c.l.b16 %v908
        %v1009 = vunpack.c.l.b16 %v909
        %v1010 = vunpack.c.l.b16 %v910
        %v1011 = vunpack.c.l.b16 %v911
        %v1012 = vunpack.c.l.b16 %v912
        %v1013 = vunpack.c.l.b16 %v913
        %v1014 = vunpack.c.l.b16 %v914
        %v1015 = vunpack.c.l.b16 %v915
        %v1016 = vunpack.c.l.b16 %v916
        %v1017 = vunpack.c.l.b16 %v917
        %v1018 = vunpack.c.l.b16 %v918
        %v1019 = vunpack.c.l.b16 %v919
        %v1020 = vunpack.c.l.b16 %v920
        %v1021 = vunpack.c.l.b16 %v921
        %v1022 = vunpack.c.l.b16 %v922
        %v1023 = vunpack.c.l.b16 %v923
        %v1024 = vunpack.c.l.b16 %v924
        %v1025 = vunpack.c.l.b16 %v925
        %v1026 = vunpack.c.l.b16 %v926
        %v1027 = vunpack.c.l.b16 %v927
        %v1028 = vunpack.c.l.b16 %v928
        %v1029 = vunpack.c.l.b16 %v929
        %v1030 = vunpack.c.l.b16 %v930
        %v1031 = vunpack.c.l.b16 %v931
        %v1032 = vunpack.c.l.b16 %v932
        %v1033 = vunpack.c.l.b16 %v933
        %v1034 = vunpack.c.l.b16 %v934
        %v1035 = vunpack.c.l.b16 %v935
        %v1036 = vunpack.c.l.b16 %v936
        %v1037 = vunpack.c.l.b16 %v937
        %v1038 = vunpack.c.l.b16 %v938
        %v1039 = vunpack.c.l.b16 %v939
        %v1040 = vunpack.c.l.b16 %v940
        %v1041 = vunpack.c.l.b16 %v941
        %v1042 = vunpack.c.l.b16 %v942
        %v1043 = vunpack.c.l.b16 %v943
        %v1044 = vunpack.c.l.b16 %v944
        %v1045 = vunpack.c.l.b16 %v945
        %v1046 = vunpack.c.l.b16 %v946
        %v1047 = vunpack.c.l.b16 %v947
        %v1048 = vpack.c.b16 %v1001, %v1000
        %v1049 = vpack.c.b16 %v1003, %v1002
        %v1050 = vpack.c.b16 %v1005, %v1004
        %v1051 = vpack.c.b16 %v1007, %v1006
        %v1052 = vpack.c.b16 %v1009, %v1008
        %v1053 = vpack.c.b16 %v1011, %v1010
        %v1054 = vpack.c.b16 %v1013, %v1012
        %v1055 = vpack.c.b16 %v1015, %v1014
        %v1056 = vpack.c.b16 %v1017, %v1016
        %v1057 = vpack.c.b16 %v1019, %v1018
        %v1058 = vpack.c.b16 %v1021, %v1020
        %v1059 = vpack.c.b16 %v1023, %v1022
        %v1060 = vpack.c.b16 %v1025, %v1024
        %v1061 = vpack.c.b16 %v1027, %v1026
        %v1062 = vpack.c.b16 %v1029, %v1028
        %v1063 = vpack.c.b16 %v1031, %v1030
        %v1064 = vpack.c.b16 %v1033, %v1032
        %v1065 = vpack.c.b16 %v1035, %v1034
        %v1066 = vpack.c.b16 %v1037, %v1036
        %v1067 = vpack.c.b16 %v1039, %v1038
        %v1068 = vpack.c.b16 %v1041, %v1040
        %v1069 = vpack.c.b16 %v1043, %v1042
        %v1070 = vpack.c.b16 %v1045, %v1044
        %v1071 = vpack.c.b16 %v1047, %v1046
        %1096 = vmatprep.subr.bf16.mxu0 0
        %1097 = vmatpush1.bf16.msra.mxu0 %v1055
        %1098 = vmatprep.subr.bf16.mxu0 0
        %1099 = vmatpush1.bf16.msra.mxu0 %v1054
        %1100 = vmatprep.subr.bf16.mxu0 0
        %1101 = vmatpush1.bf16.msra.mxu0 %v1053
        %1102 = vmatprep.subr.bf16.mxu0 0
        %1103 = vmatpush1.bf16.msra.mxu0 %v1052
        %1104 = vmatprep.subr.bf16.mxu0 0
        %1105 = vmatpush1.bf16.msra.mxu0 %v1051
        %1106 = vmatprep.subr.bf16.mxu0 0
        %1107 = vmatpush1.bf16.msra.mxu0 %v1050
        %1108 = vmatprep.subr.bf16.mxu0 0
        %1109 = vmatpush1.bf16.msra.mxu0 %v1049
        %1110 = vmatprep.subr.bf16.mxu0 0
        %1111 = vmatpush1.bf16.msra.mxu0 %v1048
        %1112 = vmatprep.subr.bf16.mxu0 0
        %1113 = vmatpush2.bf16.msra.mxu0 %v1063
        %1114 = vmatprep.subr.bf16.mxu0 0
        %1115 = vmatpush2.bf16.msra.mxu0 %v1062
        %1116 = vmatprep.subr.bf16.mxu0 0
        %1117 = vmatpush2.bf16.msra.mxu0 %v1061
        %1118 = vmatprep.subr.bf16.mxu0 0
        %1119 = vmatpush2.bf16.msra.mxu0 %v1060
        %1120 = vmatprep.subr.bf16.mxu0 0
        %1121 = vmatpush2.bf16.msra.mxu0 %v1059
        %1122 = vmatprep.subr.bf16.mxu0 0
        %1123 = vmatpush2.bf16.msra.mxu0 %v1058
        %1124 = vmatprep.subr.bf16.mxu0 0
        %1125 = vmatpush2.bf16.msra.mxu0 %v1057
        %1126 = vmatprep.subr.bf16.mxu0 0
        %1127 = vmatpush2.bf16.msra.mxu0 %v1056
        %1128 = vmatprep.mubr.bf16.mxu0 %v886
        %1129 = vmatmul.mubr.bf16.gmra.mxu0 %v895
        %v1130 = vpop.f32.mrf.mxu0
        %v1131 = vadd.f32 %v951, %v1130
        %v1132 = vpop.f32.mrf.mxu0
        %v1133 = vpop.f32.mrf.mxu0
        %v1134 = vadd.f32 %v951, %v1133
        %v1135 = vpop.f32.mrf.mxu0
        %1136 = vdwg.mxu0
        %1137 = vmatprep.subr.bf16.mxu0 0
        %1138 = vmatpush1.bf16.msra.mxu0 %v1071
        %1139 = vmatprep.subr.bf16.mxu0 0
        %1140 = vmatpush1.bf16.msra.mxu0 %v1070
        %1141 = vmatprep.subr.bf16.mxu0 0
        %1142 = vmatpush1.bf16.msra.mxu0 %v1069
        %1143 = vmatprep.subr.bf16.mxu0 0
        %1144 = vmatpush1.bf16.msra.mxu0 %v1068
        %1145 = vmatprep.subr.bf16.mxu0 0
        %1146 = vmatpush1.bf16.msra.mxu0 %v1067
        %1147 = vmatprep.subr.bf16.mxu0 0
        %1148 = vmatpush1.bf16.msra.mxu0 %v1066
        %1149 = vmatprep.subr.bf16.mxu0 0
        %1150 = vmatpush1.bf16.msra.mxu0 %v1065
        %1151 = vmatprep.subr.bf16.mxu0 0
        %1152 = vmatpush1.bf16.msra.mxu0 %v1064
        %1153 = vmatprep.subr.bf16.mxu0 0
        %1154 = vmatpush2.bf16.msra.mxu0 0
        %1155 = vmatprep.subr.bf16.mxu0 0
        %1156 = vmatpush2.bf16.msra.mxu0 0
        %1157 = vmatprep.subr.bf16.mxu0 0
        %1158 = vmatpush2.bf16.msra.mxu0 0
        %1159 = vmatprep.subr.bf16.mxu0 0
        %1160 = vmatpush2.bf16.msra.mxu0 0
        %1161 = vmatprep.subr.bf16.mxu0 0
        %1162 = vmatpush2.bf16.msra.mxu0 0
        %1163 = vmatprep.subr.bf16.mxu0 0
        %1164 = vmatpush2.bf16.msra.mxu0 0
        %1165 = vmatprep.subr.bf16.mxu0 0
        %1166 = vmatpush2.bf16.msra.mxu0 0
        %1167 = vmatprep.subr.bf16.mxu0 0
        %1168 = vmatpush2.bf16.msra.mxu0 0
        %1169 = vmatprep.mubr.bf16.mxu0 0
        %1170 = vmatmul.mubr.bf16.gmra.mxu0 %v899
        %v1171 = vpop.f32.mrf.mxu0
        %v1172 = vadd.f32 %v1131, %v1171
        %v1173 = vpop.f32.mrf.mxu0
        %v1174 = vpop.f32.mrf.mxu0
        %v1175 = vadd.f32 %v1134, %v1174
        %v1176 = vpop.f32.mrf.mxu0
        %1177 = vdwg.mxu0
        %v1178 = vld [vmem:[%s4] sm:$0xf]
        %v1179 = vld [vmem:[%s4 + $0x4] sm:$0xf]
        %v1180 = vld [vmem:[%s4 + $0x8] sm:$0xf]
        %v1181 = vld [vmem:[%s4 + $0xc] sm:$0xf]
        %v1182 = vld [vmem:[%s4 + $0x10] sm:$0xf]
        %v1183 = vld [vmem:[%s4 + $0x14] sm:$0xf]
        %v1184 = vlaneseq
        %v1185 = vshrl.u32 %v1184, 7
        %v1186 = vsub.s32 2, %v1185
        %v1187 = vrot.slane %v719, %v1186
        %v1194 = vunpack.c.l.b16 %v1178
        %v1195 = vunpack.c.l.b16 %v1179
        %v1196 = vunpack.c.l.b16 %v1180
        %v1197 = vunpack.c.l.b16 %v1181
        %v1198 = vunpack.c.l.b16 %v1182
        %v1199 = vunpack.c.l.b16 %v1183
        %v1200 = vpack.c.b16 %v1195, %v1194
        %v1201 = vpack.c.b16 %v1197, %v1196
        %v1202 = vpack.c.b16 %v1199, %v1198
        %v1206 = vsel %vm752, %v727, 0
        %1208 = vmatprep.subr.bf16.mxu0 0
        %1209 = vmatpush1.bf16.msra.mxu0 0
        %1210 = vmatprep.subr.bf16.mxu0 0
        %1211 = vmatpush1.bf16.msra.mxu0 0
        %1212 = vmatprep.subr.bf16.mxu0 0
        %1213 = vmatpush1.bf16.msra.mxu0 0
        %1214 = vmatprep.subr.bf16.mxu0 0
        %1215 = vmatpush1.bf16.msra.mxu0 0
        %1216 = vmatprep.subr.bf16.mxu0 0
        %1217 = vmatpush1.bf16.msra.mxu0 0
        %1218 = vmatprep.subr.bf16.mxu0 0
        %1219 = vmatpush1.bf16.msra.mxu0 %v1202
        %1220 = vmatprep.subr.bf16.mxu0 0
        %1221 = vmatpush1.bf16.msra.mxu0 %v1201
        %1222 = vmatprep.subr.bf16.mxu0 0
        %1223 = vmatpush1.bf16.msra.mxu0 %v1200
        %1224 = vmatprep.subr.bf16.mxu0 0
        %1225 = vmatpush2.bf16.msra.mxu0 0
        %1226 = vmatprep.subr.bf16.mxu0 0
        %1227 = vmatpush2.bf16.msra.mxu0 0
        %1228 = vmatprep.subr.bf16.mxu0 0
        %1229 = vmatpush2.bf16.msra.mxu0 0
        %1230 = vmatprep.subr.bf16.mxu0 0
        %1231 = vmatpush2.bf16.msra.mxu0 0
        %1232 = vmatprep.subr.bf16.mxu0 0
        %1233 = vmatpush2.bf16.msra.mxu0 0
        %1234 = vmatprep.subr.bf16.mxu0 0
        %1235 = vmatpush2.bf16.msra.mxu0 0
        %1236 = vmatprep.subr.bf16.mxu0 0
        %1237 = vmatpush2.bf16.msra.mxu0 0
        %1238 = vmatprep.subr.bf16.mxu0 0
        %1239 = vmatpush2.bf16.msra.mxu0 0
        %1240 = vmatprep.mubr.bf16.mxu0 0
        %1241 = vmatmul.mubr.bf16.gmra.mxu0 %v1206
        %v1242 = vpop.f32.mrf.mxu0
        %v1243 = vadd.f32 %v1187, %v1242
        %v1244 = vpop.f32.mrf.mxu0
        %v1245 = vpop.f32.mrf.mxu0
        %v1246 = vadd.f32 %v1187, %v1245
        %v1247 = vpop.f32.mrf.mxu0
        %1248 = vdwg.mxu0
        %v1249 = vadd.f32 %v1172, %v1243
        %v1250 = vadd.f32 %v1175, %v1246
        %v1251 = vld [vmem:[%s5] sm:$0xf]
        %v1252 = vpack.c.bf16 %v1250, %v1249
        %v1254 = vsel %vm836, %v1251, 0
        %1256 = vmatprep.subr.bf16.mxu0 0
        %1257 = vmatpush1.bf16.msra.mxu0 0
        %1258 = vmatprep.subr.bf16.mxu0 0
        %1259 = vmatpush1.bf16.msra.mxu0 0
        %1260 = vmatprep.subr.bf16.mxu0 0
        %1261 = vmatpush1.bf16.msra.mxu0 0
        %1262 = vmatprep.subr.bf16.mxu0 0
        %1263 = vmatpush1.bf16.msra.mxu0 0
        %1264 = vmatprep.subr.bf16.mxu0 0
        %1265 = vmatpush1.bf16.msra.mxu0 0
        %1266 = vmatprep.subr.bf16.mxu0 0
        %1267 = vmatpush1.bf16.msra.mxu0 0
        %1268 = vmatprep.subr.bf16.mxu0 0
        %1269 = vmatpush1.bf16.msra.mxu0 0
        %1270 = vmatprep.subr.bf16.mxu0 0
        %1271 = vmatpush1.bf16.msra.mxu0 %v1252
        %1272 = vmatprep.subr.bf16.mxu0 0
        %1273 = vmatpush2.bf16.msra.mxu0 0
        %1274 = vmatprep.subr.bf16.mxu0 0
        %1275 = vmatpush2.bf16.msra.mxu0 0
        %1276 = vmatprep.subr.bf16.mxu0 0
        %1277 = vmatpush2.bf16.msra.mxu0 0
        %1278 = vmatprep.subr.bf16.mxu0 0
        %1279 = vmatpush2.bf16.msra.mxu0 0
        %1280 = vmatprep.subr.bf16.mxu0 0
        %1281 = vmatpush2.bf16.msra.mxu0 0
        %1282 = vmatprep.subr.bf16.mxu0 0
        %1283 = vmatpush2.bf16.msra.mxu0 0
        %1284 = vmatprep.subr.bf16.mxu0 0
        %1285 = vmatpush2.bf16.msra.mxu0 0
        %1286 = vmatprep.subr.bf16.mxu0 0
        %1287 = vmatpush2.bf16.msra.mxu0 0
        %1288 = vmatprep.mubr.bf16.mxu0 0
        %1289 = vmatmul.mubr.bf16.gmra.mxu0 %v1254
        %v1290 = vpop.f32.mrf.mxu0
        %v1291 = vadd.f32 0.0, %v1290
        %v1292 = vpop.f32.mrf.mxu0
        %v1293 = vpop.f32.mrf.mxu0
        %v1294 = vpop.f32.mrf.mxu0
        %1295 = vdwg.mxu0
        %v1296 = vld [vmem:[%s6] sm:$0xf]
        %v1297 = vld [vmem:[%s6 + $0x4] sm:$0xf]
        %v1298 = vld [vmem:[%s6 + $0x8] sm:$0xf]
        %v1299 = vld [vmem:[%s6 + $0xc] sm:$0xf]
        %v1300 = vld [vmem:[%s6 + $0x10] sm:$0xf]
        %v1301 = vld [vmem:[%s6 + $0x14] sm:$0xf]
        %v1302 = vld [vmem:[%s6 + $0x18] sm:$0xf]
        %v1303 = vld [vmem:[%s6 + $0x1c] sm:$0xf]
        %v1304 = vld [vmem:[%s6 + $0x20] sm:$0xf]
        %v1305 = vld [vmem:[%s6 + $0x24] sm:$0xf]
        %v1306 = vld [vmem:[%s6 + $0x28] sm:$0xf]
        %v1307 = vld [vmem:[%s6 + $0x2c] sm:$0xf]
        %v1308 = vld [vmem:[%s6 + $0x30] sm:$0xf]
        %v1309 = vld [vmem:[%s6 + $0x34] sm:$0xf]
        %v1310 = vld [vmem:[%s6 + $0x38] sm:$0xf]
        %v1311 = vld [vmem:[%s6 + $0x3c] sm:$0xf]
        %v1312 = vpack.c.bf16 %v1291, %v1291
        %v1329 = vunpack.c.l.b16 %v1296
        %v1330 = vunpack.c.l.b16 %v1297
        %v1331 = vunpack.c.l.b16 %v1298
        %v1332 = vunpack.c.l.b16 %v1299
        %v1333 = vunpack.c.l.b16 %v1300
        %v1334 = vunpack.c.l.b16 %v1301
        %v1335 = vunpack.c.l.b16 %v1302
        %v1336 = vunpack.c.l.b16 %v1303
        %v1337 = vunpack.c.l.b16 %v1304
        %v1338 = vunpack.c.l.b16 %v1305
        %v1339 = vunpack.c.l.b16 %v1306
        %v1340 = vunpack.c.l.b16 %v1307
        %v1341 = vunpack.c.l.b16 %v1308
        %v1342 = vunpack.c.l.b16 %v1309
        %v1343 = vunpack.c.l.b16 %v1310
        %v1344 = vunpack.c.l.b16 %v1311
        %v1345 = vpack.c.b16 %v1330, %v1329
        %v1346 = vpack.c.b16 %v1332, %v1331
        %v1347 = vpack.c.b16 %v1334, %v1333
        %v1348 = vpack.c.b16 %v1336, %v1335
        %v1349 = vpack.c.b16 %v1338, %v1337
        %v1350 = vpack.c.b16 %v1340, %v1339
        %v1351 = vpack.c.b16 %v1342, %v1341
        %v1352 = vpack.c.b16 %v1344, %v1343
        %1361 = vmatprep.subr.bf16.mxu0 0
        %1362 = vmatpush1.bf16.msra.mxu0 %v1352
        %1363 = vmatprep.subr.bf16.mxu0 0
        %1364 = vmatpush1.bf16.msra.mxu0 %v1351
        %1365 = vmatprep.subr.bf16.mxu0 0
        %1366 = vmatpush1.bf16.msra.mxu0 %v1350
        %1367 = vmatprep.subr.bf16.mxu0 0
        %1368 = vmatpush1.bf16.msra.mxu0 %v1349
        %1369 = vmatprep.subr.bf16.mxu0 0
        %1370 = vmatpush1.bf16.msra.mxu0 %v1348
        %1371 = vmatprep.subr.bf16.mxu0 0
        %1372 = vmatpush1.bf16.msra.mxu0 %v1347
        %1373 = vmatprep.subr.bf16.mxu0 0
        %1374 = vmatpush1.bf16.msra.mxu0 %v1346
        %1375 = vmatprep.subr.bf16.mxu0 0
        %1376 = vmatpush1.bf16.msra.mxu0 %v1345
        %1377 = vmatprep.subr.bf16.mxu0 0
        %1378 = vmatpush2.bf16.msra.mxu0 0
        %1379 = vmatprep.subr.bf16.mxu0 0
        %1380 = vmatpush2.bf16.msra.mxu0 0
        %1381 = vmatprep.subr.bf16.mxu0 0
        %1382 = vmatpush2.bf16.msra.mxu0 0
        %1383 = vmatprep.subr.bf16.mxu0 0
        %1384 = vmatpush2.bf16.msra.mxu0 0
        %1385 = vmatprep.subr.bf16.mxu0 0
        %1386 = vmatpush2.bf16.msra.mxu0 0
        %1387 = vmatprep.subr.bf16.mxu0 0
        %1388 = vmatpush2.bf16.msra.mxu0 0
        %1389 = vmatprep.subr.bf16.mxu0 0
        %1390 = vmatpush2.bf16.msra.mxu0 0
        %1391 = vmatprep.subr.bf16.mxu0 0
        %1392 = vmatpush2.bf16.msra.mxu0 0
        %1393 = vmatprep.mubr.bf16.mxu0 0
        %1394 = vmatmul.mubr.bf16.gmra.mxu0 %v1312
        %v1395 = vpop.f32.mrf.mxu0
        %v1396 = vadd.f32 0.0, %v1395
        %v1397 = vpop.f32.mrf.mxu0
        %v1398 = vpop.f32.mrf.mxu0
        %v1399 = vpop.f32.mrf.mxu0
        %1400 = vdwg.mxu0
        %vm1401 = vcmp.ge.f32.partialorder %v1396, 0.0
        %v1402 = vmul.f32 %v1396, 0.2
        %v1403 = vsel %vm1401, %v1396, %v1402
        %v1404 = vpack.c.bf16 %v1403, %v1403
        %v1406 = vshrl.u32 %v1404, 16
        %v1408 = vrot.slane %v1406, 7
        %v1409 = vshll.u32 %v1404, 16
        %v1411 = vor.u32 %v1408, %v1409
        %v1413 = vsel %vm738, 0, %v1411
        %v1414 = vrot.slane %v1409, 1
        %v1415 = vor.u32 %v1406, %v1414
        %vm1417 = vcmask 1043456
        %vm1418 = vsmask.f32 3328
        %vm1419 = vmand %vm1417, %vm1418
        %v1420 = vsel %vm1419, %v1415, 0
        %1422 = vrot.lane.b32.xlu0 %v1404, 64
        %v1423 = vpop.permute.xlu0 %1422
        %vm1424 = vcmask 523264
        %v1427 = vsel %vm1424, %v1413, %v1423
        %v1429 = vld [vmem:[%s7] sm:$0xf]
        %v1430 = vld [vmem:[%s7 + $0x4] sm:$0xf]
        %v1431 = vld [vmem:[%s7 + $0x8] sm:$0xf]
        %v1432 = vld [vmem:[%s7 + $0xc] sm:$0xf]
        %v1433 = vld [vmem:[%s7 + $0x10] sm:$0xf]
        %v1434 = vld [vmem:[%s7 + $0x14] sm:$0xf]
        %v1435 = vld [vmem:[%s7 + $0x18] sm:$0xf]
        %v1436 = vld [vmem:[%s7 + $0x1c] sm:$0xf]
        %v1437 = vld [vmem:[%s7 + $0x20] sm:$0xf]
        %v1438 = vld [vmem:[%s7 + $0x24] sm:$0xf]
        %v1439 = vld [vmem:[%s7 + $0x28] sm:$0xf]
        %v1440 = vld [vmem:[%s7 + $0x2c] sm:$0xf]
        %v1441 = vld [vmem:[%s7 + $0x30] sm:$0xf]
        %v1442 = vld [vmem:[%s7 + $0x34] sm:$0xf]
        %v1443 = vld [vmem:[%s7 + $0x38] sm:$0xf]
        %v1444 = vld [vmem:[%s7 + $0x3c] sm:$0xf]
        %v1445 = vld [vmem:[%s7 + $0x40] sm:$0xf]
        %v1446 = vld [vmem:[%s7 + $0x44] sm:$0xf]
        %v1447 = vld [vmem:[%s7 + $0x48] sm:$0xf]
        %v1448 = vld [vmem:[%s7 + $0x4c] sm:$0xf]
        %v1449 = vld [vmem:[%s7 + $0x50] sm:$0xf]
        %v1450 = vld [vmem:[%s7 + $0x54] sm:$0xf]
        %v1451 = vld [vmem:[%s7 + $0x58] sm:$0xf]
        %v1452 = vld [vmem:[%s7 + $0x5c] sm:$0xf]
        %v1453 = vlaneseq
        %v1454 = vshrl.u32 %v1453, 7
        %v1455 = vsub.s32 3, %v1454
        %v1456 = vrot.slane %v719, %v1455
        %v1481 = vunpack.c.l.b16 %v1429
        %v1482 = vunpack.c.l.b16 %v1430
        %v1483 = vunpack.c.l.b16 %v1431
        %v1484 = vunpack.c.l.b16 %v1432
        %v1485 = vunpack.c.l.b16 %v1433
        %v1486 = vunpack.c.l.b16 %v1434
        %v1487 = vunpack.c.l.b16 %v1435
        %v1488 = vunpack.c.l.b16 %v1436
        %v1489 = vunpack.c.l.b16 %v1437
        %v1490 = vunpack.c.l.b16 %v1438
        %v1491 = vunpack.c.l.b16 %v1439
        %v1492 = vunpack.c.l.b16 %v1440
        %v1493 = vunpack.c.l.b16 %v1441
        %v1494 = vunpack.c.l.b16 %v1442
        %v1495 = vunpack.c.l.b16 %v1443
        %v1496 = vunpack.c.l.b16 %v1444
        %v1497 = vunpack.c.l.b16 %v1445
        %v1498 = vunpack.c.l.b16 %v1446
        %v1499 = vunpack.c.l.b16 %v1447
        %v1500 = vunpack.c.l.b16 %v1448
        %v1501 = vunpack.c.l.b16 %v1449
        %v1502 = vunpack.c.l.b16 %v1450
        %v1503 = vunpack.c.l.b16 %v1451
        %v1504 = vunpack.c.l.b16 %v1452
        %v1505 = vpack.c.b16 %v1482, %v1481
        %v1506 = vpack.c.b16 %v1484, %v1483
        %v1507 = vpack.c.b16 %v1486, %v1485
        %v1508 = vpack.c.b16 %v1488, %v1487
        %v1509 = vpack.c.b16 %v1490, %v1489
        %v1510 = vpack.c.b16 %v1492, %v1491
        %v1511 = vpack.c.b16 %v1494, %v1493
        %v1512 = vpack.c.b16 %v1496, %v1495
        %v1513 = vpack.c.b16 %v1498, %v1497
        %v1514 = vpack.c.b16 %v1500, %v1499
        %v1515 = vpack.c.b16 %v1502, %v1501
        %v1516 = vpack.c.b16 %v1504, %v1503
        %v1530 = vsel %vm1424, %v1420, 0
        %1532 = vmatprep.subr.bf16.mxu0 0
        %1533 = vmatpush1.bf16.msra.mxu0 %v1512
        %1534 = vmatprep.subr.bf16.mxu0 0
        %1535 = vmatpush1.bf16.msra.mxu0 %v1511
        %1536 = vmatprep.subr.bf16.mxu0 0
        %1537 = vmatpush1.bf16.msra.mxu0 %v1510
        %1538 = vmatprep.subr.bf16.mxu0 0
        %1539 = vmatpush1.bf16.msra.mxu0 %v1509
        %1540 = vmatprep.subr.bf16.mxu0 0
        %1541 = vmatpush1.bf16.msra.mxu0 %v1508
        %1542 = vmatprep.subr.bf16.mxu0 0
        %1543 = vmatpush1.bf16.msra.mxu0 %v1507
        %1544 = vmatprep.subr.bf16.mxu0 0
        %1545 = vmatpush1.bf16.msra.mxu0 %v1506
        %1546 = vmatprep.subr.bf16.mxu0 0
        %1547 = vmatpush1.bf16.msra.mxu0 %v1505
        %1548 = vmatprep.subr.bf16.mxu0 0
        %1549 = vmatpush2.bf16.msra.mxu0 0
        %1550 = vmatprep.subr.bf16.mxu0 0
        %1551 = vmatpush2.bf16.msra.mxu0 0
        %1552 = vmatprep.subr.bf16.mxu0 0
        %1553 = vmatpush2.bf16.msra.mxu0 0
        %1554 = vmatprep.subr.bf16.mxu0 0
        %1555 = vmatpush2.bf16.msra.mxu0 0
        %1556 = vmatprep.subr.bf16.mxu0 0
        %1557 = vmatpush2.bf16.msra.mxu0 %v1516
        %1558 = vmatprep.subr.bf16.mxu0 0
        %1559 = vmatpush2.bf16.msra.mxu0 %v1515
        %1560 = vmatprep.subr.bf16.mxu0 0
        %1561 = vmatpush2.bf16.msra.mxu0 %v1514
        %1562 = vmatprep.subr.bf16.mxu0 0
        %1563 = vmatpush2.bf16.msra.mxu0 %v1513
        %1564 = vmatprep.mubr.bf16.mxu0 %v1530
        %1565 = vmatmul.mubr.bf16.gmra.mxu0 %v1427
        %v1566 = vpop.f32.mrf.mxu0
        %v1567 = vadd.f32 %v1456, %v1566
        %v1568 = vpop.f32.mrf.mxu0
        %v1569 = vpop.f32.mrf.mxu0
        %v1570 = vpop.f32.mrf.mxu0
        %1571 = vdwg.mxu0
        %vm1572 = vcmp.ge.f32.partialorder %v1567, 0.0
        %v1573 = vmul.f32 %v1567, 0.2
        %v1574 = vsel %vm1572, %v1567, %v1573
        %v1575 = vpack.c.bf16 %v1574, %v1574
        %v1577 = vshrl.u32 %v1575, 16
        %v1579 = vrot.slane %v1577, 7
        %v1580 = vshll.u32 %v1575, 16
        %v1582 = vor.u32 %v1579, %v1580
        %v1584 = vsel %vm738, 0, %v1582
        %v1585 = vrot.slane %v1580, 1
        %v1586 = vor.u32 %v1577, %v1585
        %v1588 = vsel %vm1419, %v1586, 0
        %v1589 = vld [vmem:[%s8] sm:$0xf]
        %v1590 = vld [vmem:[%s8 + $0x4] sm:$0xf]
        %v1591 = vld [vmem:[%s8 + $0x8] sm:$0xf]
        %v1592 = vld [vmem:[%s8 + $0xc] sm:$0xf]
        %v1593 = vld [vmem:[%s8 + $0x10] sm:$0xf]
        %v1594 = vld [vmem:[%s8 + $0x14] sm:$0xf]
        %v1595 = vld [vmem:[%s8 + $0x18] sm:$0xf]
        %v1596 = vld [vmem:[%s8 + $0x1c] sm:$0xf]
        %v1597 = vld [vmem:[%s8 + $0x20] sm:$0xf]
        %v1598 = vld [vmem:[%s8 + $0x24] sm:$0xf]
        %v1599 = vld [vmem:[%s8 + $0x28] sm:$0xf]
        %v1600 = vld [vmem:[%s8 + $0x2c] sm:$0xf]
        %v1601 = vld [vmem:[%s8 + $0x30] sm:$0xf]
        %v1602 = vld [vmem:[%s8 + $0x34] sm:$0xf]
        %v1603 = vld [vmem:[%s8 + $0x38] sm:$0xf]
        %v1604 = vld [vmem:[%s8 + $0x3c] sm:$0xf]
        %v1605 = vld [vmem:[%s8 + $0x40] sm:$0xf]
        %v1606 = vld [vmem:[%s8 + $0x44] sm:$0xf]
        %v1607 = vld [vmem:[%s8 + $0x48] sm:$0xf]
        %v1608 = vld [vmem:[%s8 + $0x4c] sm:$0xf]
        %v1609 = vld [vmem:[%s8 + $0x50] sm:$0xf]
        %v1610 = vld [vmem:[%s8 + $0x54] sm:$0xf]
        %v1611 = vld [vmem:[%s8 + $0x58] sm:$0xf]
        %v1612 = vld [vmem:[%s8 + $0x5c] sm:$0xf]
        %v1613 = vld [vmem:[%s8 + $0x60] sm:$0xf]
        %v1614 = vld [vmem:[%s8 + $0x64] sm:$0xf]
        %v1615 = vld [vmem:[%s8 + $0x68] sm:$0xf]
        %v1616 = vld [vmem:[%s8 + $0x6c] sm:$0xf]
        %v1617 = vld [vmem:[%s8 + $0x70] sm:$0xf]
        %v1618 = vld [vmem:[%s8 + $0x74] sm:$0xf]
        %v1619 = vld [vmem:[%s8 + $0x78] sm:$0xf]
        %v1620 = vld [vmem:[%s8 + $0x7c] sm:$0xf]
        %v1621 = vld [vmem:[%s8 + $0x80] sm:$0xf]
        %v1622 = vld [vmem:[%s8 + $0x84] sm:$0xf]
        %v1623 = vld [vmem:[%s8 + $0x88] sm:$0xf]
        %v1624 = vld [vmem:[%s8 + $0x8c] sm:$0xf]
        %v1625 = vld [vmem:[%s8 + $0x90] sm:$0xf]
        %v1626 = vld [vmem:[%s8 + $0x94] sm:$0xf]
        %v1627 = vld [vmem:[%s8 + $0x98] sm:$0xf]
        %v1628 = vld [vmem:[%s8 + $0x9c] sm:$0xf]
        %v1629 = vld [vmem:[%s8 + $0xa0] sm:$0xf]
        %v1630 = vld [vmem:[%s8 + $0xa4] sm:$0xf]
        %v1631 = vld [vmem:[%s8 + $0xa8] sm:$0xf]
        %v1632 = vld [vmem:[%s8 + $0xac] sm:$0xf]
        %v1633 = vld [vmem:[%s8 + $0xb0] sm:$0xf]
        %v1634 = vld [vmem:[%s8 + $0xb4] sm:$0xf]
        %v1635 = vld [vmem:[%s8 + $0xb8] sm:$0xf]
        %v1636 = vld [vmem:[%s8 + $0xbc] sm:$0xf]
        %v1637 = vlaneseq
        %v1638 = vshrl.u32 %v1637, 7
        %v1639 = vsub.s32 4, %v1638
        %v1640 = vrot.slane %v719, %v1639
        %v1689 = vunpack.c.l.b16 %v1589
        %v1690 = vunpack.c.l.b16 %v1590
        %v1691 = vunpack.c.l.b16 %v1591
        %v1692 = vunpack.c.l.b16 %v1592
        %v1693 = vunpack.c.l.b16 %v1593
        %v1694 = vunpack.c.l.b16 %v1594
        %v1695 = vunpack.c.l.b16 %v1595
        %v1696 = vunpack.c.l.b16 %v1596
        %v1697 = vunpack.c.l.b16 %v1597
        %v1698 = vunpack.c.l.b16 %v1598
        %v1699 = vunpack.c.l.b16 %v1599
        %v1700 = vunpack.c.l.b16 %v1600
        %v1701 = vunpack.c.l.b16 %v1601
        %v1702 = vunpack.c.l.b16 %v1602
        %v1703 = vunpack.c.l.b16 %v1603
        %v1704 = vunpack.c.l.b16 %v1604
        %v1705 = vunpack.c.l.b16 %v1605
        %v1706 = vunpack.c.l.b16 %v1606
        %v1707 = vunpack.c.l.b16 %v1607
        %v1708 = vunpack.c.l.b16 %v1608
        %v1709 = vunpack.c.l.b16 %v1609
        %v1710 = vunpack.c.l.b16 %v1610
        %v1711 = vunpack.c.l.b16 %v1611
        %v1712 = vunpack.c.l.b16 %v1612
        %v1713 = vunpack.c.l.b16 %v1613
        %v1714 = vunpack.c.l.b16 %v1614
        %v1715 = vunpack.c.l.b16 %v1615
        %v1716 = vunpack.c.l.b16 %v1616
        %v1717 = vunpack.c.l.b16 %v1617
        %v1718 = vunpack.c.l.b16 %v1618
        %v1719 = vunpack.c.l.b16 %v1619
        %v1720 = vunpack.c.l.b16 %v1620
        %v1721 = vunpack.c.l.b16 %v1621
        %v1722 = vunpack.c.l.b16 %v1622
        %v1723 = vunpack.c.l.b16 %v1623
        %v1724 = vunpack.c.l.b16 %v1624
        %v1725 = vunpack.c.l.b16 %v1625
        %v1726 = vunpack.c.l.b16 %v1626
        %v1727 = vunpack.c.l.b16 %v1627
        %v1728 = vunpack.c.l.b16 %v1628
        %v1729 = vunpack.c.l.b16 %v1629
        %v1730 = vunpack.c.l.b16 %v1630
        %v1731 = vunpack.c.l.b16 %v1631
        %v1732 = vunpack.c.l.b16 %v1632
        %v1733 = vunpack.c.l.b16 %v1633
        %v1734 = vunpack.c.l.b16 %v1634
        %v1735 = vunpack.c.l.b16 %v1635
        %v1736 = vunpack.c.l.b16 %v1636
        %v1737 = vpack.c.b16 %v1690, %v1689
        %v1738 = vpack.c.b16 %v1692, %v1691
        %v1739 = vpack.c.b16 %v1694, %v1693
        %v1740 = vpack.c.b16 %v1696, %v1695
        %v1741 = vpack.c.b16 %v1698, %v1697
        %v1742 = vpack.c.b16 %v1700, %v1699
        %v1743 = vpack.c.b16 %v1702, %v1701
        %v1744 = vpack.c.b16 %v1704, %v1703
        %v1745 = vpack.c.b16 %v1706, %v1705
        %v1746 = vpack.c.b16 %v1708, %v1707
        %v1747 = vpack.c.b16 %v1710, %v1709
        %v1748 = vpack.c.b16 %v1712, %v1711
        %v1749 = vpack.c.b16 %v1714, %v1713
        %v1750 = vpack.c.b16 %v1716, %v1715
        %v1751 = vpack.c.b16 %v1718, %v1717
        %v1752 = vpack.c.b16 %v1720, %v1719
        %v1753 = vpack.c.b16 %v1722, %v1721
        %v1754 = vpack.c.b16 %v1724, %v1723
        %v1755 = vpack.c.b16 %v1726, %v1725
        %v1756 = vpack.c.b16 %v1728, %v1727
        %v1757 = vpack.c.b16 %v1730, %v1729
        %v1758 = vpack.c.b16 %v1732, %v1731
        %v1759 = vpack.c.b16 %v1734, %v1733
        %v1760 = vpack.c.b16 %v1736, %v1735
        %1785 = vmatprep.subr.bf16.mxu0 0
        %1786 = vmatpush1.bf16.msra.mxu0 %v1744
        %1787 = vmatprep.subr.bf16.mxu0 0
        %1788 = vmatpush1.bf16.msra.mxu0 %v1743
        %1789 = vmatprep.subr.bf16.mxu0 0
        %1790 = vmatpush1.bf16.msra.mxu0 %v1742
        %1791 = vmatprep.subr.bf16.mxu0 0
        %1792 = vmatpush1.bf16.msra.mxu0 %v1741
        %1793 = vmatprep.subr.bf16.mxu0 0
        %1794 = vmatpush1.bf16.msra.mxu0 %v1740
        %1795 = vmatprep.subr.bf16.mxu0 0
        %1796 = vmatpush1.bf16.msra.mxu0 %v1739
        %1797 = vmatprep.subr.bf16.mxu0 0
        %1798 = vmatpush1.bf16.msra.mxu0 %v1738
        %1799 = vmatprep.subr.bf16.mxu0 0
        %1800 = vmatpush1.bf16.msra.mxu0 %v1737
        %1801 = vmatprep.subr.bf16.mxu0 0
        %1802 = vmatpush2.bf16.msra.mxu0 %v1752
        %1803 = vmatprep.subr.bf16.mxu0 0
        %1804 = vmatpush2.bf16.msra.mxu0 %v1751
        %1805 = vmatprep.subr.bf16.mxu0 0
        %1806 = vmatpush2.bf16.msra.mxu0 %v1750
        %1807 = vmatprep.subr.bf16.mxu0 0
        %1808 = vmatpush2.bf16.msra.mxu0 %v1749
        %1809 = vmatprep.subr.bf16.mxu0 0
        %1810 = vmatpush2.bf16.msra.mxu0 %v1748
        %1811 = vmatprep.subr.bf16.mxu0 0
        %1812 = vmatpush2.bf16.msra.mxu0 %v1747
        %1813 = vmatprep.subr.bf16.mxu0 0
        %1814 = vmatpush2.bf16.msra.mxu0 %v1746
        %1815 = vmatprep.subr.bf16.mxu0 0
        %1816 = vmatpush2.bf16.msra.mxu0 %v1745
        %1817 = vmatprep.mubr.bf16.mxu0 %v1575
        %1818 = vmatmul.mubr.bf16.gmra.mxu0 %v1584
        %v1819 = vpop.f32.mrf.mxu0
        %v1820 = vadd.f32 %v1640, %v1819
        %v1821 = vpop.f32.mrf.mxu0
        %v1822 = vpop.f32.mrf.mxu0
        %v1823 = vpop.f32.mrf.mxu0
        %1824 = vdwg.mxu0
        %1825 = vmatprep.subr.bf16.mxu0 0
        %1826 = vmatpush1.bf16.msra.mxu0 %v1760
        %1827 = vmatprep.subr.bf16.mxu0 0
        %1828 = vmatpush1.bf16.msra.mxu0 %v1759
        %1829 = vmatprep.subr.bf16.mxu0 0
        %1830 = vmatpush1.bf16.msra.mxu0 %v1758
        %1831 = vmatprep.subr.bf16.mxu0 0
        %1832 = vmatpush1.bf16.msra.mxu0 %v1757
        %1833 = vmatprep.subr.bf16.mxu0 0
        %1834 = vmatpush1.bf16.msra.mxu0 %v1756
        %1835 = vmatprep.subr.bf16.mxu0 0
        %1836 = vmatpush1.bf16.msra.mxu0 %v1755
        %1837 = vmatprep.subr.bf16.mxu0 0
        %1838 = vmatpush1.bf16.msra.mxu0 %v1754
        %1839 = vmatprep.subr.bf16.mxu0 0
        %1840 = vmatpush1.bf16.msra.mxu0 %v1753
        %1841 = vmatprep.subr.bf16.mxu0 0
        %1842 = vmatpush2.bf16.msra.mxu0 0
        %1843 = vmatprep.subr.bf16.mxu0 0
        %1844 = vmatpush2.bf16.msra.mxu0 0
        %1845 = vmatprep.subr.bf16.mxu0 0
        %1846 = vmatpush2.bf16.msra.mxu0 0
        %1847 = vmatprep.subr.bf16.mxu0 0
        %1848 = vmatpush2.bf16.msra.mxu0 0
        %1849 = vmatprep.subr.bf16.mxu0 0
        %1850 = vmatpush2.bf16.msra.mxu0 0
        %1851 = vmatprep.subr.bf16.mxu0 0
        %1852 = vmatpush2.bf16.msra.mxu0 0
        %1853 = vmatprep.subr.bf16.mxu0 0
        %1854 = vmatpush2.bf16.msra.mxu0 0
        %1855 = vmatprep.subr.bf16.mxu0 0
        %1856 = vmatpush2.bf16.msra.mxu0 0
        %1857 = vmatprep.mubr.bf16.mxu0 0
        %1858 = vmatmul.mubr.bf16.gmra.mxu0 %v1588
        %v1859 = vpop.f32.mrf.mxu0
        %v1860 = vadd.f32 %v1820, %v1859
        %v1861 = vpop.f32.mrf.mxu0
        %v1862 = vpop.f32.mrf.mxu0
        %v1863 = vpop.f32.mrf.mxu0
        %1864 = vdwg.mxu0
        %v1865 = vld [vmem:[%s9] sm:$0xf]
        %v1866 = vld [vmem:[%s9 + $0x4] sm:$0xf]
        %v1867 = vld [vmem:[%s9 + $0x8] sm:$0xf]
        %v1868 = vld [vmem:[%s9 + $0xc] sm:$0xf]
        %v1869 = vld [vmem:[%s9 + $0x10] sm:$0xf]
        %v1870 = vld [vmem:[%s9 + $0x14] sm:$0xf]
        %v1871 = vld [vmem:[%s9 + $0x18] sm:$0xf]
        %v1872 = vld [vmem:[%s9 + $0x1c] sm:$0xf]
        %v1873 = vpack.c.bf16 %v1396, %v1396
        %v1874 = vlaneseq
        %v1875 = vshrl.u32 %v1874, 7
        %v1876 = vsub.s32 5, %v1875
        %v1877 = vrot.slane %v719, %v1876
        %v1886 = vunpack.c.l.b16 %v1865
        %v1887 = vunpack.c.l.b16 %v1866
        %v1888 = vunpack.c.l.b16 %v1867
        %v1889 = vunpack.c.l.b16 %v1868
        %v1890 = vunpack.c.l.b16 %v1869
        %v1891 = vunpack.c.l.b16 %v1870
        %v1892 = vunpack.c.l.b16 %v1871
        %v1893 = vunpack.c.l.b16 %v1872
        %v1894 = vpack.c.b16 %v1887, %v1886
        %v1895 = vpack.c.b16 %v1889, %v1888
        %v1896 = vpack.c.b16 %v1891, %v1890
        %v1897 = vpack.c.b16 %v1893, %v1892
        %v1903 = vsel %vm1424, %v1873, 0
        %1905 = vmatprep.subr.bf16.mxu0 0
        %1906 = vmatpush1.bf16.msra.mxu0 0
        %1907 = vmatprep.subr.bf16.mxu0 0
        %1908 = vmatpush1.bf16.msra.mxu0 0
        %1909 = vmatprep.subr.bf16.mxu0 0
        %1910 = vmatpush1.bf16.msra.mxu0 0
        %1911 = vmatprep.subr.bf16.mxu0 0
        %1912 = vmatpush1.bf16.msra.mxu0 0
        %1913 = vmatprep.subr.bf16.mxu0 0
        %1914 = vmatpush1.bf16.msra.mxu0 %v1897
        %1915 = vmatprep.subr.bf16.mxu0 0
        %1916 = vmatpush1.bf16.msra.mxu0 %v1896
        %1917 = vmatprep.subr.bf16.mxu0 0
        %1918 = vmatpush1.bf16.msra.mxu0 %v1895
        %1919 = vmatprep.subr.bf16.mxu0 0
        %1920 = vmatpush1.bf16.msra.mxu0 %v1894
        %1921 = vmatprep.subr.bf16.mxu0 0
        %1922 = vmatpush2.bf16.msra.mxu0 0
        %1923 = vmatprep.subr.bf16.mxu0 0
        %1924 = vmatpush2.bf16.msra.mxu0 0
        %1925 = vmatprep.subr.bf16.mxu0 0
        %1926 = vmatpush2.bf16.msra.mxu0 0
        %1927 = vmatprep.subr.bf16.mxu0 0
        %1928 = vmatpush2.bf16.msra.mxu0 0
        %1929 = vmatprep.subr.bf16.mxu0 0
        %1930 = vmatpush2.bf16.msra.mxu0 0
        %1931 = vmatprep.subr.bf16.mxu0 0
        %1932 = vmatpush2.bf16.msra.mxu0 0
        %1933 = vmatprep.subr.bf16.mxu0 0
        %1934 = vmatpush2.bf16.msra.mxu0 0
        %1935 = vmatprep.subr.bf16.mxu0 0
        %1936 = vmatpush2.bf16.msra.mxu0 0
        %1937 = vmatprep.mubr.bf16.mxu0 0
        %1938 = vmatmul.mubr.bf16.gmra.mxu0 %v1903
        %v1939 = vpop.f32.mrf.mxu0
        %v1940 = vadd.f32 %v1877, %v1939
        %v1941 = vpop.f32.mrf.mxu0
        %v1942 = vpop.f32.mrf.mxu0
        %v1943 = vpop.f32.mrf.mxu0
        %1944 = vdwg.mxu0
        %v1945 = vadd.f32 %v1860, %v1940
        %v1946 = vld [vmem:[%s10] sm:$0x3]
        %v1947 = vpack.c.bf16 %v1945, %v1945
        %vm1948 = vcmask 64512
        %v1950 = vsel %vm1948, %v1946, 0
        %vm1952 = vcmask 1043456
        %v1954 = vsel %vm1952, %v1947, 0
        %1956 = vmatprep.subr.bf16.mxu0 0
        %1957 = vmatpush1.bf16.msra.mxu0 0
        %1958 = vmatprep.subr.bf16.mxu0 0
        %1959 = vmatpush1.bf16.msra.mxu0 0
        %1960 = vmatprep.subr.bf16.mxu0 0
        %1961 = vmatpush1.bf16.msra.mxu0 0
        %1962 = vmatprep.subr.bf16.mxu0 0
        %1963 = vmatpush1.bf16.msra.mxu0 0
        %1964 = vmatprep.subr.bf16.mxu0 0
        %1965 = vmatpush1.bf16.msra.mxu0 0
        %1966 = vmatprep.subr.bf16.mxu0 0
        %1967 = vmatpush1.bf16.msra.mxu0 0
        %1968 = vmatprep.subr.bf16.mxu0 0
        %1969 = vmatpush1.bf16.msra.mxu0 0
        %1970 = vmatprep.subr.bf16.mxu0 0
        %1971 = vmatpush1.bf16.msra.mxu0 %v1954
        %1972 = vmatprep.subr.bf16.mxu0 0
        %1973 = vmatpush2.bf16.msra.mxu0 0
        %1974 = vmatprep.subr.bf16.mxu0 0
        %1975 = vmatpush2.bf16.msra.mxu0 0
        %1976 = vmatprep.subr.bf16.mxu0 0
        %1977 = vmatpush2.bf16.msra.mxu0 0
        %1978 = vmatprep.subr.bf16.mxu0 0
        %1979 = vmatpush2.bf16.msra.mxu0 0
        %1980 = vmatprep.subr.bf16.mxu0 0
        %1981 = vmatpush2.bf16.msra.mxu0 0
        %1982 = vmatprep.subr.bf16.mxu0 0
        %1983 = vmatpush2.bf16.msra.mxu0 0
        %1984 = vmatprep.subr.bf16.mxu0 0
        %1985 = vmatpush2.bf16.msra.mxu0 0
        %1986 = vmatprep.subr.bf16.mxu0 0
        %1987 = vmatpush2.bf16.msra.mxu0 0
        %1988 = vmatprep.mubr.bf16.mxu0 0
        %1989 = vmatmul.mubr.bf16.gmra.mxu0 %v1950
        %v1990 = vpop.f32.mrf.mxu0
        %v1991 = vadd.f32 0.0, %v1990
        %v1992 = vpop.f32.mrf.mxu0
        %v1993 = vpop.f32.mrf.mxu0
        %v1994 = vpop.f32.mrf.mxu0
        %1995 = vdwg.mxu0
        %v1996 = vld [vmem:[%s11] sm:$0xf]
        %v1997 = vld [vmem:[%s11 + $0x4] sm:$0xf]
        %v1998 = vld [vmem:[%s11 + $0x8] sm:$0xf]
        %v1999 = vld [vmem:[%s11 + $0xc] sm:$0xf]
        %v2000 = vld [vmem:[%s11 + $0x10] sm:$0xf]
        %v2001 = vld [vmem:[%s11 + $0x14] sm:$0xf]
        %v2002 = vld [vmem:[%s11 + $0x18] sm:$0xf]
        %v2003 = vld [vmem:[%s11 + $0x1c] sm:$0xf]
        %v2004 = vld [vmem:[%s11 + $0x20] sm:$0xf]
        %v2005 = vld [vmem:[%s11 + $0x24] sm:$0xf]
        %v2006 = vld [vmem:[%s11 + $0x28] sm:$0xf]
        %v2007 = vld [vmem:[%s11 + $0x2c] sm:$0xf]
        %v2008 = vld [vmem:[%s11 + $0x30] sm:$0xf]
        %v2009 = vld [vmem:[%s11 + $0x34] sm:$0xf]
        %v2010 = vld [vmem:[%s11 + $0x38] sm:$0xf]
        %v2011 = vld [vmem:[%s11 + $0x3c] sm:$0xf]
        %v2012 = vpack.c.bf16 %v1991, %v1991
        %v2029 = vunpack.c.l.b16 %v1996
        %v2030 = vunpack.c.l.b16 %v1997
        %v2031 = vunpack.c.l.b16 %v1998
        %v2032 = vunpack.c.l.b16 %v1999
        %v2033 = vunpack.c.l.b16 %v2000
        %v2034 = vunpack.c.l.b16 %v2001
        %v2035 = vunpack.c.l.b16 %v2002
        %v2036 = vunpack.c.l.b16 %v2003
        %v2037 = vunpack.c.l.b16 %v2004
        %v2038 = vunpack.c.l.b16 %v2005
        %v2039 = vunpack.c.l.b16 %v2006
        %v2040 = vunpack.c.l.b16 %v2007
        %v2041 = vunpack.c.l.b16 %v2008
        %v2042 = vunpack.c.l.b16 %v2009
        %v2043 = vunpack.c.l.b16 %v2010
        %v2044 = vunpack.c.l.b16 %v2011
        %v2045 = vpack.c.b16 %v2030, %v2029
        %v2046 = vpack.c.b16 %v2032, %v2031
        %v2047 = vpack.c.b16 %v2034, %v2033
        %v2048 = vpack.c.b16 %v2036, %v2035
        %v2049 = vpack.c.b16 %v2038, %v2037
        %v2050 = vpack.c.b16 %v2040, %v2039
        %v2051 = vpack.c.b16 %v2042, %v2041
        %v2052 = vpack.c.b16 %v2044, %v2043
        %2061 = vmatprep.subr.bf16.mxu0 0
        %2062 = vmatpush1.bf16.msra.mxu0 %v2052
        %2063 = vmatprep.subr.bf16.mxu0 0
        %2064 = vmatpush1.bf16.msra.mxu0 %v2051
        %2065 = vmatprep.subr.bf16.mxu0 0
        %2066 = vmatpush1.bf16.msra.mxu0 %v2050
        %2067 = vmatprep.subr.bf16.mxu0 0
        %2068 = vmatpush1.bf16.msra.mxu0 %v2049
        %2069 = vmatprep.subr.bf16.mxu0 0
        %2070 = vmatpush1.bf16.msra.mxu0 %v2048
        %2071 = vmatprep.subr.bf16.mxu0 0
        %2072 = vmatpush1.bf16.msra.mxu0 %v2047
        %2073 = vmatprep.subr.bf16.mxu0 0
        %2074 = vmatpush1.bf16.msra.mxu0 %v2046
        %2075 = vmatprep.subr.bf16.mxu0 0
        %2076 = vmatpush1.bf16.msra.mxu0 %v2045
        %2077 = vmatprep.subr.bf16.mxu0 0
        %2078 = vmatpush2.bf16.msra.mxu0 0
        %2079 = vmatprep.subr.bf16.mxu0 0
        %2080 = vmatpush2.bf16.msra.mxu0 0
        %2081 = vmatprep.subr.bf16.mxu0 0
        %2082 = vmatpush2.bf16.msra.mxu0 0
        %2083 = vmatprep.subr.bf16.mxu0 0
        %2084 = vmatpush2.bf16.msra.mxu0 0
        %2085 = vmatprep.subr.bf16.mxu0 0
        %2086 = vmatpush2.bf16.msra.mxu0 0
        %2087 = vmatprep.subr.bf16.mxu0 0
        %2088 = vmatpush2.bf16.msra.mxu0 0
        %2089 = vmatprep.subr.bf16.mxu0 0
        %2090 = vmatpush2.bf16.msra.mxu0 0
        %2091 = vmatprep.subr.bf16.mxu0 0
        %2092 = vmatpush2.bf16.msra.mxu0 0
        %2093 = vmatprep.mubr.bf16.mxu0 0
        %2094 = vmatmul.mubr.bf16.gmra.mxu0 %v2012
        %v2095 = vpop.f32.mrf.mxu0
        %v2096 = vadd.f32 0.0, %v2095
        %v2097 = vpop.f32.mrf.mxu0
        %v2098 = vpop.f32.mrf.mxu0
        %v2099 = vpop.f32.mrf.mxu0
        %2100 = vdwg.mxu0
        %vm2101 = vcmp.ge.f32.partialorder %v2096, 0.0
        %v2102 = vmul.f32 %v2096, 0.2
        %v2103 = vsel %vm2101, %v2096, %v2102
        %v2104 = vpack.c.bf16 %v2103, %v2103
        %v2106 = vshrl.u32 %v2104, 16
        %v2108 = vrot.slane %v2106, 7
        %v2109 = vshll.u32 %v2104, 16
        %v2111 = vor.u32 %v2108, %v2109
        %v2113 = vsel %vm738, 0, %v2111
        %v2114 = vrot.slane %v2109, 1
        %v2115 = vor.u32 %v2106, %v2114
        %vm2117 = vcmask 1041408
        %vm2118 = vsmask.f32 1280
        %vm2119 = vmand %vm2117, %vm2118
        %v2120 = vsel %vm2119, %v2115, 0
        %2122 = vrot.lane.b32.xlu0 %v2104, 64
        %v2123 = vpop.permute.xlu0 %2122
        %v2126 = vsel %vm1424, %v2113, %v2123
        %v2128 = vld [vmem:[%s12] sm:$0xf]
        %v2129 = vld [vmem:[%s12 + $0x4] sm:$0xf]
        %v2130 = vld [vmem:[%s12 + $0x8] sm:$0xf]
        %v2131 = vld [vmem:[%s12 + $0xc] sm:$0xf]
        %v2132 = vld [vmem:[%s12 + $0x10] sm:$0xf]
        %v2133 = vld [vmem:[%s12 + $0x14] sm:$0xf]
        %v2134 = vld [vmem:[%s12 + $0x18] sm:$0xf]
        %v2135 = vld [vmem:[%s12 + $0x1c] sm:$0xf]
        %v2136 = vld [vmem:[%s12 + $0x20] sm:$0xf]
        %v2137 = vld [vmem:[%s12 + $0x24] sm:$0xf]
        %v2138 = vld [vmem:[%s12 + $0x28] sm:$0xf]
        %v2139 = vld [vmem:[%s12 + $0x2c] sm:$0xf]
        %v2140 = vld [vmem:[%s12 + $0x30] sm:$0xf]
        %v2141 = vld [vmem:[%s12 + $0x34] sm:$0xf]
        %v2142 = vld [vmem:[%s12 + $0x38] sm:$0xf]
        %v2143 = vld [vmem:[%s12 + $0x3c] sm:$0xf]
        %v2144 = vld [vmem:[%s12 + $0x40] sm:$0xf]
        %v2145 = vld [vmem:[%s12 + $0x44] sm:$0xf]
        %v2146 = vld [vmem:[%s12 + $0x48] sm:$0xf]
        %v2147 = vld [vmem:[%s12 + $0x4c] sm:$0xf]
        %v2148 = vld [vmem:[%s12 + $0x50] sm:$0xf]
        %v2149 = vld [vmem:[%s12 + $0x54] sm:$0xf]
        %v2150 = vld [vmem:[%s12 + $0x58] sm:$0xf]
        %v2151 = vld [vmem:[%s12 + $0x5c] sm:$0xf]
        %v2152 = vlaneseq
        %v2153 = vshrl.u32 %v2152, 7
        %v2154 = vsub.s32 6, %v2153
        %v2155 = vrot.slane %v719, %v2154
        %v2180 = vunpack.c.l.b16 %v2128
        %v2181 = vunpack.c.l.b16 %v2129
        %v2182 = vunpack.c.l.b16 %v2130
        %v2183 = vunpack.c.l.b16 %v2131
        %v2184 = vunpack.c.l.b16 %v2132
        %v2185 = vunpack.c.l.b16 %v2133
        %v2186 = vunpack.c.l.b16 %v2134
        %v2187 = vunpack.c.l.b16 %v2135
        %v2188 = vunpack.c.l.b16 %v2136
        %v2189 = vunpack.c.l.b16 %v2137
        %v2190 = vunpack.c.l.b16 %v2138
        %v2191 = vunpack.c.l.b16 %v2139
        %v2192 = vunpack.c.l.b16 %v2140
        %v2193 = vunpack.c.l.b16 %v2141
        %v2194 = vunpack.c.l.b16 %v2142
        %v2195 = vunpack.c.l.b16 %v2143
        %v2196 = vunpack.c.l.b16 %v2144
        %v2197 = vunpack.c.l.b16 %v2145
        %v2198 = vunpack.c.l.b16 %v2146
        %v2199 = vunpack.c.l.b16 %v2147
        %v2200 = vunpack.c.l.b16 %v2148
        %v2201 = vunpack.c.l.b16 %v2149
        %v2202 = vunpack.c.l.b16 %v2150
        %v2203 = vunpack.c.l.b16 %v2151
        %v2204 = vpack.c.b16 %v2181, %v2180
        %v2205 = vpack.c.b16 %v2183, %v2182
        %v2206 = vpack.c.b16 %v2185, %v2184
        %v2207 = vpack.c.b16 %v2187, %v2186
        %v2208 = vpack.c.b16 %v2189, %v2188
        %v2209 = vpack.c.b16 %v2191, %v2190
        %v2210 = vpack.c.b16 %v2193, %v2192
        %v2211 = vpack.c.b16 %v2195, %v2194
        %v2212 = vpack.c.b16 %v2197, %v2196
        %v2213 = vpack.c.b16 %v2199, %v2198
        %v2214 = vpack.c.b16 %v2201, %v2200
        %v2215 = vpack.c.b16 %v2203, %v2202
        %v2229 = vsel %vm1424, %v2120, 0
        %2231 = vmatprep.subr.bf16.mxu0 0
        %2232 = vmatpush1.bf16.msra.mxu0 %v2211
        %2233 = vmatprep.subr.bf16.mxu0 0
        %2234 = vmatpush1.bf16.msra.mxu0 %v2210
        %2235 = vmatprep.subr.bf16.mxu0 0
        %2236 = vmatpush1.bf16.msra.mxu0 %v2209
        %2237 = vmatprep.subr.bf16.mxu0 0
        %2238 = vmatpush1.bf16.msra.mxu0 %v2208
        %2239 = vmatprep.subr.bf16.mxu0 0
        %2240 = vmatpush1.bf16.msra.mxu0 %v2207
        %2241 = vmatprep.subr.bf16.mxu0 0
        %2242 = vmatpush1.bf16.msra.mxu0 %v2206
        %2243 = vmatprep.subr.bf16.mxu0 0
        %2244 = vmatpush1.bf16.msra.mxu0 %v2205
        %2245 = vmatprep.subr.bf16.mxu0 0
        %2246 = vmatpush1.bf16.msra.mxu0 %v2204
        %2247 = vmatprep.subr.bf16.mxu0 0
        %2248 = vmatpush2.bf16.msra.mxu0 0
        %2249 = vmatprep.subr.bf16.mxu0 0
        %2250 = vmatpush2.bf16.msra.mxu0 0
        %2251 = vmatprep.subr.bf16.mxu0 0
        %2252 = vmatpush2.bf16.msra.mxu0 0
        %2253 = vmatprep.subr.bf16.mxu0 0
        %2254 = vmatpush2.bf16.msra.mxu0 0
        %2255 = vmatprep.subr.bf16.mxu0 0
        %2256 = vmatpush2.bf16.msra.mxu0 %v2215
        %2257 = vmatprep.subr.bf16.mxu0 0
        %2258 = vmatpush2.bf16.msra.mxu0 %v2214
        %2259 = vmatprep.subr.bf16.mxu0 0
        %2260 = vmatpush2.bf16.msra.mxu0 %v2213
        %2261 = vmatprep.subr.bf16.mxu0 0
        %2262 = vmatpush2.bf16.msra.mxu0 %v2212
        %2263 = vmatprep.mubr.bf16.mxu0 %v2229
        %2264 = vmatmul.mubr.bf16.gmra.mxu0 %v2126
        %v2265 = vpop.f32.mrf.mxu0
        %v2266 = vadd.f32 %v2155, %v2265
        %v2267 = vpop.f32.mrf.mxu0
        %v2268 = vpop.f32.mrf.mxu0
        %v2269 = vpop.f32.mrf.mxu0
        %2270 = vdwg.mxu0
        %vm2271 = vcmp.ge.f32.partialorder %v2266, 0.0
        %v2272 = vmul.f32 %v2266, 0.2
        %v2273 = vsel %vm2271, %v2266, %v2272
        %v2274 = vpack.c.bf16 %v2273, %v2273
        %v2276 = vshrl.u32 %v2274, 16
        %v2278 = vrot.slane %v2276, 7
        %v2279 = vshll.u32 %v2274, 16
        %v2281 = vor.u32 %v2278, %v2279
        %v2283 = vsel %vm738, 0, %v2281
        %v2284 = vrot.slane %v2279, 1
        %v2285 = vor.u32 %v2276, %v2284
        %v2287 = vsel %vm2119, %v2285, 0
        %v2288 = vld [vmem:[%s13] sm:$0xf]
        %v2289 = vld [vmem:[%s13 + $0x4] sm:$0xf]
        %v2290 = vld [vmem:[%s13 + $0x8] sm:$0xf]
        %v2291 = vld [vmem:[%s13 + $0xc] sm:$0xf]
        %v2292 = vld [vmem:[%s13 + $0x10] sm:$0xf]
        %v2293 = vld [vmem:[%s13 + $0x14] sm:$0xf]
        %v2294 = vld [vmem:[%s13 + $0x18] sm:$0xf]
        %v2295 = vld [vmem:[%s13 + $0x1c] sm:$0xf]
        %v2296 = vld [vmem:[%s13 + $0x20] sm:$0xf]
        %v2297 = vld [vmem:[%s13 + $0x24] sm:$0xf]
        %v2298 = vld [vmem:[%s13 + $0x28] sm:$0xf]
        %v2299 = vld [vmem:[%s13 + $0x2c] sm:$0xf]
        %v2300 = vld [vmem:[%s13 + $0x30] sm:$0xf]
        %v2301 = vld [vmem:[%s13 + $0x34] sm:$0xf]
        %v2302 = vld [vmem:[%s13 + $0x38] sm:$0xf]
        %v2303 = vld [vmem:[%s13 + $0x3c] sm:$0xf]
        %v2304 = vld [vmem:[%s13 + $0x40] sm:$0xf]
        %v2305 = vld [vmem:[%s13 + $0x44] sm:$0xf]
        %v2306 = vld [vmem:[%s13 + $0x48] sm:$0xf]
        %v2307 = vld [vmem:[%s13 + $0x4c] sm:$0xf]
        %v2308 = vld [vmem:[%s13 + $0x50] sm:$0xf]
        %v2309 = vld [vmem:[%s13 + $0x54] sm:$0xf]
        %v2310 = vld [vmem:[%s13 + $0x58] sm:$0xf]
        %v2311 = vld [vmem:[%s13 + $0x5c] sm:$0xf]
        %v2312 = vld [vmem:[%s13 + $0x60] sm:$0xf]
        %v2313 = vld [vmem:[%s13 + $0x64] sm:$0xf]
        %v2314 = vld [vmem:[%s13 + $0x68] sm:$0xf]
        %v2315 = vld [vmem:[%s13 + $0x6c] sm:$0xf]
        %v2316 = vld [vmem:[%s13 + $0x70] sm:$0xf]
        %v2317 = vld [vmem:[%s13 + $0x74] sm:$0xf]
        %v2318 = vld [vmem:[%s13 + $0x78] sm:$0xf]
        %v2319 = vld [vmem:[%s13 + $0x7c] sm:$0xf]
        %v2320 = vld [vmem:[%s13 + $0x80] sm:$0xf]
        %v2321 = vld [vmem:[%s13 + $0x84] sm:$0xf]
        %v2322 = vld [vmem:[%s13 + $0x88] sm:$0xf]
        %v2323 = vld [vmem:[%s13 + $0x8c] sm:$0xf]
        %v2324 = vld [vmem:[%s13 + $0x90] sm:$0xf]
        %v2325 = vld [vmem:[%s13 + $0x94] sm:$0xf]
        %v2326 = vld [vmem:[%s13 + $0x98] sm:$0xf]
        %v2327 = vld [vmem:[%s13 + $0x9c] sm:$0xf]
        %v2328 = vld [vmem:[%s13 + $0xa0] sm:$0xf]
        %v2329 = vld [vmem:[%s13 + $0xa4] sm:$0xf]
        %v2330 = vld [vmem:[%s13 + $0xa8] sm:$0xf]
        %v2331 = vld [vmem:[%s13 + $0xac] sm:$0xf]
        %v2332 = vld [vmem:[%s13 + $0xb0] sm:$0xf]
        %v2333 = vld [vmem:[%s13 + $0xb4] sm:$0xf]
        %v2334 = vld [vmem:[%s13 + $0xb8] sm:$0xf]
        %v2335 = vld [vmem:[%s13 + $0xbc] sm:$0xf]
        %v2336 = vlaneseq
        %v2337 = vshrl.u32 %v2336, 7
        %v2338 = vsub.s32 7, %v2337
        %v2339 = vrot.slane %v719, %v2338
        %v2388 = vunpack.c.l.b16 %v2288
        %v2389 = vunpack.c.l.b16 %v2289
        %v2390 = vunpack.c.l.b16 %v2290
        %v2391 = vunpack.c.l.b16 %v2291
        %v2392 = vunpack.c.l.b16 %v2292
        %v2393 = vunpack.c.l.b16 %v2293
        %v2394 = vunpack.c.l.b16 %v2294
        %v2395 = vunpack.c.l.b16 %v2295
        %v2396 = vunpack.c.l.b16 %v2296
        %v2397 = vunpack.c.l.b16 %v2297
        %v2398 = vunpack.c.l.b16 %v2298
        %v2399 = vunpack.c.l.b16 %v2299
        %v2400 = vunpack.c.l.b16 %v2300
        %v2401 = vunpack.c.l.b16 %v2301
        %v2402 = vunpack.c.l.b16 %v2302
        %v2403 = vunpack.c.l.b16 %v2303
        %v2404 = vunpack.c.l.b16 %v2304
        %v2405 = vunpack.c.l.b16 %v2305
        %v2406 = vunpack.c.l.b16 %v2306
        %v2407 = vunpack.c.l.b16 %v2307
        %v2408 = vunpack.c.l.b16 %v2308
        %v2409 = vunpack.c.l.b16 %v2309
        %v2410 = vunpack.c.l.b16 %v2310
        %v2411 = vunpack.c.l.b16 %v2311
        %v2412 = vunpack.c.l.b16 %v2312
        %v2413 = vunpack.c.l.b16 %v2313
        %v2414 = vunpack.c.l.b16 %v2314
        %v2415 = vunpack.c.l.b16 %v2315
        %v2416 = vunpack.c.l.b16 %v2316
        %v2417 = vunpack.c.l.b16 %v2317
        %v2418 = vunpack.c.l.b16 %v2318
        %v2419 = vunpack.c.l.b16 %v2319
        %v2420 = vunpack.c.l.b16 %v2320
        %v2421 = vunpack.c.l.b16 %v2321
        %v2422 = vunpack.c.l.b16 %v2322
        %v2423 = vunpack.c.l.b16 %v2323
        %v2424 = vunpack.c.l.b16 %v2324
        %v2425 = vunpack.c.l.b16 %v2325
        %v2426 = vunpack.c.l.b16 %v2326
        %v2427 = vunpack.c.l.b16 %v2327
        %v2428 = vunpack.c.l.b16 %v2328
        %v2429 = vunpack.c.l.b16 %v2329
        %v2430 = vunpack.c.l.b16 %v2330
        %v2431 = vunpack.c.l.b16 %v2331
        %v2432 = vunpack.c.l.b16 %v2332
        %v2433 = vunpack.c.l.b16 %v2333
        %v2434 = vunpack.c.l.b16 %v2334
        %v2435 = vunpack.c.l.b16 %v2335
        %v2436 = vpack.c.b16 %v2389, %v2388
        %v2437 = vpack.c.b16 %v2391, %v2390
        %v2438 = vpack.c.b16 %v2393, %v2392
        %v2439 = vpack.c.b16 %v2395, %v2394
        %v2440 = vpack.c.b16 %v2397, %v2396
        %v2441 = vpack.c.b16 %v2399, %v2398
        %v2442 = vpack.c.b16 %v2401, %v2400
        %v2443 = vpack.c.b16 %v2403, %v2402
        %v2444 = vpack.c.b16 %v2405, %v2404
        %v2445 = vpack.c.b16 %v2407, %v2406
        %v2446 = vpack.c.b16 %v2409, %v2408
        %v2447 = vpack.c.b16 %v2411, %v2410
        %v2448 = vpack.c.b16 %v2413, %v2412
        %v2449 = vpack.c.b16 %v2415, %v2414
        %v2450 = vpack.c.b16 %v2417, %v2416
        %v2451 = vpack.c.b16 %v2419, %v2418
        %v2452 = vpack.c.b16 %v2421, %v2420
        %v2453 = vpack.c.b16 %v2423, %v2422
        %v2454 = vpack.c.b16 %v2425, %v2424
        %v2455 = vpack.c.b16 %v2427, %v2426
        %v2456 = vpack.c.b16 %v2429, %v2428
        %v2457 = vpack.c.b16 %v2431, %v2430
        %v2458 = vpack.c.b16 %v2433, %v2432
        %v2459 = vpack.c.b16 %v2435, %v2434
        %2484 = vmatprep.subr.bf16.mxu0 0
        %2485 = vmatpush1.bf16.msra.mxu0 %v2443
        %2486 = vmatprep.subr.bf16.mxu0 0
        %2487 = vmatpush1.bf16.msra.mxu0 %v2442
        %2488 = vmatprep.subr.bf16.mxu0 0
        %2489 = vmatpush1.bf16.msra.mxu0 %v2441
        %2490 = vmatprep.subr.bf16.mxu0 0
        %2491 = vmatpush1.bf16.msra.mxu0 %v2440
        %2492 = vmatprep.subr.bf16.mxu0 0
        %2493 = vmatpush1.bf16.msra.mxu0 %v2439
        %2494 = vmatprep.subr.bf16.mxu0 0
        %2495 = vmatpush1.bf16.msra.mxu0 %v2438
        %2496 = vmatprep.subr.bf16.mxu0 0
        %2497 = vmatpush1.bf16.msra.mxu0 %v2437
        %2498 = vmatprep.subr.bf16.mxu0 0
        %2499 = vmatpush1.bf16.msra.mxu0 %v2436
        %2500 = vmatprep.subr.bf16.mxu0 0
        %2501 = vmatpush2.bf16.msra.mxu0 %v2451
        %2502 = vmatprep.subr.bf16.mxu0 0
        %2503 = vmatpush2.bf16.msra.mxu0 %v2450
        %2504 = vmatprep.subr.bf16.mxu0 0
        %2505 = vmatpush2.bf16.msra.mxu0 %v2449
        %2506 = vmatprep.subr.bf16.mxu0 0
        %2507 = vmatpush2.bf16.msra.mxu0 %v2448
        %2508 = vmatprep.subr.bf16.mxu0 0
        %2509 = vmatpush2.bf16.msra.mxu0 %v2447
        %2510 = vmatprep.subr.bf16.mxu0 0
        %2511 = vmatpush2.bf16.msra.mxu0 %v2446
        %2512 = vmatprep.subr.bf16.mxu0 0
        %2513 = vmatpush2.bf16.msra.mxu0 %v2445
        %2514 = vmatprep.subr.bf16.mxu0 0
        %2515 = vmatpush2.bf16.msra.mxu0 %v2444
        %2516 = vmatprep.mubr.bf16.mxu0 %v2274
        %2517 = vmatmul.mubr.bf16.gmra.mxu0 %v2283
        %v2518 = vpop.f32.mrf.mxu0
        %v2519 = vadd.f32 %v2339, %v2518
        %v2520 = vpop.f32.mrf.mxu0
        %v2521 = vpop.f32.mrf.mxu0
        %v2522 = vpop.f32.mrf.mxu0
        %2523 = vdwg.mxu0
        %2524 = vmatprep.subr.bf16.mxu0 0
        %2525 = vmatpush1.bf16.msra.mxu0 %v2459
        %2526 = vmatprep.subr.bf16.mxu0 0
        %2527 = vmatpush1.bf16.msra.mxu0 %v2458
        %2528 = vmatprep.subr.bf16.mxu0 0
        %2529 = vmatpush1.bf16.msra.mxu0 %v2457
        %2530 = vmatprep.subr.bf16.mxu0 0
        %2531 = vmatpush1.bf16.msra.mxu0 %v2456
        %2532 = vmatprep.subr.bf16.mxu0 0
        %2533 = vmatpush1.bf16.msra.mxu0 %v2455
        %2534 = vmatprep.subr.bf16.mxu0 0
        %2535 = vmatpush1.bf16.msra.mxu0 %v2454
        %2536 = vmatprep.subr.bf16.mxu0 0
        %2537 = vmatpush1.bf16.msra.mxu0 %v2453
        %2538 = vmatprep.subr.bf16.mxu0 0
        %2539 = vmatpush1.bf16.msra.mxu0 %v2452
        %2540 = vmatprep.subr.bf16.mxu0 0
        %2541 = vmatpush2.bf16.msra.mxu0 0
        %2542 = vmatprep.subr.bf16.mxu0 0
        %2543 = vmatpush2.bf16.msra.mxu0 0
        %2544 = vmatprep.subr.bf16.mxu0 0
        %2545 = vmatpush2.bf16.msra.mxu0 0
        %2546 = vmatprep.subr.bf16.mxu0 0
        %2547 = vmatpush2.bf16.msra.mxu0 0
        %2548 = vmatprep.subr.bf16.mxu0 0
        %2549 = vmatpush2.bf16.msra.mxu0 0
        %2550 = vmatprep.subr.bf16.mxu0 0
        %2551 = vmatpush2.bf16.msra.mxu0 0
        %2552 = vmatprep.subr.bf16.mxu0 0
        %2553 = vmatpush2.bf16.msra.mxu0 0
        %2554 = vmatprep.subr.bf16.mxu0 0
        %2555 = vmatpush2.bf16.msra.mxu0 0
        %2556 = vmatprep.mubr.bf16.mxu0 0
        %2557 = vmatmul.mubr.bf16.gmra.mxu0 %v2287
        %v2558 = vpop.f32.mrf.mxu0
        %v2559 = vadd.f32 %v2519, %v2558
        %v2560 = vpop.f32.mrf.mxu0
        %v2561 = vpop.f32.mrf.mxu0
        %v2562 = vpop.f32.mrf.mxu0
        %2563 = vdwg.mxu0
        %v2564 = vld [vmem:[%s14] sm:$0xf]
        %v2565 = vld [vmem:[%s14 + $0x4] sm:$0xf]
        %v2566 = vld [vmem:[%s14 + $0x8] sm:$0xf]
        %v2567 = vld [vmem:[%s14 + $0xc] sm:$0xf]
        %v2568 = vld [vmem:[%s14 + $0x10] sm:$0xf]
        %v2569 = vld [vmem:[%s14 + $0x14] sm:$0xf]
        %v2570 = vld [vmem:[%s14 + $0x18] sm:$0xf]
        %v2571 = vld [vmem:[%s14 + $0x1c] sm:$0xf]
        %v2572 = vpack.c.bf16 %v2096, %v2096
        %v2573 = vlaneseq
        %v2574 = vshrl.u32 %v2573, 7
        %v2575 = vsub.s32 0, %v2574
        %v2576 = vrot.slane %v720, %v2575
        %v2585 = vunpack.c.l.b16 %v2564
        %v2586 = vunpack.c.l.b16 %v2565
        %v2587 = vunpack.c.l.b16 %v2566
        %v2588 = vunpack.c.l.b16 %v2567
        %v2589 = vunpack.c.l.b16 %v2568
        %v2590 = vunpack.c.l.b16 %v2569
        %v2591 = vunpack.c.l.b16 %v2570
        %v2592 = vunpack.c.l.b16 %v2571
        %v2593 = vpack.c.b16 %v2586, %v2585
        %v2594 = vpack.c.b16 %v2588, %v2587
        %v2595 = vpack.c.b16 %v2590, %v2589
        %v2596 = vpack.c.b16 %v2592, %v2591
        %v2602 = vsel %vm1424, %v2572, 0
        %2604 = vmatprep.subr.bf16.mxu0 0
        %2605 = vmatpush1.bf16.msra.mxu0 0
        %2606 = vmatprep.subr.bf16.mxu0 0
        %2607 = vmatpush1.bf16.msra.mxu0 0
        %2608 = vmatprep.subr.bf16.mxu0 0
        %2609 = vmatpush1.bf16.msra.mxu0 0
        %2610 = vmatprep.subr.bf16.mxu0 0
        %2611 = vmatpush1.bf16.msra.mxu0 0
        %2612 = vmatprep.subr.bf16.mxu0 0
        %2613 = vmatpush1.bf16.msra.mxu0 %v2596
        %2614 = vmatprep.subr.bf16.mxu0 0
        %2615 = vmatpush1.bf16.msra.mxu0 %v2595
        %2616 = vmatprep.subr.bf16.mxu0 0
        %2617 = vmatpush1.bf16.msra.mxu0 %v2594
        %2618 = vmatprep.subr.bf16.mxu0 0
        %2619 = vmatpush1.bf16.msra.mxu0 %v2593
        %2620 = vmatprep.subr.bf16.mxu0 0
        %2621 = vmatpush2.bf16.msra.mxu0 0
        %2622 = vmatprep.subr.bf16.mxu0 0
        %2623 = vmatpush2.bf16.msra.mxu0 0
        %2624 = vmatprep.subr.bf16.mxu0 0
        %2625 = vmatpush2.bf16.msra.mxu0 0
        %2626 = vmatprep.subr.bf16.mxu0 0
        %2627 = vmatpush2.bf16.msra.mxu0 0
        %2628 = vmatprep.subr.bf16.mxu0 0
        %2629 = vmatpush2.bf16.msra.mxu0 0
        %2630 = vmatprep.subr.bf16.mxu0 0
        %2631 = vmatpush2.bf16.msra.mxu0 0
        %2632 = vmatprep.subr.bf16.mxu0 0
        %2633 = vmatpush2.bf16.msra.mxu0 0
        %2634 = vmatprep.subr.bf16.mxu0 0
        %2635 = vmatpush2.bf16.msra.mxu0 0
        %2636 = vmatprep.mubr.bf16.mxu0 0
        %2637 = vmatmul.mubr.bf16.gmra.mxu0 %v2602
        %v2638 = vpop.f32.mrf.mxu0
        %v2639 = vadd.f32 %v2576, %v2638
        %v2640 = vpop.f32.mrf.mxu0
        %v2641 = vpop.f32.mrf.mxu0
        %v2642 = vpop.f32.mrf.mxu0
        %2643 = vdwg.mxu0
        %v2644 = vadd.f32 %v2559, %v2639
        %v2645 = vld [vmem:[%s15] sm:$0x1]
        %v2646 = vpack.c.bf16 %v2644, %v2644
        %vm2647 = vcmask 31744
        %v2649 = vsel %vm2647, %v2645, 0
        %vm2651 = vcmask 1041408
        %v2653 = vsel %vm2651, %v2646, 0
        %2655 = vmatprep.subr.bf16.mxu0 0
        %2656 = vmatpush1.bf16.msra.mxu0 0
        %2657 = vmatprep.subr.bf16.mxu0 0
        %2658 = vmatpush1.bf16.msra.mxu0 0
        %2659 = vmatprep.subr.bf16.mxu0 0
        %2660 = vmatpush1.bf16.msra.mxu0 0
        %2661 = vmatprep.subr.bf16.mxu0 0
        %2662 = vmatpush1.bf16.msra.mxu0 0
        %2663 = vmatprep.subr.bf16.mxu0 0
        %2664 = vmatpush1.bf16.msra.mxu0 0
        %2665 = vmatprep.subr.bf16.mxu0 0
        %2666 = vmatpush1.bf16.msra.mxu0 0
        %2667 = vmatprep.subr.bf16.mxu0 0
        %2668 = vmatpush1.bf16.msra.mxu0 0
        %2669 = vmatprep.subr.bf16.mxu0 0
        %2670 = vmatpush1.bf16.msra.mxu0 %v2653
        %2671 = vmatprep.subr.bf16.mxu0 0
        %2672 = vmatpush2.bf16.msra.mxu0 0
        %2673 = vmatprep.subr.bf16.mxu0 0
        %2674 = vmatpush2.bf16.msra.mxu0 0
        %2675 = vmatprep.subr.bf16.mxu0 0
        %2676 = vmatpush2.bf16.msra.mxu0 0
        %2677 = vmatprep.subr.bf16.mxu0 0
        %2678 = vmatpush2.bf16.msra.mxu0 0
        %2679 = vmatprep.subr.bf16.mxu0 0
        %2680 = vmatpush2.bf16.msra.mxu0 0
        %2681 = vmatprep.subr.bf16.mxu0 0
        %2682 = vmatpush2.bf16.msra.mxu0 0
        %2683 = vmatprep.subr.bf16.mxu0 0
        %2684 = vmatpush2.bf16.msra.mxu0 0
        %2685 = vmatprep.subr.bf16.mxu0 0
        %2686 = vmatpush2.bf16.msra.mxu0 0
        %2687 = vmatprep.mubr.bf16.mxu0 0
        %2688 = vmatmul.mubr.bf16.gmra.mxu0 %v2649
        %v2689 = vpop.f32.mrf.mxu0
        %v2690 = vadd.f32 0.0, %v2689
        %v2691 = vpop.f32.mrf.mxu0
        %v2692 = vpop.f32.mrf.mxu0
        %v2693 = vpop.f32.mrf.mxu0
        %2694 = vdwg.mxu0
        %v2695 = vld [vmem:[%s16] sm:$0xf]
        %v2696 = vld [vmem:[%s16 + $0x4] sm:$0xf]
        %v2697 = vld [vmem:[%s16 + $0x8] sm:$0xf]
        %v2698 = vld [vmem:[%s16 + $0xc] sm:$0xf]
        %v2699 = vld [vmem:[%s16 + $0x10] sm:$0xf]
        %v2700 = vld [vmem:[%s16 + $0x14] sm:$0xf]
        %v2701 = vld [vmem:[%s16 + $0x18] sm:$0xf]
        %v2702 = vld [vmem:[%s16 + $0x1c] sm:$0xf]
        %v2703 = vld [vmem:[%s16 + $0x20] sm:$0xf]
        %v2704 = vld [vmem:[%s16 + $0x24] sm:$0xf]
        %v2705 = vld [vmem:[%s16 + $0x28] sm:$0xf]
        %v2706 = vld [vmem:[%s16 + $0x2c] sm:$0xf]
        %v2707 = vld [vmem:[%s16 + $0x30] sm:$0xf]
        %v2708 = vld [vmem:[%s16 + $0x34] sm:$0xf]
        %v2709 = vld [vmem:[%s16 + $0x38] sm:$0xf]
        %v2710 = vld [vmem:[%s16 + $0x3c] sm:$0xf]
        %v2711 = vpack.c.bf16 %v2690, %v2690
        %v2728 = vunpack.c.l.b16 %v2695
        %v2729 = vunpack.c.l.b16 %v2696
        %v2730 = vunpack.c.l.b16 %v2697
        %v2731 = vunpack.c.l.b16 %v2698
        %v2732 = vunpack.c.l.b16 %v2699
        %v2733 = vunpack.c.l.b16 %v2700
        %v2734 = vunpack.c.l.b16 %v2701
        %v2735 = vunpack.c.l.b16 %v2702
        %v2736 = vunpack.c.l.b16 %v2703
        %v2737 = vunpack.c.l.b16 %v2704
        %v2738 = vunpack.c.l.b16 %v2705
        %v2739 = vunpack.c.l.b16 %v2706
        %v2740 = vunpack.c.l.b16 %v2707
        %v2741 = vunpack.c.l.b16 %v2708
        %v2742 = vunpack.c.l.b16 %v2709
        %v2743 = vunpack.c.l.b16 %v2710
        %v2744 = vpack.c.b16 %v2729, %v2728
        %v2745 = vpack.c.b16 %v2731, %v2730
        %v2746 = vpack.c.b16 %v2733, %v2732
        %v2747 = vpack.c.b16 %v2735, %v2734
        %v2748 = vpack.c.b16 %v2737, %v2736
        %v2749 = vpack.c.b16 %v2739, %v2738
        %v2750 = vpack.c.b16 %v2741, %v2740
        %v2751 = vpack.c.b16 %v2743, %v2742
        %2760 = vmatprep.subr.bf16.mxu0 0
        %2761 = vmatpush1.bf16.msra.mxu0 %v2751
        %2762 = vmatprep.subr.bf16.mxu0 0
        %2763 = vmatpush1.bf16.msra.mxu0 %v2750
        %2764 = vmatprep.subr.bf16.mxu0 0
        %2765 = vmatpush1.bf16.msra.mxu0 %v2749
        %2766 = vmatprep.subr.bf16.mxu0 0
        %2767 = vmatpush1.bf16.msra.mxu0 %v2748
        %2768 = vmatprep.subr.bf16.mxu0 0
        %2769 = vmatpush1.bf16.msra.mxu0 %v2747
        %2770 = vmatprep.subr.bf16.mxu0 0
        %2771 = vmatpush1.bf16.msra.mxu0 %v2746
        %2772 = vmatprep.subr.bf16.mxu0 0
        %2773 = vmatpush1.bf16.msra.mxu0 %v2745
        %2774 = vmatprep.subr.bf16.mxu0 0
        %2775 = vmatpush1.bf16.msra.mxu0 %v2744
        %2776 = vmatprep.subr.bf16.mxu0 0
        %2777 = vmatpush2.bf16.msra.mxu0 0
        %2778 = vmatprep.subr.bf16.mxu0 0
        %2779 = vmatpush2.bf16.msra.mxu0 0
        %2780 = vmatprep.subr.bf16.mxu0 0
        %2781 = vmatpush2.bf16.msra.mxu0 0
        %2782 = vmatprep.subr.bf16.mxu0 0
        %2783 = vmatpush2.bf16.msra.mxu0 0
        %2784 = vmatprep.subr.bf16.mxu0 0
        %2785 = vmatpush2.bf16.msra.mxu0 0
        %2786 = vmatprep.subr.bf16.mxu0 0
        %2787 = vmatpush2.bf16.msra.mxu0 0
        %2788 = vmatprep.subr.bf16.mxu0 0
        %2789 = vmatpush2.bf16.msra.mxu0 0
        %2790 = vmatprep.subr.bf16.mxu0 0
        %2791 = vmatpush2.bf16.msra.mxu0 0
        %2792 = vmatprep.mubr.bf16.mxu0 0
        %2793 = vmatmul.mubr.bf16.gmra.mxu0 %v2711
        %v2794 = vpop.f32.mrf.mxu0
        %v2795 = vadd.f32 0.0, %v2794
        %v2796 = vpop.f32.mrf.mxu0
        %v2797 = vpop.f32.mrf.mxu0
        %v2798 = vpop.f32.mrf.mxu0
        %2799 = vdwg.mxu0
        %vm2800 = vcmp.ge.f32.partialorder %v2795, 0.0
        %v2801 = vmul.f32 %v2795, 0.2
        %v2802 = vsel %vm2800, %v2795, %v2801
        %v2803 = vld [vmem:[%s17] sm:$0x1]
        %v2805 = vlaneseq
        %v2806 = vshrl.u32 %v2805, 7
        %v2807 = vsub.s32 0, %v2806
        %v2808 = vrot.slane %v2803, %v2807
        %v2810 = vmul.f32 %v2802, %v2808
        %vm2811 = vcmask 517120
        %v2812 = vsel %vm2811, %v2810, 0.0
        %2813 = vadd.xlane.f32.xlu0 %v2812
        %v2814 = vpop.xlane.xlu0 %2813
        %v2815 = vsel %vm2651, %v2814, 0.0
        %v2816 = vrot.slane %v2815, 4
        %v2817 = vadd.f32 %v2815, %v2816
        %v2818 = vrot.slane %v2817, 2
        %v2819 = vadd.f32 %v2817, %v2818
        %v2820 = vrot.slane %v2819, 1
        %v2821 = vadd.f32 %v2819, %v2820
        %v2822 = vadd.f32 %v2821, %v720
        %2824 = vset.pattern.permute.xlu0 0
        %2825 = vperm.xlu0 %2824, %v2822
        %v2826 = vpop.permute.xlu0 %2825
        %2828 = vst [vmem:[%s717 - $0x5] sm:$0x20] %v2826
        %v2829 = vpack.c.bf16 %v2802, %v2802
        %v2831 = vshll.u32 %v2829, 16
        %v2834 = vsel %vm738, 0, %v2831
        %v2835 = vshrl.u32 %v2829, 16
        %v2838 = vsel %vm738, %v2835, 0
        %2840 = vrot.lane.b32.xlu0 %v2829, 64
        %v2841 = vpop.permute.xlu0 %2840
        %v2844 = vsel %vm1424, %v2834, %v2841
        %v2846 = vld [vmem:[%s18] sm:$0xf]
        %v2847 = vld [vmem:[%s18 + $0x4] sm:$0xf]
        %v2848 = vld [vmem:[%s18 + $0x8] sm:$0xf]
        %v2849 = vld [vmem:[%s18 + $0xc] sm:$0xf]
        %v2850 = vld [vmem:[%s18 + $0x10] sm:$0xf]
        %v2851 = vld [vmem:[%s18 + $0x14] sm:$0xf]
        %v2852 = vld [vmem:[%s18 + $0x18] sm:$0xf]
        %v2853 = vld [vmem:[%s18 + $0x1c] sm:$0xf]
        %v2854 = vld [vmem:[%s18 + $0x20] sm:$0xf]
        %v2855 = vld [vmem:[%s18 + $0x24] sm:$0xf]
        %v2856 = vld [vmem:[%s18 + $0x28] sm:$0xf]
        %v2857 = vld [vmem:[%s18 + $0x2c] sm:$0xf]
        %v2858 = vld [vmem:[%s18 + $0x30] sm:$0xf]
        %v2859 = vld [vmem:[%s18 + $0x34] sm:$0xf]
        %v2860 = vld [vmem:[%s18 + $0x38] sm:$0xf]
        %v2861 = vld [vmem:[%s18 + $0x3c] sm:$0xf]
        %v2862 = vld [vmem:[%s18 + $0x40] sm:$0xf]
        %v2863 = vld [vmem:[%s18 + $0x44] sm:$0xf]
        %v2864 = vld [vmem:[%s18 + $0x48] sm:$0xf]
        %v2865 = vld [vmem:[%s18 + $0x4c] sm:$0xf]
        %v2866 = vld [vmem:[%s18 + $0x50] sm:$0xf]
        %v2867 = vld [vmem:[%s18 + $0x54] sm:$0xf]
        %v2868 = vld [vmem:[%s18 + $0x58] sm:$0xf]
        %v2869 = vld [vmem:[%s18 + $0x5c] sm:$0xf]
        %v2870 = vlaneseq
        %v2871 = vshrl.u32 %v2870, 7
        %v2872 = vsub.s32 1, %v2871
        %v2873 = vrot.slane %v720, %v2872
        %v2898 = vunpack.c.l.b16 %v2846
        %v2899 = vunpack.c.l.b16 %v2847
        %v2900 = vunpack.c.l.b16 %v2848
        %v2901 = vunpack.c.l.b16 %v2849
        %v2902 = vunpack.c.l.b16 %v2850
        %v2903 = vunpack.c.l.b16 %v2851
        %v2904 = vunpack.c.l.b16 %v2852
        %v2905 = vunpack.c.l.b16 %v2853
        %v2906 = vunpack.c.l.b16 %v2854
        %v2907 = vunpack.c.l.b16 %v2855
        %v2908 = vunpack.c.l.b16 %v2856
        %v2909 = vunpack.c.l.b16 %v2857
        %v2910 = vunpack.c.l.b16 %v2858
        %v2911 = vunpack.c.l.b16 %v2859
        %v2912 = vunpack.c.l.b16 %v2860
        %v2913 = vunpack.c.l.b16 %v2861
        %v2914 = vunpack.c.l.b16 %v2862
        %v2915 = vunpack.c.l.b16 %v2863
        %v2916 = vunpack.c.l.b16 %v2864
        %v2917 = vunpack.c.l.b16 %v2865
        %v2918 = vunpack.c.l.b16 %v2866
        %v2919 = vunpack.c.l.b16 %v2867
        %v2920 = vunpack.c.l.b16 %v2868
        %v2921 = vunpack.c.l.b16 %v2869
        %v2922 = vpack.c.b16 %v2899, %v2898
        %v2923 = vpack.c.b16 %v2901, %v2900
        %v2924 = vpack.c.b16 %v2903, %v2902
        %v2925 = vpack.c.b16 %v2905, %v2904
        %v2926 = vpack.c.b16 %v2907, %v2906
        %v2927 = vpack.c.b16 %v2909, %v2908
        %v2928 = vpack.c.b16 %v2911, %v2910
        %v2929 = vpack.c.b16 %v2913, %v2912
        %v2930 = vpack.c.b16 %v2915, %v2914
        %v2931 = vpack.c.b16 %v2917, %v2916
        %v2932 = vpack.c.b16 %v2919, %v2918
        %v2933 = vpack.c.b16 %v2921, %v2920
        %v2947 = vsel %vm1424, %v2838, 0
        %2949 = vmatprep.subr.bf16.mxu0 0
        %2950 = vmatpush1.bf16.msra.mxu0 %v2929
        %2951 = vmatprep.subr.bf16.mxu0 0
        %2952 = vmatpush1.bf16.msra.mxu0 %v2928
        %2953 = vmatprep.subr.bf16.mxu0 0
        %2954 = vmatpush1.bf16.msra.mxu0 %v2927
        %2955 = vmatprep.subr.bf16.mxu0 0
        %2956 = vmatpush1.bf16.msra.mxu0 %v2926
        %2957 = vmatprep.subr.bf16.mxu0 0
        %2958 = vmatpush1.bf16.msra.mxu0 %v2925
        %2959 = vmatprep.subr.bf16.mxu0 0
        %2960 = vmatpush1.bf16.msra.mxu0 %v2924
        %2961 = vmatprep.subr.bf16.mxu0 0
        %2962 = vmatpush1.bf16.msra.mxu0 %v2923
        %2963 = vmatprep.subr.bf16.mxu0 0
        %2964 = vmatpush1.bf16.msra.mxu0 %v2922
        %2965 = vmatprep.subr.bf16.mxu0 0
        %2966 = vmatpush2.bf16.msra.mxu0 0
        %2967 = vmatprep.subr.bf16.mxu0 0
        %2968 = vmatpush2.bf16.msra.mxu0 0
        %2969 = vmatprep.subr.bf16.mxu0 0
        %2970 = vmatpush2.bf16.msra.mxu0 0
        %2971 = vmatprep.subr.bf16.mxu0 0
        %2972 = vmatpush2.bf16.msra.mxu0 0
        %2973 = vmatprep.subr.bf16.mxu0 0
        %2974 = vmatpush2.bf16.msra.mxu0 %v2933
        %2975 = vmatprep.subr.bf16.mxu0 0
        %2976 = vmatpush2.bf16.msra.mxu0 %v2932
        %2977 = vmatprep.subr.bf16.mxu0 0
        %2978 = vmatpush2.bf16.msra.mxu0 %v2931
        %2979 = vmatprep.subr.bf16.mxu0 0
        %2980 = vmatpush2.bf16.msra.mxu0 %v2930
        %2981 = vmatprep.mubr.bf16.mxu0 %v2947
        %2982 = vmatmul.mubr.bf16.gmra.mxu0 %v2844
        %v2983 = vpop.f32.mrf.mxu0
        %v2984 = vadd.f32 %v2873, %v2983
        %v2985 = vpop.f32.mrf.mxu0
        %v2986 = vpop.f32.mrf.mxu0
        %v2987 = vpop.f32.mrf.mxu0
        %2988 = vdwg.mxu0
        %vm2989 = vcmp.ge.f32.partialorder %v2984, 0.0
        %v2990 = vmul.f32 %v2984, 0.2
        %v2991 = vsel %vm2989, %v2984, %v2990
        %v2992 = vpack.c.bf16 %v2991, %v2991
        %v2994 = vshll.u32 %v2992, 16
        %v2997 = vsel %vm738, 0, %v2994
        %v2998 = vshrl.u32 %v2992, 16
        %v3001 = vsel %vm738, %v2998, 0
        %3003 = vrot.lane.b32.xlu0 %v2992, 8
        %v3004 = vpop.permute.xlu0 %3003
        %3006 = vrot.lane.b32.xlu0 %v3001, 16
        %v3007 = vpop.permute.xlu0 %3006
        %v3010 = vsel %vm1948, %v2997, %v3004
        %v3012 = vsel %vm836, %v3010, %v3007
        %v3013 = vld [vmem:[%s19] sm:$0xf]
        %v3014 = vld [vmem:[%s19 + $0x4] sm:$0xf]
        %v3015 = vld [vmem:[%s19 + $0x8] sm:$0xf]
        %v3016 = vlaneseq
        %v3017 = vshrl.u32 %v3016, 7
        %v3018 = vsub.s32 2, %v3017
        %v3019 = vrot.slane %v720, %v3018
        %v3023 = vunpack.c.l.b16 %v3013
        %v3024 = vunpack.c.l.b16 %v3014
        %v3025 = vunpack.c.l.b16 %v3015
        %v3026 = vpack.c.b16 %v3024, %v3023
        %v3027 = vpack.c.b16 %v3025, %v3025
        %vm3029 = vcmask 195584
        %v3030 = vsel %vm3029, %v3012, 0
        %v3033 = vsel %vm1952, %v3027, 0
        %3035 = vmatprep.subr.bf16.mxu0 0
        %3036 = vmatpush1.bf16.msra.mxu0 0
        %3037 = vmatprep.subr.bf16.mxu0 0
        %3038 = vmatpush1.bf16.msra.mxu0 0
        %3039 = vmatprep.subr.bf16.mxu0 0
        %3040 = vmatpush1.bf16.msra.mxu0 0
        %3041 = vmatprep.subr.bf16.mxu0 0
        %3042 = vmatpush1.bf16.msra.mxu0 0
        %3043 = vmatprep.subr.bf16.mxu0 0
        %3044 = vmatpush1.bf16.msra.mxu0 0
        %3045 = vmatprep.subr.bf16.mxu0 0
        %3046 = vmatpush1.bf16.msra.mxu0 0
        %3047 = vmatprep.subr.bf16.mxu0 0
        %3048 = vmatpush1.bf16.msra.mxu0 %v3033
        %3049 = vmatprep.subr.bf16.mxu0 0
        %3050 = vmatpush1.bf16.msra.mxu0 %v3026
        %3051 = vmatprep.subr.bf16.mxu0 0
        %3052 = vmatpush2.bf16.msra.mxu0 0
        %3053 = vmatprep.subr.bf16.mxu0 0
        %3054 = vmatpush2.bf16.msra.mxu0 0
        %3055 = vmatprep.subr.bf16.mxu0 0
        %3056 = vmatpush2.bf16.msra.mxu0 0
        %3057 = vmatprep.subr.bf16.mxu0 0
        %3058 = vmatpush2.bf16.msra.mxu0 0
        %3059 = vmatprep.subr.bf16.mxu0 0
        %3060 = vmatpush2.bf16.msra.mxu0 0
        %3061 = vmatprep.subr.bf16.mxu0 0
        %3062 = vmatpush2.bf16.msra.mxu0 0
        %3063 = vmatprep.subr.bf16.mxu0 0
        %3064 = vmatpush2.bf16.msra.mxu0 0
        %3065 = vmatprep.subr.bf16.mxu0 0
        %3066 = vmatpush2.bf16.msra.mxu0 0
        %3067 = vmatprep.mubr.bf16.mxu0 0
        %3068 = vmatmul.mubr.bf16.gmra.mxu0 %v3030
        %v3069 = vpop.f32.mrf.mxu0
        %v3070 = vadd.f32 %v3019, %v3069
        %v3071 = vpop.f32.mrf.mxu0
        %v3072 = vpop.f32.mrf.mxu0
        %v3073 = vpop.f32.mrf.mxu0
        %3074 = vdwg.mxu0
        %v3075 = vld [vmem:[%s20] sm:$0xf]
        %v3076 = vld [vmem:[%s20 + $0x4] sm:$0xf]
        %v3077 = vld [vmem:[%s20 + $0x8] sm:$0xf]
        %v3078 = vld [vmem:[%s20 + $0xc] sm:$0xf]
        %v3079 = vld [vmem:[%s20 + $0x10] sm:$0xf]
        %v3080 = vld [vmem:[%s20 + $0x14] sm:$0xf]
        %v3081 = vld [vmem:[%s20 + $0x18] sm:$0xf]
        %v3082 = vld [vmem:[%s20 + $0x1c] sm:$0xf]
        %v3083 = vpack.c.bf16 %v2795, %v2795
        %v3084 = vlaneseq
        %v3085 = vshrl.u32 %v3084, 7
        %v3086 = vsub.s32 3, %v3085
        %v3087 = vrot.slane %v720, %v3086
        %v3096 = vunpack.c.l.b16 %v3075
        %v3097 = vunpack.c.l.b16 %v3076
        %v3098 = vunpack.c.l.b16 %v3077
        %v3099 = vunpack.c.l.b16 %v3078
        %v3100 = vunpack.c.l.b16 %v3079
        %v3101 = vunpack.c.l.b16 %v3080
        %v3102 = vunpack.c.l.b16 %v3081
        %v3103 = vunpack.c.l.b16 %v3082
        %v3104 = vpack.c.b16 %v3097, %v3096
        %v3105 = vpack.c.b16 %v3099, %v3098
        %v3106 = vpack.c.b16 %v3101, %v3100
        %v3107 = vpack.c.b16 %v3103, %v3102
        %v3113 = vsel %vm1424, %v3083, 0
        %3115 = vmatprep.subr.bf16.mxu0 0
        %3116 = vmatpush1.bf16.msra.mxu0 0
        %3117 = vmatprep.subr.bf16.mxu0 0
        %3118 = vmatpush1.bf16.msra.mxu0 0
        %3119 = vmatprep.subr.bf16.mxu0 0
        %3120 = vmatpush1.bf16.msra.mxu0 0
        %3121 = vmatprep.subr.bf16.mxu0 0
        %3122 = vmatpush1.bf16.msra.mxu0 0
        %3123 = vmatprep.subr.bf16.mxu0 0
        %3124 = vmatpush1.bf16.msra.mxu0 %v3107
        %3125 = vmatprep.subr.bf16.mxu0 0
        %3126 = vmatpush1.bf16.msra.mxu0 %v3106
        %3127 = vmatprep.subr.bf16.mxu0 0
        %3128 = vmatpush1.bf16.msra.mxu0 %v3105
        %3129 = vmatprep.subr.bf16.mxu0 0
        %3130 = vmatpush1.bf16.msra.mxu0 %v3104
        %3131 = vmatprep.subr.bf16.mxu0 0
        %3132 = vmatpush2.bf16.msra.mxu0 0
        %3133 = vmatprep.subr.bf16.mxu0 0
        %3134 = vmatpush2.bf16.msra.mxu0 0
        %3135 = vmatprep.subr.bf16.mxu0 0
        %3136 = vmatpush2.bf16.msra.mxu0 0
        %3137 = vmatprep.subr.bf16.mxu0 0
        %3138 = vmatpush2.bf16.msra.mxu0 0
        %3139 = vmatprep.subr.bf16.mxu0 0
        %3140 = vmatpush2.bf16.msra.mxu0 0
        %3141 = vmatprep.subr.bf16.mxu0 0
        %3142 = vmatpush2.bf16.msra.mxu0 0
        %3143 = vmatprep.subr.bf16.mxu0 0
        %3144 = vmatpush2.bf16.msra.mxu0 0
        %3145 = vmatprep.subr.bf16.mxu0 0
        %3146 = vmatpush2.bf16.msra.mxu0 0
        %3147 = vmatprep.mubr.bf16.mxu0 0
        %3148 = vmatmul.mubr.bf16.gmra.mxu0 %v3113
        %v3149 = vpop.f32.mrf.mxu0
        %v3150 = vadd.f32 %v3087, %v3149
        %v3151 = vpop.f32.mrf.mxu0
        %v3152 = vpop.f32.mrf.mxu0
        %v3153 = vpop.f32.mrf.mxu0
        %3154 = vdwg.mxu0
        %v3155 = vadd.f32 %v3070, %v3150
        %vm3156 = vcmp.ge.f32.partialorder %v3155, 0.0
        %v3157 = vmul.f32 %v3155, 0.2
        %v3158 = vsel %vm3156, %v3155, %v3157
        %v3159 = vpack.c.bf16 %v3158, %v3158
        %v3161 = vshll.u32 %v3159, 16
        %v3164 = vsel %vm738, 0, %v3161
        %v3165 = vshrl.u32 %v3159, 16
        %v3168 = vsel %vm738, %v3165, 0
        %3170 = vrot.lane.b32.xlu0 %v3159, 8
        %v3171 = vpop.permute.xlu0 %3170
        %3173 = vrot.lane.b32.xlu0 %v3168, 16
        %v3174 = vpop.permute.xlu0 %3173
        %v3177 = vsel %vm1948, %v3164, %v3171
        %v3179 = vsel %vm836, %v3177, %v3174
        %v3180 = vld [vmem:[%s21] sm:$0xf]
        %v3181 = vld [vmem:[%s21 + $0x4] sm:$0xf]
        %v3182 = vld [vmem:[%s21 + $0x8] sm:$0xf]
        %v3183 = vlaneseq
        %v3184 = vshrl.u32 %v3183, 7
        %v3185 = vsub.s32 4, %v3184
        %v3186 = vrot.slane %v720, %v3185
        %v3190 = vunpack.c.l.b16 %v3180
        %v3191 = vunpack.c.l.b16 %v3181
        %v3192 = vunpack.c.l.b16 %v3182
        %v3193 = vpack.c.b16 %v3191, %v3190
        %v3194 = vpack.c.b16 %v3192, %v3192
        %v3196 = vsel %vm3029, %v3179, 0
        %v3199 = vsel %vm1952, %v3194, 0
        %3201 = vmatprep.subr.bf16.mxu0 0
        %3202 = vmatpush1.bf16.msra.mxu0 0
        %3203 = vmatprep.subr.bf16.mxu0 0
        %3204 = vmatpush1.bf16.msra.mxu0 0
        %3205 = vmatprep.subr.bf16.mxu0 0
        %3206 = vmatpush1.bf16.msra.mxu0 0
        %3207 = vmatprep.subr.bf16.mxu0 0
        %3208 = vmatpush1.bf16.msra.mxu0 0
        %3209 = vmatprep.subr.bf16.mxu0 0
        %3210 = vmatpush1.bf16.msra.mxu0 0
        %3211 = vmatprep.subr.bf16.mxu0 0
        %3212 = vmatpush1.bf16.msra.mxu0 0
        %3213 = vmatprep.subr.bf16.mxu0 0
        %3214 = vmatpush1.bf16.msra.mxu0 %v3199
        %3215 = vmatprep.subr.bf16.mxu0 0
        %3216 = vmatpush1.bf16.msra.mxu0 %v3193
        %3217 = vmatprep.subr.bf16.mxu0 0
        %3218 = vmatpush2.bf16.msra.mxu0 0
        %3219 = vmatprep.subr.bf16.mxu0 0
        %3220 = vmatpush2.bf16.msra.mxu0 0
        %3221 = vmatprep.subr.bf16.mxu0 0
        %3222 = vmatpush2.bf16.msra.mxu0 0
        %3223 = vmatprep.subr.bf16.mxu0 0
        %3224 = vmatpush2.bf16.msra.mxu0 0
        %3225 = vmatprep.subr.bf16.mxu0 0
        %3226 = vmatpush2.bf16.msra.mxu0 0
        %3227 = vmatprep.subr.bf16.mxu0 0
        %3228 = vmatpush2.bf16.msra.mxu0 0
        %3229 = vmatprep.subr.bf16.mxu0 0
        %3230 = vmatpush2.bf16.msra.mxu0 0
        %3231 = vmatprep.subr.bf16.mxu0 0
        %3232 = vmatpush2.bf16.msra.mxu0 0
        %3233 = vmatprep.mubr.bf16.mxu0 0
        %3234 = vmatmul.mubr.bf16.gmra.mxu0 %v3196
        %v3235 = vpop.f32.mrf.mxu0
        %v3236 = vadd.f32 %v3186, %v3235
        %v3237 = vpop.f32.mrf.mxu0
        %v3238 = vpop.f32.mrf.mxu0
        %v3239 = vpop.f32.mrf.mxu0
        %3240 = vdwg.mxu0
        %v3241 = vtanh.pop %v3236
        %vm3242 = vcmask 9216
        %3243 = vst.msk [vmem:[%s709] sm:$0x3] %vm3242, %v3241
        %p3244 = scmp.lt.s32.totalorder %s38, 1
        %s3245 = scalar_select %p3244, %s38, 1
        %s3246 = scalar_lea.vmem %s22, %s3245
        %s3247 = sand.u32 %s539, 1
        %s3248 = scalar_lea.sflag [#allocation3], %s3247
        %s3249 = sand.u32 %s539, 1
        %s3250 = smul.addr %s3249, 2
        %s3251 = scalar_lea.vmem [#allocation2], %s3250
        // Predicated region
        $region109: #{discriminator_forward.1} parent=107 // pred_check
          %p3252 = pneg %p523
        $region110: #{discriminator_forward.1} parent=107 // pred_check_branch
          %3254 = sbr.rel (%p3252) target = $region112
        $region111: #{discriminator_forward.1} parent=107 // pred_region
          _
        $region112: #{discriminator_forward.1} parent=107 // pred_fallthru
          _
        // Predicated region
        $region113: #{discriminator_forward.1} parent=107 // pred_check
          %p3255 = pneg %p549
        $region114: #{discriminator_forward.1} parent=107 // pred_check_branch
          %3257 = sbr.rel (%p3255) target = $region116
        $region115: #{discriminator_forward.1} parent=107 // pred_region
          %s3259 = ssub.s32 32, 32
          %3260 = vsyncadd %s3248, %s3259
          %s3261 = smul.addr %s38, 32
          %s3262 = scalar_lea.hbm %s23, %s3261
          %s3264 = sshll.u32 %s3251, 4
          %s3265 = int_to_ptr.vmem [resolvable:$true] %s3264
          %3267 = dma.vmem_to_hbm [thread:$0]  %s3265, 32, %s3262, %s3248
        $region116: #{discriminator_forward.1} parent=107 // pred_fallthru
          _
      $region108: #{discriminator_forward.1} parent=5 // pred_fallthru
        _
      %p3268 = scmp.le.s32.totalorder 2, %s33
      // Predicated region
      $region117: #{discriminator_forward.1} parent=5 // pred_check
        %p3269 = pneg %p3268
      $region118: #{discriminator_forward.1} parent=5 // pred_check_branch
        %3271 = sbr.rel (%p3269) target = $region120
      $region119: #{discriminator_forward.1} parent=5 // pred_region
        %s3272 = ssub.s32 %s33, 2
        // Predicated region
        $region121: #{discriminator_forward.1} parent=119 // pred_check
          %p3273 = pneg %p529
        $region122: #{discriminator_forward.1} parent=119 // pred_check_branch
          %3275 = sbr.rel (%p3273) target = $region124
        $region123: #{discriminator_forward.1} parent=119 // pred_region
          %p3276 = scmp.lt.s32.totalorder %s39, 1
          %s3277 = scalar_select %p3276, %s39, 1
          %s3278 = scalar_lea.vmem %s22, %s3277
        $region124: #{discriminator_forward.1} parent=119 // pred_fallthru
          _
        // Predicated region
        $region125: #{discriminator_forward.1} parent=119 // pred_check
          %p3279 = pneg %p555
        $region126: #{discriminator_forward.1} parent=119 // pred_check_branch
          %3281 = sbr.rel (%p3279) target = $region128
        $region127: #{discriminator_forward.1} parent=119 // pred_region
          %s3282 = sand.u32 %s540, 1
          %s3283 = scalar_lea.sflag [#allocation3], %s3282
          %s3284 = sand.u32 %s540, 1
          %s3285 = smul.addr %s3284, 2
          %s3286 = scalar_lea.vmem [#allocation2], %s3285
          %3287 = dma.done %s3283, 32
        $region128: #{discriminator_forward.1} parent=119 // pred_fallthru
          _
      $region120: #{discriminator_forward.1} parent=5 // pred_fallthru
        _
    $region6: #{discriminator_forward.1} parent=1 // loop_footer
      %s37 = sadd.s32 1, %s33
    $region7: #{discriminator_forward.1} parent=1 // loop_footer_branch
      %32 = sbr.rel target = $region3
    $region8: #{discriminator_forward.1} parent=1 // loop_exit
      _
    %3288 = vsyncpa [#allocation3], 1
    %s3289 = scalar_lea.sflag [#allocation3], 1
    %3290 = vsyncpa %s3289, 1

</llo_original>
